<compile_context>
chip_gen: v5e
topology: v5e:2x2
jax: 0.10.0
libtpu: 0.0.40
codegen_flags: <defaults>
</compile_context>

<pallas_src>
import numpy as np
import jax
import jax.numpy as jnp
from jax import lax
from jax.experimental import pallas as pl
from jax.experimental.pallas import tpu as pltpu

# ---------------- small shapes consistent with the module ----------------
B = 2            # batch
V_DIM = 24       # visual channels (v_dim)
H = W = 8        # feature-map spatial size
SEQ = 8          # question length == number of GRU timesteps
EMB = 16         # word-embedding dim
NHID = 32        # question hidden dim (q_emb output dim)
NTOK = 50        # vocab size
USE_SPATIAL = True
C_CAT = V_DIM + NHID + (8 if USE_SPATIAL else 0)   # 64
C_QK = C_CAT // 8                                  # 8
ONES_ROWS = 8                                      # sublane-aligned block of ones -> row sums
C_PROJ = 2 * C_QK + C_CAT + ONES_ROWS              # 88  (Q | K | V | ones)
HW = H * W                                         # 64
N = SEQ * HW                                       # 512


# ---------------- spatial-coordinate feature (same as the PyTorch helper) ---
def generate_spatial_batch(n, fh, fw):
    sp = np.zeros((n, 8, fh, fw), dtype=np.float32)
    for h in range(fh):
        for w in range(fw):
            xmin = w / fw * 2 - 1
            xmax = (w + 1) / fw * 2 - 1
            xctr = (xmin + xmax) / 2
            ymin = h / fh * 2 - 1
            ymax = (h + 1) / fh * 2 - 1
            yctr = (ymin + ymax) / 2
            sp[:, :, h, w] = [xmin, ymin, xmax, ymax, xctr, yctr, 1 / fw, 1 / fh]
    return sp


# ---------------- GRU question embedding (forward_all), plain JAX ----------
def gru_forward_all(x, gru_params):
    # x: [B, SEQ, EMB] -> outputs at every timestep [B, SEQ, NHID], h0 = 0
    w_ih, w_hh, b_ih, b_hh = gru_params  # [3H,EMB], [3H,H], [3H], [3H]

    def cell(h, xt):
        gi = xt @ w_ih.T + b_ih
        gh = h @ w_hh.T + b_hh
        i_r, i_z, i_n = jnp.split(gi, 3, axis=-1)
        h_r, h_z, h_n = jnp.split(gh, 3, axis=-1)
        r = jax.nn.sigmoid(i_r + h_r)
        z = jax.nn.sigmoid(i_z + h_z)
        nn_ = jnp.tanh(i_n + r * h_n)
        h_new = (1.0 - z) * nn_ + z * h
        return h_new, h_new

    h0 = jnp.zeros((x.shape[0], NHID), jnp.float32)
    _, ys = lax.scan(cell, h0, jnp.swapaxes(x, 0, 1))
    return jnp.swapaxes(ys, 0, 1)


# ---------------- build the per-timestep concatenated feature (glue) -------
def build_cm_feat(v, q_emb, spatial):
    # v: [B, V_DIM, H, W], q_emb: [B, SEQ, NHID], spatial: [B, 8, H, W]
    # TODO(synk): could be assembled inside the kernel (tile along lanes) to
    # skip the HBM round-trip of the broadcast+concat; kept in XLA for safety.
    v_b = jnp.broadcast_to(v[:, :, None, :, :], (B, V_DIM, SEQ, H, W))
    lang = jnp.transpose(q_emb, (0, 2, 1))[:, :, :, None, None]
    lang = jnp.broadcast_to(lang, (B, NHID, SEQ, H, W))
    sp_b = jnp.broadcast_to(spatial[:, :, None, :, :], (B, 8, SEQ, H, W))
    cm = jnp.concatenate([v_b, lang, sp_b], axis=1)    # [B, C_CAT, SEQ, H, W]
    return cm.reshape(B, C_CAT, N)                     # row-major == PyTorch .view


# ---------------- Pallas kernel: CMSA attention + mean-pool + fc + sum ------
def cmsa_kernel(x_ref, qe_ref, wqkv_ref, bqkv_ref, gamma_ref, pool_ref,
                wfc_ref, bfc_ref, out_ref):
    x = x_ref[0]                                            # [C_CAT, N] f32

    # Fused Q/K/V 1x1x1-conv projections: one [C_PROJ, C_CAT] @ [C_CAT, N]
    # matmul.  Rows [0:8)=Q, [8:16)=K, [16:80)=V, [80:88)=all-ones helper rows
    # (zero weights + unit bias) that later yield the softmax row sums.
    proj = jnp.dot(wqkv_ref[...], x,
                   preferred_element_type=jnp.float32) + bqkv_ref[...]     # [88, N]
    q = proj[0:C_QK].astype(jnp.bfloat16)                   # [C_QK, N]
    k = proj[C_QK:2 * C_QK].astype(jnp.bfloat16)            # [C_QK, N]
    vp_ext = proj[2 * C_QK:].astype(jnp.bfloat16)           # [C_CAT+8, N]

    # energy[n1, n2] = sum_c q[c, n1] * k[c, n2]            -> [N, N] f32
    energy = lax.dot_general(q, k, (((0,), (0,)), ((), ())),
                             preferred_element_type=jnp.float32)
    # numerically-stable softmax numerator (normalization folded in later)
    e_max = jnp.max(energy, axis=-1, keepdims=True)
    p = jnp.exp(energy - e_max).astype(jnp.bfloat16)        # [N, N]

    # out_ext[c, n1] = sum_n2 vp_ext[c, n2] * p[n1, n2]     -> [C_CAT+8, N]
    # rows [C_CAT:] carry l[n1] = sum_n2 p[n1, n2] in lane-row orientation.
    out_ext = lax.dot_general(vp_ext, p, (((1,), (1,)), ((), ())),
                              preferred_element_type=jnp.float32)
    attn_out = out_ext[0:C_CAT]                             # [C_CAT, N]
    inv_l = pl.reciprocal(out_ext[C_CAT:C_CAT + 1], approx=True)  # [1, N]

    # gamma residual, softmax denominator applied as a cheap row scale
    gamma = gamma_ref[0, 0]
    y = gamma * attn_out * inv_l + x                        # [C_CAT, N]

    # mean over H*W per timestep via lane-dense pooling matrix [SEQ, N]
    ym = lax.dot_general(pool_ref[...], y, (((1,), (1,)), ((), ())),
                         preferred_element_type=jnp.float32)   # [SEQ, C_CAT]

    # fc (Linear C_CAT -> NHID) + ReLU
    fc = jnp.dot(ym, wfc_ref[...],
                 preferred_element_type=jnp.float32) + bfc_ref[...]        # [SEQ, NHID]
    fc = jnp.maximum(fc, 0.0)

    # q_emb + cm_feat, then the forward's .sum(1) over the sequence axis
    out_ref[0] = jnp.sum(qe_ref[0] + fc, axis=0, keepdims=True)            # [1, NHID]


def cmsa_fc_pallas(x, q_emb, prm, pool_t):
    flops = 2 * B * (C_PROJ * C_CAT * N                    # fused qkv projection
                     + C_QK * N * N                        # energy
                     + (C_CAT + ONES_ROWS) * N * N         # aggregation (+ row sums)
                     + SEQ * N * C_CAT                     # HW mean pool
                     + SEQ * C_CAT * NHID)                 # fc
    bytes_accessed = 4 * (x.size + q_emb.size + prm["wqkv"].size
                          + prm["bqkv"].size + prm["gamma"].size
                          + pool_t.size + prm["wfc"].size + prm["bfc"].size
                          + B * NHID)
    in_specs = [
        pl.BlockSpec((1, C_CAT, N), lambda b: (b, 0, 0)),       # x (per batch)
        pl.BlockSpec((1, SEQ, NHID), lambda b: (b, 0, 0)),      # q_emb (per batch)
        pl.BlockSpec((C_PROJ, C_CAT), lambda b: (0, 0)),        # fused wqkv (+ones rows)
        pl.BlockSpec((C_PROJ, 1), lambda b: (0, 0)),            # fused bqkv
        pl.BlockSpec(memory_space=pltpu.MemorySpace.SMEM),      # gamma scalar
        pl.BlockSpec((SEQ, N), lambda b: (0, 0)),               # pooling matrix (lane-dense)
        pl.BlockSpec((C_CAT, NHID), lambda b: (0, 0)),          # wfc
        pl.BlockSpec((1, NHID), lambda b: (0, 0)),              # bfc
    ]
    out_spec = pl.BlockSpec((1, 1, NHID), lambda b: (b, 0, 0))
    return pl.pallas_call(
        cmsa_kernel,
        grid=(B,),
        in_specs=in_specs,
        out_specs=out_spec,
        out_shape=jax.ShapeDtypeStruct((B, 1, NHID), jnp.float32),
        compiler_params=pltpu.CompilerParams(dimension_semantics=("parallel",)),
        cost_estimate=pl.CostEstimate(flops=flops, transcendentals=B * N * N,
                                      bytes_accessed=bytes_accessed),
    )(x, q_emb, prm["wqkv"], prm["bqkv"], prm["gamma"], pool_t,
      prm["wfc"], prm["bfc"])


# ---------------- full CMSA_Model.forward -----------------------------------
def cmsa_model_forward(v, q, prm):
    assert v.ndim == 4
    spatial = jnp.asarray(generate_spatial_batch(B, H, W))        # [B, 8, H, W]
    w_emb = prm["emb"][q]                                         # [B, SEQ, EMB]
    q_emb = gru_forward_all(w_emb, prm["gru"])                    # [B, SEQ, NHID]
    x = build_cm_feat(v, q_emb, spatial)                          # [B, C_CAT, N]
    # pooling matrix [SEQ, N]: pool_t[t, n] = 1/HW if n // HW == t else 0
    pool_t = jnp.asarray(
        (np.arange(SEQ)[:, None] == (np.arange(N)[None, :] // HW)
         ).astype(np.float32) / HW)
    y = cmsa_fc_pallas(x, q_emb, prm, pool_t)                     # [B, 1, NHID]
    return y[:, 0, :]                                             # [B, NHID]
    # TODO(synk): classifier (used only by .classify(), not forward) is not implemented.


# ---------------- deterministic parameter init -------------------------------
def init_params(key):
    ks = jax.random.split(key, 12)
    s = 0.1
    emb = s * jax.random.normal(ks[0], (NTOK, EMB), jnp.float32)
    gru = (s * jax.random.normal(ks[1], (3 * NHID, EMB), jnp.float32),
           s * jax.random.normal(ks[2], (3 * NHID, NHID), jnp.float32),
           s * jax.random.normal(ks[3], (3 * NHID,), jnp.float32),
           s * jax.random.normal(ks[4], (3 * NHID,), jnp.float32))
    wq = s * jax.random.normal(ks[5], (C_QK, C_CAT), jnp.float32)
    bq = s * jax.random.normal(ks[6], (C_QK, 1), jnp.float32)
    wk = s * jax.random.normal(ks[7], (C_QK, C_CAT), jnp.float32)
    bk = s * jax.random.normal(ks[8], (C_QK, 1), jnp.float32)
    wv = s * jax.random.normal(ks[9], (C_CAT, C_CAT), jnp.float32)
    bv = s * jax.random.normal(ks[10], (C_CAT, 1), jnp.float32)
    # fused projection weight/bias: Q | K | V | 8 ones-rows (0 weight, 1 bias)
    wqkv = jnp.concatenate(
        [wq, wk, wv, jnp.zeros((ONES_ROWS, C_CAT), jnp.float32)], axis=0)   # [88, 64]
    bqkv = jnp.concatenate(
        [bq, bk, bv, jnp.ones((ONES_ROWS, 1), jnp.float32)], axis=0)        # [88, 1]
    prm = dict(
        emb=emb, gru=gru, wqkv=wqkv, bqkv=bqkv,
        # original CMSA initializes gamma to 0 (attention branch disabled);
        # use 0.5 here so the attention path is actually exercised.
        gamma=jnp.full((1, 1), 0.5, jnp.float32),
        wfc=s * jax.random.normal(ks[11], (C_CAT, NHID), jnp.float32),
        bfc=jnp.zeros((1, NHID), jnp.float32),
    )
    return prm


if __name__ == "__main__":
    key = jax.random.PRNGKey(0)
    k_v, k_q, k_p = jax.random.split(key, 3)
    v = jax.random.normal(k_v, (B, V_DIM, H, W), jnp.float32)     # NCHW visual feature
    q = jax.random.randint(k_q, (B, SEQ), 0, NTOK)                # question token ids
    prm = init_params(k_p)

    fwd = jax.jit(cmsa_model_forward)
    out = jax.block_until_ready(fwd(v, q, prm))
    assert out.shape == (B, NHID) and out.dtype == jnp.float32
    assert bool(jnp.all(jnp.isfinite(out)))
    print("KERNEL_OK")
</pallas_src>

<mosaic_0001>
module attributes {stable_mosaic.version = 11 : i64} {
  func.func @cmsa_kernel(%arg0: i32, %arg1: memref<1x64x512xf32, #tpu.memory_space<vmem>>, %arg2: memref<1x8x32xf32, #tpu.memory_space<vmem>>, %arg3: memref<88x64xf32, #tpu.memory_space<vmem>>, %arg4: memref<88x1xf32, #tpu.memory_space<vmem>>, %arg5: memref<1x1xf32, #tpu.memory_space<smem>>, %arg6: memref<8x512xf32, #tpu.memory_space<vmem>>, %arg7: memref<64x32xf32, #tpu.memory_space<vmem>>, %arg8: memref<1x32xf32, #tpu.memory_space<vmem>>, %arg9: memref<1x1x32xf32, #tpu.memory_space<vmem>>) attributes {dimension_semantics = [#tpu.dimension_semantics<parallel>], iteration_bounds = array<i64: 2>, scalar_prefetch = 0 : i64, scratch_operands = 0 : i64, tpu.core_type = #tpu.core_type<tc>, window_params = [{transform_indices = @transform_0, window_bounds = array<i64: 1, 64, 512>}, {transform_indices = @transform_1, window_bounds = array<i64: 1, 8, 32>}, {pipeline_mode = #tpu.pipeline_mode<synchronous>, transform_indices = @transform_2, window_bounds = array<i64: 88, 64>}, {pipeline_mode = #tpu.pipeline_mode<synchronous>, transform_indices = @transform_3, window_bounds = array<i64: 88, 1>}, {transform_indices = @transform_4, window_bounds = array<i64: 1, 1>}, {pipeline_mode = #tpu.pipeline_mode<synchronous>, transform_indices = @transform_5, window_bounds = array<i64: 8, 512>}, {pipeline_mode = #tpu.pipeline_mode<synchronous>, transform_indices = @transform_6, window_bounds = array<i64: 64, 32>}, {pipeline_mode = #tpu.pipeline_mode<synchronous>, transform_indices = @transform_7, window_bounds = array<i64: 1, 32>}, {transform_indices = @transform_8, window_bounds = array<i64: 1, 1, 32>}]} {
    %c0 = arith.constant 0 : index
    %c0_0 = arith.constant 0 : index
    %c0_1 = arith.constant 0 : index
    %0 = vector.load %arg1[%c0, %c0_0, %c0_1] : memref<1x64x512xf32, #tpu.memory_space<vmem>>, vector<1x64x512xf32>
    %1 = vector.shape_cast %0 : vector<1x64x512xf32> to vector<64x512xf32>
    %c0_2 = arith.constant 0 : index
    %c0_3 = arith.constant 0 : index
    %2 = vector.load %arg3[%c0_2, %c0_3] : memref<88x64xf32, #tpu.memory_space<vmem>>, vector<88x64xf32>
    %cst = arith.constant dense<0.000000e+00> : vector<88x512xf32>
    %3 = tpu.matmul %2, %1, %cst {dimension_numbers = #tpu.dot_dimension_numbers<[1], [0], [0], [1], [0, 0, 1, 1], [], []>} : vector<88x64xf32>, vector<64x512xf32>, vector<88x512xf32> -> vector<88x512xf32>
    %c0_4 = arith.constant 0 : index
    %c0_5 = arith.constant 0 : index
    %4 = vector.load %arg4[%c0_4, %c0_5] : memref<88x1xf32, #tpu.memory_space<vmem>>, vector<88x1xf32>
    %5 = vector.broadcast %4 : vector<88x1xf32> to vector<88x512xf32>
    %6 = arith.addf %3, %5 : vector<88x512xf32>
    %7 = vector.extract_strided_slice %6 {offsets = [0, 0], sizes = [8, 512], strides = [1, 1]} : vector<88x512xf32> to vector<8x512xf32>
    %8 = arith.truncf %7 : vector<8x512xf32> to vector<8x512xbf16>
    %9 = vector.extract_strided_slice %6 {offsets = [8, 0], sizes = [8, 512], strides = [1, 1]} : vector<88x512xf32> to vector<8x512xf32>
    %10 = arith.truncf %9 : vector<8x512xf32> to vector<8x512xbf16>
    %11 = vector.extract_strided_slice %6 {offsets = [16, 0], sizes = [72, 512], strides = [1, 1]} : vector<88x512xf32> to vector<72x512xf32>
    %12 = arith.truncf %11 : vector<72x512xf32> to vector<72x512xbf16>
    %cst_6 = arith.constant dense<0.000000e+00> : vector<512x512xf32>
    %13 = tpu.matmul %8, %10, %cst_6 {dimension_numbers = #tpu.dot_dimension_numbers<[0], [0], [1], [1], [0, 1, 1, 1], [], []>} : vector<8x512xbf16>, vector<8x512xbf16>, vector<512x512xf32> -> vector<512x512xf32>
    %cst_7 = arith.constant dense<0xFF800000> : vector<512xf32>
    %14 = vector.multi_reduction <maximumf>, %13, %cst_7 [1] : vector<512x512xf32> to vector<512xf32>
    %15 = vector.shape_cast %14 : vector<512xf32> to vector<512x1xf32>
    %16 = vector.broadcast %15 : vector<512x1xf32> to vector<512x512xf32>
    %17 = arith.subf %13, %16 : vector<512x512xf32>
    %18 = math.exp %17 : vector<512x512xf32>
    %19 = arith.truncf %18 : vector<512x512xf32> to vector<512x512xbf16>
    %cst_8 = arith.constant dense<0.000000e+00> : vector<72x512xf32>
    %20 = tpu.matmul %12, %19, %cst_8 {dimension_numbers = #tpu.dot_dimension_numbers<[1], [1], [0], [0], [0, 0, 1, 0], [], []>} : vector<72x512xbf16>, vector<512x512xbf16>, vector<72x512xf32> -> vector<72x512xf32>
    %21 = vector.extract_strided_slice %20 {offsets = [0, 0], sizes = [64, 512], strides = [1, 1]} : vector<72x512xf32> to vector<64x512xf32>
    %22 = vector.extract_strided_slice %20 {offsets = [64, 0], sizes = [1, 512], strides = [1, 1]} : vector<72x512xf32> to vector<1x512xf32>
    %23 = tpu.reciprocal %22 {approx = true} : vector<1x512xf32> -> vector<1x512xf32>
    %c0_9 = arith.constant 0 : index
    %c0_10 = arith.constant 0 : index
    %24 = memref.load %arg5[%c0_9, %c0_10] : memref<1x1xf32, #tpu.memory_space<smem>>
    %25 = vector.broadcast %24 : f32 to vector<64x512xf32>
    %26 = arith.mulf %25, %21 : vector<64x512xf32>
    %27 = vector.broadcast %23 : vector<1x512xf32> to vector<64x512xf32>
    %28 = arith.mulf %26, %27 : vector<64x512xf32>
    %29 = arith.addf %28, %1 : vector<64x512xf32>
    %c0_11 = arith.constant 0 : index
    %c0_12 = arith.constant 0 : index
    %30 = vector.load %arg6[%c0_11, %c0_12] : memref<8x512xf32, #tpu.memory_space<vmem>>, vector<8x512xf32>
    %cst_13 = arith.constant dense<0.000000e+00> : vector<8x64xf32>
    %31 = tpu.matmul %30, %29, %cst_13 {dimension_numbers = #tpu.dot_dimension_numbers<[1], [1], [0], [0], [0, 0, 1, 0], [], []>} : vector<8x512xf32>, vector<64x512xf32>, vector<8x64xf32> -> vector<8x64xf32>
    %c0_14 = arith.constant 0 : index
    %c0_15 = arith.constant 0 : index
    %32 = vector.load %arg7[%c0_14, %c0_15] : memref<64x32xf32, #tpu.memory_space<vmem>>, vector<64x32xf32>
    %cst_16 = arith.constant dense<0.000000e+00> : vector<8x32xf32>
    %33 = tpu.matmul %31, %32, %cst_16 {dimension_numbers = #tpu.dot_dimension_numbers<[1], [0], [0], [1], [0, 0, 1, 1], [], []>} : vector<8x64xf32>, vector<64x32xf32>, vector<8x32xf32> -> vector<8x32xf32>
    %c0_17 = arith.constant 0 : index
    %c0_18 = arith.constant 0 : index
    %34 = vector.load %arg8[%c0_17, %c0_18] : memref<1x32xf32, #tpu.memory_space<vmem>>, vector<1x32xf32>
    %35 = vector.broadcast %34 : vector<1x32xf32> to vector<8x32xf32>
    %36 = arith.addf %33, %35 : vector<8x32xf32>
    %cst_19 = arith.constant 0.000000e+00 : f32
    %37 = vector.broadcast %cst_19 : f32 to vector<8x32xf32>
    %38 = arith.maximumf %36, %37 : vector<8x32xf32>
    %c0_20 = arith.constant 0 : index
    %c0_21 = arith.constant 0 : index
    %c0_22 = arith.constant 0 : index
    %39 = vector.load %arg2[%c0_20, %c0_21, %c0_22] : memref<1x8x32xf32, #tpu.memory_space<vmem>>, vector<1x8x32xf32>
    %40 = vector.shape_cast %39 : vector<1x8x32xf32> to vector<8x32xf32>
    %41 = arith.addf %40, %38 : vector<8x32xf32>
    %cst_23 = arith.constant dense<0.000000e+00> : vector<32xf32>
    %42 = vector.multi_reduction <add>, %41, %cst_23 [0] : vector<8x32xf32> to vector<32xf32>
    %43 = vector.shape_cast %42 : vector<32xf32> to vector<1x32xf32>
    %c0_24 = arith.constant 0 : index
    %c0_25 = arith.constant 0 : index
    %c0_26 = arith.constant 0 : index
    %44 = vector.load %arg9[%c0_24, %c0_25, %c0_26] : memref<1x1x32xf32, #tpu.memory_space<vmem>>, vector<1x1x32xf32>
    %45 = vector.shape_cast %44 : vector<1x1x32xf32> to vector<1x32xf32>
    %46 = vector.shape_cast %43 : vector<1x32xf32> to vector<1x1x32xf32>
    tpu.vector_store %arg9[%c0_24, %c0_25, %c0_26], %46 {strides = array<i32>} : memref<1x1x32xf32, #tpu.memory_space<vmem>>, vector<1x1x32xf32>,
    return
  }
  func.func @transform_0(%arg0: i32) -> (i32, i32, i32) {
    %c0_i32 = arith.constant 0 : i32
    %c0_i32_0 = arith.constant 0 : i32
    %c0_i32_1 = arith.constant 0 : i32
    return %arg0, %c0_i32, %c0_i32_0 : i32, i32, i32
  }
  func.func @transform_1(%arg0: i32) -> (i32, i32, i32) {
    %c0_i32 = arith.constant 0 : i32
    %c0_i32_0 = arith.constant 0 : i32
    %c0_i32_1 = arith.constant 0 : i32
    return %arg0, %c0_i32, %c0_i32_0 : i32, i32, i32
  }
  func.func @transform_2(%arg0: i32) -> (i32, i32) {
    %c0_i32 = arith.constant 0 : i32
    %c0_i32_0 = arith.constant 0 : i32
    %c0_i32_1 = arith.constant 0 : i32
    return %c0_i32, %c0_i32_0 : i32, i32
  }
  func.func @transform_3(%arg0: i32) -> (i32, i32) {
    %c0_i32 = arith.constant 0 : i32
    %c0_i32_0 = arith.constant 0 : i32
    %c0_i32_1 = arith.constant 0 : i32
    return %c0_i32, %c0_i32_0 : i32, i32
  }
  func.func @transform_4(%arg0: i32) -> (i32, i32) {
    %c0_i32 = arith.constant 0 : i32
    %c0_i32_0 = arith.constant 0 : i32
    %c0_i32_1 = arith.constant 0 : i32
    return %c0_i32, %c0_i32_0 : i32, i32
  }
  func.func @transform_5(%arg0: i32) -> (i32, i32) {
    %c0_i32 = arith.constant 0 : i32
    %c0_i32_0 = arith.constant 0 : i32
    %c0_i32_1 = arith.constant 0 : i32
    return %c0_i32, %c0_i32_0 : i32, i32
  }
  func.func @transform_6(%arg0: i32) -> (i32, i32) {
    %c0_i32 = arith.constant 0 : i32
    %c0_i32_0 = arith.constant 0 : i32
    %c0_i32_1 = arith.constant 0 : i32
    return %c0_i32, %c0_i32_0 : i32, i32
  }
  func.func @transform_7(%arg0: i32) -> (i32, i32) {
    %c0_i32 = arith.constant 0 : i32
    %c0_i32_0 = arith.constant 0 : i32
    %c0_i32_1 = arith.constant 0 : i32
    return %c0_i32, %c0_i32_0 : i32, i32
  }
  func.func @transform_8(%arg0: i32) -> (i32, i32, i32) {
    %c0_i32 = arith.constant 0 : i32
    %c0_i32_0 = arith.constant 0 : i32
    %c0_i32_1 = arith.constant 0 : i32
    return %arg0, %c0_i32, %c0_i32_0 : i32, i32, i32
  }
}

</mosaic_0001>

<llo_original>
// kernel: custom-call.3
$region0: #{custom-call.3}
  %s0 = inlined_call_operand.vmem [shape: f32[8,2,32], index: 0, kind: output, shape index: {}]

// kernel: custom-call
$region0: #{custom-call}
  %s0 = inlined_call_operand.vmem [shape: f32[2,32], index: 0, kind: output, shape index: {}]

// kernel: cmsa_model_forward.1
$region0: #{cmsa_model_forward.1}
  #allocation0 [shape = 'u32[]', space=smem, size = 0x4, offset = 0x4, fixed_abs, tag = 'smem constant byte address 0x4 - core index']
  #allocation1 [shape = 'u32[72,128]{1,0:T(1,128)}', space=vmem, size = 0x9000, scoped, tag = 'internal scratch']
  #allocation2 [shape = 'f32[1,1]{1,0:T(1,128)S(6)}', space=smem, size = 0x200, scoped, tag = 'scoped memory for cmsa_model_forward.1']
  %s0 = inlined_call_operand.vmem [shape: f32[2,64,512], index: 0, kind: input, shape index: {}]
  %s1 = inlined_call_operand.vmem [shape: f32[2,8,32], index: 1, kind: input, shape index: {}]
  %s2 = inlined_call_operand.vmem [shape: f32[88,64], index: 2, kind: input, shape index: {}]
  %s3 = inlined_call_operand.vmem [shape: f32[88,1], index: 3, kind: input, shape index: {}]
  %s4 = inlined_call_operand.<no memory space> [shape: f32[1,1], index: 4, kind: input, shape index: {}]
  %s5 = inlined_call_operand.vmem [shape: f32[8,512], index: 5, kind: input, shape index: {}]
  %s6 = inlined_call_operand.vmem [shape: f32[64,32], index: 6, kind: input, shape index: {}]
  %s7 = inlined_call_operand.vmem [shape: f32[1,32], index: 7, kind: input, shape index: {}]
  %s8 = inlined_call_operand.hbm [shape: f32[2,1,32], index: 8, kind: output, shape index: {}]
  %s9 = sld [smem:[#allocation0]]
  $region65: #{cmsa_model_forward.1} parent=0
    _
  %s11 = ssub.s32 1, %s9
  %s12 = scalar_select 0, %s11, %s9
  %13 = sst [smem:[#allocation2]] %s4
  $region1: #{cmsa_model_forward.1} parent=0
    #allocation3 [shape = 'u8[1024]{0}', space=vmem, size = 0x400, scoped, tag = 'output window, operand 0']
    #allocation4 [shape = 's32[2]{0}', space=sflag, size = 0x8, scoped, tag = 'scoped memory for cmsa_model_forward.1']
    %14 = vsyncpa [#allocation4], 0
    %s15 = scalar_lea.sflag [#allocation4], 1
    %16 = vsyncpa %s15, 0
    loop: start=0, step=1, limit=4
    $region2: #{cmsa_model_forward.1} parent=1 // loop_pre_header
      _
    $region3: #{cmsa_model_forward.1} parent=1 // loop_header
      %s18 = sphi 0, %s22
      %p19 = scmp.ge.s32.totalorder %s18, 4
      %s28 = sphi 0, %s30
      %s31 = sphi 0, %s28
      %s32 = sphi 0, %s31
      %s48 = sphi 0, %s32
      %s54 = sphi 0, %s56
      %s57 = sphi 0, %s54
      %s58 = sphi 0, %s57
      %s74 = sphi 0, %s58
      %s78 = sphi 0, %s78
      %s80 = sphi 0, %s78
      %s81 = sphi 0, %s80
      %s95 = sphi 0, %s81
      %s99 = sphi 0, %s99
      %s101 = sphi 0, %s99
      %s102 = sphi 0, %s101
      %s116 = sphi 0, %s102
      %s120 = sphi 0, %s120
      %s122 = sphi 0, %s120
      %s123 = sphi 0, %s122
      %s137 = sphi 0, %s123
      %s141 = sphi 0, %s141
      %s143 = sphi 0, %s141
      %s144 = sphi 0, %s143
      %s158 = sphi 0, %s144
      %s162 = sphi 0, %s162
      %s164 = sphi 0, %s162
      %s165 = sphi 0, %s164
      %s179 = sphi 0, %s165
      %s183 = sphi 0, %s183
      %s185 = sphi 0, %s183
      %s186 = sphi 0, %s185
      %s200 = sphi 0, %s186
      %s206 = sphi 0, %s208
      %s209 = sphi 0, %s206
      %s210 = sphi 0, %s209
      %s226 = sphi 0, %s210
    $region4: #{cmsa_model_forward.1} parent=1 // loop_header_branch
      %21 = sbr.rel (%p19) target = $region8
    $region5: #{cmsa_model_forward.1} parent=1 // loop_body
      %s23 = ssub.s32 %s18, 1
      %s24 = ssub.s32 %s18, 2
      %s25 = sadd.s32 %s18, 1
      %s26 = ssub.s32 %s18, %s25
      %p27 = scmp.eq.s32.totalorder %s26, 0
      %s29 = sadd.s32 %s28, 1
      %s30 = scalar_select %p27, %s28, %s29
      %p33 = pneg %p27
      %p34 = scmp.eq.s32.totalorder %s18, 1
      %p35 = por %p33, %p34
      %p36 = scmp.ne.s32.totalorder %s28, %s31
      %p37 = scmp.eq.s32.totalorder %s18, 0
      %p38 = por %p36, %p37
      %p39 = scmp.ne.s32.totalorder %s28, %s31
      %p40 = scmp.eq.s32.totalorder %s23, 1
      %p41 = por %p39, %p40
      %p42 = scmp.ne.s32.totalorder %s31, %s32
      %p43 = scmp.eq.s32.totalorder %s23, 0
      %p44 = por %p42, %p43
      %p45 = scmp.ne.s32.totalorder %s31, %s32
      %p46 = scmp.eq.s32.totalorder %s24, 1
      %p47 = por %p45, %p46
      %p49 = scmp.ne.s32.totalorder %s32, %s48
      %p50 = scmp.eq.s32.totalorder %s24, 0
      %p51 = por %p49, %p50
      %s52 = ssub.s32 %s18, %s25
      %p53 = scmp.eq.s32.totalorder %s52, 0
      %s55 = sadd.s32 %s54, 1
      %s56 = scalar_select %p53, %s54, %s55
      %p59 = pneg %p53
      %p60 = scmp.eq.s32.totalorder %s18, 1
      %p61 = por %p59, %p60
      %p62 = scmp.ne.s32.totalorder %s54, %s57
      %p63 = scmp.eq.s32.totalorder %s18, 0
      %p64 = por %p62, %p63
      %p65 = scmp.ne.s32.totalorder %s54, %s57
      %p66 = scmp.eq.s32.totalorder %s23, 1
      %p67 = por %p65, %p66
      %p68 = scmp.ne.s32.totalorder %s57, %s58
      %p69 = scmp.eq.s32.totalorder %s23, 0
      %p70 = por %p68, %p69
      %p71 = scmp.ne.s32.totalorder %s57, %s58
      %p72 = scmp.eq.s32.totalorder %s24, 1
      %p73 = por %p71, %p72
      %p75 = scmp.ne.s32.totalorder %s58, %s74
      %p76 = scmp.eq.s32.totalorder %s24, 0
      %p77 = por %p75, %p76
      %s79 = sadd.s32 %s78, 1
      %p82 = scmp.eq.s32.totalorder %s18, 1
      %p83 = scmp.ne.s32.totalorder %s78, %s80
      %p84 = scmp.eq.s32.totalorder %s18, 0
      %p85 = por %p83, %p84
      %p86 = scmp.ne.s32.totalorder %s78, %s80
      %p87 = scmp.eq.s32.totalorder %s23, 1
      %p88 = por %p86, %p87
      %p89 = scmp.ne.s32.totalorder %s80, %s81
      %p90 = scmp.eq.s32.totalorder %s23, 0
      %p91 = por %p89, %p90
      %p92 = scmp.ne.s32.totalorder %s80, %s81
      %p93 = scmp.eq.s32.totalorder %s24, 1
      %p94 = por %p92, %p93
      %p96 = scmp.ne.s32.totalorder %s81, %s95
      %p97 = scmp.eq.s32.totalorder %s24, 0
      %p98 = por %p96, %p97
      %s100 = sadd.s32 %s99, 1
      %p103 = scmp.eq.s32.totalorder %s18, 1
      %p104 = scmp.ne.s32.totalorder %s99, %s101
      %p105 = scmp.eq.s32.totalorder %s18, 0
      %p106 = por %p104, %p105
      %p107 = scmp.ne.s32.totalorder %s99, %s101
      %p108 = scmp.eq.s32.totalorder %s23, 1
      %p109 = por %p107, %p108
      %p110 = scmp.ne.s32.totalorder %s101, %s102
      %p111 = scmp.eq.s32.totalorder %s23, 0
      %p112 = por %p110, %p111
      %p113 = scmp.ne.s32.totalorder %s101, %s102
      %p114 = scmp.eq.s32.totalorder %s24, 1
      %p115 = por %p113, %p114
      %p117 = scmp.ne.s32.totalorder %s102, %s116
      %p118 = scmp.eq.s32.totalorder %s24, 0
      %p119 = por %p117, %p118
      %s121 = sadd.s32 %s120, 1
      %p124 = scmp.eq.s32.totalorder %s18, 1
      %p125 = scmp.ne.s32.totalorder %s120, %s122
      %p126 = scmp.eq.s32.totalorder %s18, 0
      %p127 = por %p125, %p126
      %p128 = scmp.ne.s32.totalorder %s120, %s122
      %p129 = scmp.eq.s32.totalorder %s23, 1
      %p130 = por %p128, %p129
      %p131 = scmp.ne.s32.totalorder %s122, %s123
      %p132 = scmp.eq.s32.totalorder %s23, 0
      %p133 = por %p131, %p132
      %p134 = scmp.ne.s32.totalorder %s122, %s123
      %p135 = scmp.eq.s32.totalorder %s24, 1
      %p136 = por %p134, %p135
      %p138 = scmp.ne.s32.totalorder %s123, %s137
      %p139 = scmp.eq.s32.totalorder %s24, 0
      %p140 = por %p138, %p139
      %s142 = sadd.s32 %s141, 1
      %p145 = scmp.eq.s32.totalorder %s18, 1
      %p146 = scmp.ne.s32.totalorder %s141, %s143
      %p147 = scmp.eq.s32.totalorder %s18, 0
      %p148 = por %p146, %p147
      %p149 = scmp.ne.s32.totalorder %s141, %s143
      %p150 = scmp.eq.s32.totalorder %s23, 1
      %p151 = por %p149, %p150
      %p152 = scmp.ne.s32.totalorder %s143, %s144
      %p153 = scmp.eq.s32.totalorder %s23, 0
      %p154 = por %p152, %p153
      %p155 = scmp.ne.s32.totalorder %s143, %s144
      %p156 = scmp.eq.s32.totalorder %s24, 1
      %p157 = por %p155, %p156
      %p159 = scmp.ne.s32.totalorder %s144, %s158
      %p160 = scmp.eq.s32.totalorder %s24, 0
      %p161 = por %p159, %p160
      %s163 = sadd.s32 %s162, 1
      %p166 = scmp.eq.s32.totalorder %s18, 1
      %p167 = scmp.ne.s32.totalorder %s162, %s164
      %p168 = scmp.eq.s32.totalorder %s18, 0
      %p169 = por %p167, %p168
      %p170 = scmp.ne.s32.totalorder %s162, %s164
      %p171 = scmp.eq.s32.totalorder %s23, 1
      %p172 = por %p170, %p171
      %p173 = scmp.ne.s32.totalorder %s164, %s165
      %p174 = scmp.eq.s32.totalorder %s23, 0
      %p175 = por %p173, %p174
      %p176 = scmp.ne.s32.totalorder %s164, %s165
      %p177 = scmp.eq.s32.totalorder %s24, 1
      %p178 = por %p176, %p177
      %p180 = scmp.ne.s32.totalorder %s165, %s179
      %p181 = scmp.eq.s32.totalorder %s24, 0
      %p182 = por %p180, %p181
      %s184 = sadd.s32 %s183, 1
      %p187 = scmp.eq.s32.totalorder %s18, 1
      %p188 = scmp.ne.s32.totalorder %s183, %s185
      %p189 = scmp.eq.s32.totalorder %s18, 0
      %p190 = por %p188, %p189
      %p191 = scmp.ne.s32.totalorder %s183, %s185
      %p192 = scmp.eq.s32.totalorder %s23, 1
      %p193 = por %p191, %p192
      %p194 = scmp.ne.s32.totalorder %s185, %s186
      %p195 = scmp.eq.s32.totalorder %s23, 0
      %p196 = por %p194, %p195
      %p197 = scmp.ne.s32.totalorder %s185, %s186
      %p198 = scmp.eq.s32.totalorder %s24, 1
      %p199 = por %p197, %p198
      %p201 = scmp.ne.s32.totalorder %s186, %s200
      %p202 = scmp.eq.s32.totalorder %s24, 0
      %p203 = por %p201, %p202
      %s204 = ssub.s32 %s18, %s25
      %p205 = scmp.eq.s32.totalorder %s204, 0
      %s207 = sadd.s32 %s206, 1
      %s208 = scalar_select %p205, %s206, %s207
      %p211 = pneg %p205
      %p212 = scmp.eq.s32.totalorder %s18, 1
      %p213 = por %p211, %p212
      %p214 = scmp.ne.s32.totalorder %s206, %s209
      %p215 = scmp.eq.s32.totalorder %s18, 0
      %p216 = por %p214, %p215
      %p217 = scmp.ne.s32.totalorder %s206, %s209
      %p218 = scmp.eq.s32.totalorder %s23, 1
      %p219 = por %p217, %p218
      %p220 = scmp.ne.s32.totalorder %s209, %s210
      %p221 = scmp.eq.s32.totalorder %s23, 0
      %p222 = por %p220, %p221
      %p223 = scmp.ne.s32.totalorder %s209, %s210
      %p224 = scmp.eq.s32.totalorder %s24, 1
      %p225 = por %p223, %p224
      %p227 = scmp.ne.s32.totalorder %s210, %s226
      %p228 = scmp.eq.s32.totalorder %s24, 0
      %p229 = por %p227, %p228
      %p230 = scmp.le.s32.totalorder 1, %s18
      %p231 = scmp.lt.s32.totalorder %s18, 3
      %p232 = pnand %p230, %p231
      %p233 = pneg %p232
      // Predicated region
      $region9: #{cmsa_model_forward.1} parent=5 // pred_check
        _
      $region10: #{cmsa_model_forward.1} parent=5 // pred_check_branch
        %235 = sbr.rel (%p232) target = $region12
      $region11: #{cmsa_model_forward.1} parent=5 // pred_region
        %s236 = ssub.s32 %s18, 1
        // Predicated region
        $region13: #{cmsa_model_forward.1} parent=11 // pred_check
          %p237 = pneg %p91
        $region14: #{cmsa_model_forward.1} parent=11 // pred_check_branch
          %239 = sbr.rel (%p237) target = $region16
        $region15: #{cmsa_model_forward.1} parent=11 // pred_region
          _
        $region16: #{cmsa_model_forward.1} parent=11 // pred_fallthru
          _
        // Predicated region
        $region17: #{cmsa_model_forward.1} parent=11 // pred_check
          %p240 = pneg %p112
        $region18: #{cmsa_model_forward.1} parent=11 // pred_check_branch
          %242 = sbr.rel (%p240) target = $region20
        $region19: #{cmsa_model_forward.1} parent=11 // pred_region
          _
        $region20: #{cmsa_model_forward.1} parent=11 // pred_fallthru
          _
        // Predicated region
        $region21: #{cmsa_model_forward.1} parent=11 // pred_check
          %p243 = pneg %p133
        $region22: #{cmsa_model_forward.1} parent=11 // pred_check_branch
          %245 = sbr.rel (%p243) target = $region24
        $region23: #{cmsa_model_forward.1} parent=11 // pred_region
          _
        $region24: #{cmsa_model_forward.1} parent=11 // pred_fallthru
          _
        // Predicated region
        $region25: #{cmsa_model_forward.1} parent=11 // pred_check
          %p246 = pneg %p154
        $region26: #{cmsa_model_forward.1} parent=11 // pred_check_branch
          %248 = sbr.rel (%p246) target = $region28
        $region27: #{cmsa_model_forward.1} parent=11 // pred_region
          _
        $region28: #{cmsa_model_forward.1} parent=11 // pred_fallthru
          _
        // Predicated region
        $region29: #{cmsa_model_forward.1} parent=11 // pred_check
          %p249 = pneg %p175
        $region30: #{cmsa_model_forward.1} parent=11 // pred_check_branch
          %251 = sbr.rel (%p249) target = $region32
        $region31: #{cmsa_model_forward.1} parent=11 // pred_region
          _
        $region32: #{cmsa_model_forward.1} parent=11 // pred_fallthru
          _
        // Predicated region
        $region33: #{cmsa_model_forward.1} parent=11 // pred_check
          %p252 = pneg %p196
        $region34: #{cmsa_model_forward.1} parent=11 // pred_check_branch
          %254 = sbr.rel (%p252) target = $region36
        $region35: #{cmsa_model_forward.1} parent=11 // pred_region
          _
        $region36: #{cmsa_model_forward.1} parent=11 // pred_fallthru
          _
      $region12: #{cmsa_model_forward.1} parent=5 // pred_fallthru
        _
      %p255 = scmp.lt.s32.totalorder %s18, 2
      // Predicated region
      $region37: #{cmsa_model_forward.1} parent=5 // pred_check
        %p256 = pneg %p255
      $region38: #{cmsa_model_forward.1} parent=5 // pred_check_branch
        %258 = sbr.rel (%p256) target = $region40
      $region39: #{cmsa_model_forward.1} parent=5 // pred_region
        // Predicated region
        $region41: #{cmsa_model_forward.1} parent=39 // pred_check
          %p259 = pneg %p38
        $region42: #{cmsa_model_forward.1} parent=39 // pred_check_branch
          %261 = sbr.rel (%p259) target = $region44
        $region43: #{cmsa_model_forward.1} parent=39 // pred_region
          %p262 = scmp.lt.s32.totalorder %s18, 1
          %s263 = scalar_select %p262, %s18, 1
          %s264 = smul.addr %s263, 32
          %s265 = smul.addr %s264, 8
          %s266 = scalar_lea.vmem %s0, %s265
        $region44: #{cmsa_model_forward.1} parent=39 // pred_fallthru
          _
        // Predicated region
        $region45: #{cmsa_model_forward.1} parent=39 // pred_check
          %p267 = pneg %p64
        $region46: #{cmsa_model_forward.1} parent=39 // pred_check_branch
          %269 = sbr.rel (%p267) target = $region48
        $region47: #{cmsa_model_forward.1} parent=39 // pred_region
          %p270 = scmp.lt.s32.totalorder %s18, 1
          %s271 = scalar_select %p270, %s18, 1
          %s272 = smul.addr %s271, 8
          %s273 = scalar_lea.vmem %s1, %s272
        $region48: #{cmsa_model_forward.1} parent=39 // pred_fallthru
          _
      $region40: #{cmsa_model_forward.1} parent=5 // pred_fallthru
        _
      %p274 = scmp.le.s32.totalorder 1, %s18
      %p275 = scmp.lt.s32.totalorder %s18, 3
      %p276 = pnand %p274, %p275
      %p277 = pneg %p276
      // Predicated region
      $region49: #{cmsa_model_forward.1} parent=5 // pred_check
        _
      $region50: #{cmsa_model_forward.1} parent=5 // pred_check_branch
        %279 = sbr.rel (%p276) target = $region52
      $region51: #{cmsa_model_forward.1} parent=5 // pred_region
        %s280 = ssub.s32 %s18, 1
        %p281 = scmp.lt.s32.totalorder %s23, 1
        %s282 = scalar_select %p281, %s23, 1
        %s283 = smul.addr %s282, 32
        %s284 = smul.addr %s283, 8
        %s285 = scalar_lea.vmem %s0, %s284
        %p286 = pneg %p44
        %p287 = pneg %p41
        %p288 = scmp.lt.s32.totalorder %s23, 1
        %s289 = scalar_select %p288, %s23, 1
        %s290 = smul.addr %s289, 8
        %s291 = scalar_lea.vmem %s1, %s290
        %p292 = pneg %p70
        %p293 = pneg %p67
        %p294 = pneg %p91
        %p295 = pneg %p88
        %p296 = pneg %p112
        %p297 = pneg %p109
        %p298 = pneg %p133
        %p299 = pneg %p130
        %p300 = pneg %p154
        %p301 = pneg %p151
        %p302 = pneg %p175
        %p303 = pneg %p172
        %p304 = pneg %p196
        %p305 = pneg %p193
        %p306 = pneg %p222
        %p307 = pneg %p219
        %s308 = sand.u32 %s209, 1
        %s309 = scalar_lea.sflag [#allocation4], %s308
        %s310 = sand.u32 %s209, 1
        %s311 = scalar_lea.vmem [#allocation3], %s310
        %p312 = scmp.lt.s32.totalorder %s23, 1
        %s313 = scalar_select %p312, %s23, 1
        %s314 = smul.addr %s313, 32
        %s315 = smul.addr %s314, 8
        %s316 = scalar_lea.vmem %s0, %s315
        %p317 = scmp.lt.s32.totalorder %s23, 1
        %s318 = scalar_select %p317, %s23, 1
        %s319 = smul.addr %s318, 8
        %s320 = scalar_lea.vmem %s1, %s319
        %v322 = vld [vmem:[%s316] sm:$0xff]
        %v323 = vld [vmem:[%s316 + $0x8] sm:$0xff]
        %v324 = vld [vmem:[%s316 + $0x10] sm:$0xff]
        %v325 = vld [vmem:[%s316 + $0x18] sm:$0xff]
        %v326 = vld [vmem:[%s316 + $0x20] sm:$0xff]
        %v327 = vld [vmem:[%s316 + $0x28] sm:$0xff]
        %v328 = vld [vmem:[%s316 + $0x30] sm:$0xff]
        %v329 = vld [vmem:[%s316 + $0x38] sm:$0xff]
        %v330 = vld [vmem:[%s316 + $0x40] sm:$0xff]
        %v331 = vld [vmem:[%s316 + $0x48] sm:$0xff]
        %v332 = vld [vmem:[%s316 + $0x50] sm:$0xff]
        %v333 = vld [vmem:[%s316 + $0x58] sm:$0xff]
        %v334 = vld [vmem:[%s316 + $0x60] sm:$0xff]
        %v335 = vld [vmem:[%s316 + $0x68] sm:$0xff]
        %v336 = vld [vmem:[%s316 + $0x70] sm:$0xff]
        %v337 = vld [vmem:[%s316 + $0x78] sm:$0xff]
        %v338 = vld [vmem:[%s316 + $0x80] sm:$0xff]
        %v339 = vld [vmem:[%s316 + $0x88] sm:$0xff]
        %v340 = vld [vmem:[%s316 + $0x90] sm:$0xff]
        %v341 = vld [vmem:[%s316 + $0x98] sm:$0xff]
        %v342 = vld [vmem:[%s316 + $0xa0] sm:$0xff]
        %v343 = vld [vmem:[%s316 + $0xa8] sm:$0xff]
        %v344 = vld [vmem:[%s316 + $0xb0] sm:$0xff]
        %v345 = vld [vmem:[%s316 + $0xb8] sm:$0xff]
        %v346 = vld [vmem:[%s316 + $0xc0] sm:$0xff]
        %v347 = vld [vmem:[%s316 + $0xc8] sm:$0xff]
        %v348 = vld [vmem:[%s316 + $0xd0] sm:$0xff]
        %v349 = vld [vmem:[%s316 + $0xd8] sm:$0xff]
        %v350 = vld [vmem:[%s316 + $0xe0] sm:$0xff]
        %v351 = vld [vmem:[%s316 + $0xe8] sm:$0xff]
        %v352 = vld [vmem:[%s316 + $0xf0] sm:$0xff]
        %v353 = vld [vmem:[%s316 + $0xf8] sm:$0xff]
        %v354 = vld [vmem:[%s2] sm:$0xff]
        %v355 = vld [vmem:[%s2 + $0x8] sm:$0xff]
        %v356 = vld [vmem:[%s2 + $0x10] sm:$0xff]
        %v357 = vld [vmem:[%s2 + $0x18] sm:$0xff]
        %v358 = vld [vmem:[%s2 + $0x20] sm:$0xff]
        %v359 = vld [vmem:[%s2 + $0x28] sm:$0xff]
        %v360 = vld [vmem:[%s2 + $0x30] sm:$0xff]
        %v361 = vld [vmem:[%s2 + $0x38] sm:$0xff]
        %v362 = vld [vmem:[%s2 + $0x40] sm:$0xff]
        %v363 = vld [vmem:[%s2 + $0x48] sm:$0xff]
        %v364 = vld [vmem:[%s2 + $0x50] sm:$0xff]
        %v365 = vld [vmem:[%s3] sm:$0xff]
        %v366 = vld [vmem:[%s3 + $0x8] sm:$0xff]
        %v367 = vld [vmem:[%s3 + $0x10] sm:$0xff]
        %v368 = vld [vmem:[%s3 + $0x18] sm:$0xff]
        %v369 = vld [vmem:[%s3 + $0x20] sm:$0xff]
        %v370 = vld [vmem:[%s3 + $0x28] sm:$0xff]
        %v371 = vld [vmem:[%s3 + $0x30] sm:$0xff]
        %v372 = vld [vmem:[%s3 + $0x38] sm:$0xff]
        %v373 = vld [vmem:[%s3 + $0x40] sm:$0xff]
        %v374 = vld [vmem:[%s3 + $0x48] sm:$0xff]
        %v375 = vld [vmem:[%s3 + $0x50] sm:$0xff]
        %377 = vset.pattern.permute.xlu0 0
        %378 = vperm.xlu0 %377, %v365
        %v379 = vpop.permute.xlu0 %378
        %382 = vset.pattern.permute.xlu0 0
        %383 = vperm.xlu0 %382, %v366
        %v384 = vpop.permute.xlu0 %383
        %387 = vset.pattern.permute.xlu0 0
        %388 = vperm.xlu0 %387, %v367
        %v389 = vpop.permute.xlu0 %388
        %392 = vset.pattern.permute.xlu0 0
        %393 = vperm.xlu0 %392, %v368
        %v394 = vpop.permute.xlu0 %393
        %397 = vset.pattern.permute.xlu0 0
        %398 = vperm.xlu0 %397, %v369
        %v399 = vpop.permute.xlu0 %398
        %402 = vset.pattern.permute.xlu0 0
        %403 = vperm.xlu0 %402, %v370
        %v404 = vpop.permute.xlu0 %403
        %407 = vset.pattern.permute.xlu0 0
        %408 = vperm.xlu0 %407, %v371
        %v409 = vpop.permute.xlu0 %408
        %412 = vset.pattern.permute.xlu0 0
        %413 = vperm.xlu0 %412, %v372
        %v414 = vpop.permute.xlu0 %413
        %417 = vset.pattern.permute.xlu0 0
        %418 = vperm.xlu0 %417, %v373
        %v419 = vpop.permute.xlu0 %418
        %422 = vset.pattern.permute.xlu0 0
        %423 = vperm.xlu0 %422, %v374
        %v424 = vpop.permute.xlu0 %423
        %427 = vset.pattern.permute.xlu0 0
        %428 = vperm.xlu0 %427, %v375
        %v429 = vpop.permute.xlu0 %428
        %vm431 = vcmask 523264
        %v433 = vsel %vm431, %v354, 0
        %v436 = vsel %vm431, %v355, 0
        %v439 = vsel %vm431, %v356, 0
        %v442 = vsel %vm431, %v357, 0
        %v445 = vsel %vm431, %v358, 0
        %v448 = vsel %vm431, %v359, 0
        %v451 = vsel %vm431, %v360, 0
        %v454 = vsel %vm431, %v361, 0
        %v457 = vsel %vm431, %v362, 0
        %v460 = vsel %vm431, %v363, 0
        %v463 = vsel %vm431, %v364, 0
        %465 = vmatpush.msra.mxu0 0.0
        %466 = vmatpush.msra.mxu0 0.0
        %467 = vmatpush.msra.mxu0 0.0
        %468 = vmatpush.msra.mxu0 0.0
        %469 = vmatpush.msra.mxu0 0.0
        %470 = vmatpush.msra.mxu0 0.0
        %471 = vmatpush.msra.mxu0 0.0
        %472 = vmatpush.msra.mxu0 0.0
        %473 = vmatpush.msra.mxu0 %v350
        %474 = vmatpush.msra.mxu0 %v346
        %475 = vmatpush.msra.mxu0 %v342
        %476 = vmatpush.msra.mxu0 %v338
        %477 = vmatpush.msra.mxu0 %v334
        %478 = vmatpush.msra.mxu0 %v330
        %479 = vmatpush.msra.mxu0 %v326
        %480 = vmatpush.msra.mxu0 %v322
        %481 = vmatmul.f32.gmra.mxu0 %v433
        %v482 = vpop.f32.mrf.mxu0
        %v483 = vadd.f32 %v379, %v482
        %484 = vmatmul.f32.gmra.mxu0 %v436
        %v485 = vpop.f32.mrf.mxu0
        %v486 = vadd.f32 %v384, %v485
        %487 = vmatmul.f32.gmra.mxu0 %v439
        %v488 = vpop.f32.mrf.mxu0
        %v489 = vadd.f32 %v389, %v488
        %490 = vmatmul.f32.gmra.mxu0 %v442
        %v491 = vpop.f32.mrf.mxu0
        %v492 = vadd.f32 %v394, %v491
        %493 = vmatmul.f32.gmra.mxu0 %v445
        %v494 = vpop.f32.mrf.mxu0
        %v495 = vadd.f32 %v399, %v494
        %496 = vmatmul.f32.gmra.mxu0 %v448
        %v497 = vpop.f32.mrf.mxu0
        %v498 = vadd.f32 %v404, %v497
        %499 = vmatmul.f32.gmra.mxu0 %v451
        %v500 = vpop.f32.mrf.mxu0
        %v501 = vadd.f32 %v409, %v500
        %502 = vmatmul.f32.gmra.mxu0 %v454
        %v503 = vpop.f32.mrf.mxu0
        %v504 = vadd.f32 %v414, %v503
        %505 = vmatmul.f32.gmra.mxu0 %v457
        %v506 = vpop.f32.mrf.mxu0
        %v507 = vadd.f32 %v419, %v506
        %508 = vmatmul.f32.gmra.mxu0 %v460
        %v509 = vpop.f32.mrf.mxu0
        %v510 = vadd.f32 %v424, %v509
        %511 = vmatmul.f32.gmra.mxu0 %v463
        %v512 = vpop.f32.mrf.mxu0
        %v513 = vadd.f32 %v429, %v512
        %514 = vdwg.mxu0
        %515 = vmatpush.msra.mxu0 0.0
        %516 = vmatpush.msra.mxu0 0.0
        %517 = vmatpush.msra.mxu0 0.0
        %518 = vmatpush.msra.mxu0 0.0
        %519 = vmatpush.msra.mxu0 0.0
        %520 = vmatpush.msra.mxu0 0.0
        %521 = vmatpush.msra.mxu0 0.0
        %522 = vmatpush.msra.mxu0 0.0
        %523 = vmatpush.msra.mxu0 %v351
        %524 = vmatpush.msra.mxu0 %v347
        %525 = vmatpush.msra.mxu0 %v343
        %526 = vmatpush.msra.mxu0 %v339
        %527 = vmatpush.msra.mxu0 %v335
        %528 = vmatpush.msra.mxu0 %v331
        %529 = vmatpush.msra.mxu0 %v327
        %530 = vmatpush.msra.mxu0 %v323
        %531 = vmatmul.f32.gmra.mxu0 %v433
        %v532 = vpop.f32.mrf.mxu0
        %v533 = vadd.f32 %v379, %v532
        %534 = vmatmul.f32.gmra.mxu0 %v436
        %v535 = vpop.f32.mrf.mxu0
        %v536 = vadd.f32 %v384, %v535
        %537 = vmatmul.f32.gmra.mxu0 %v439
        %v538 = vpop.f32.mrf.mxu0
        %v539 = vadd.f32 %v389, %v538
        %540 = vmatmul.f32.gmra.mxu0 %v442
        %v541 = vpop.f32.mrf.mxu0
        %v542 = vadd.f32 %v394, %v541
        %543 = vmatmul.f32.gmra.mxu0 %v445
        %v544 = vpop.f32.mrf.mxu0
        %v545 = vadd.f32 %v399, %v544
        %546 = vmatmul.f32.gmra.mxu0 %v448
        %v547 = vpop.f32.mrf.mxu0
        %v548 = vadd.f32 %v404, %v547
        %549 = vmatmul.f32.gmra.mxu0 %v451
        %v550 = vpop.f32.mrf.mxu0
        %v551 = vadd.f32 %v409, %v550
        %552 = vmatmul.f32.gmra.mxu0 %v454
        %v553 = vpop.f32.mrf.mxu0
        %v554 = vadd.f32 %v414, %v553
        %555 = vmatmul.f32.gmra.mxu0 %v457
        %v556 = vpop.f32.mrf.mxu0
        %v557 = vadd.f32 %v419, %v556
        %558 = vmatmul.f32.gmra.mxu0 %v460
        %v559 = vpop.f32.mrf.mxu0
        %v560 = vadd.f32 %v424, %v559
        %561 = vmatmul.f32.gmra.mxu0 %v463
        %v562 = vpop.f32.mrf.mxu0
        %v563 = vadd.f32 %v429, %v562
        %564 = vdwg.mxu0
        %565 = vmatpush.msra.mxu0 0.0
        %566 = vmatpush.msra.mxu0 0.0
        %567 = vmatpush.msra.mxu0 0.0
        %568 = vmatpush.msra.mxu0 0.0
        %569 = vmatpush.msra.mxu0 0.0
        %570 = vmatpush.msra.mxu0 0.0
        %571 = vmatpush.msra.mxu0 0.0
        %572 = vmatpush.msra.mxu0 0.0
        %573 = vmatpush.msra.mxu0 %v352
        %574 = vmatpush.msra.mxu0 %v348
        %575 = vmatpush.msra.mxu0 %v344
        %576 = vmatpush.msra.mxu0 %v340
        %577 = vmatpush.msra.mxu0 %v336
        %578 = vmatpush.msra.mxu0 %v332
        %579 = vmatpush.msra.mxu0 %v328
        %580 = vmatpush.msra.mxu0 %v324
        %581 = vmatmul.f32.gmra.mxu0 %v433
        %v582 = vpop.f32.mrf.mxu0
        %v583 = vadd.f32 %v379, %v582
        %584 = vmatmul.f32.gmra.mxu0 %v436
        %v585 = vpop.f32.mrf.mxu0
        %v586 = vadd.f32 %v384, %v585
        %587 = vmatmul.f32.gmra.mxu0 %v439
        %v588 = vpop.f32.mrf.mxu0
        %v589 = vadd.f32 %v389, %v588
        %590 = vmatmul.f32.gmra.mxu0 %v442
        %v591 = vpop.f32.mrf.mxu0
        %v592 = vadd.f32 %v394, %v591
        %593 = vmatmul.f32.gmra.mxu0 %v445
        %v594 = vpop.f32.mrf.mxu0
        %v595 = vadd.f32 %v399, %v594
        %596 = vmatmul.f32.gmra.mxu0 %v448
        %v597 = vpop.f32.mrf.mxu0
        %v598 = vadd.f32 %v404, %v597
        %599 = vmatmul.f32.gmra.mxu0 %v451
        %v600 = vpop.f32.mrf.mxu0
        %v601 = vadd.f32 %v409, %v600
        %602 = vmatmul.f32.gmra.mxu0 %v454
        %v603 = vpop.f32.mrf.mxu0
        %v604 = vadd.f32 %v414, %v603
        %605 = vmatmul.f32.gmra.mxu0 %v457
        %v606 = vpop.f32.mrf.mxu0
        %v607 = vadd.f32 %v419, %v606
        %608 = vmatmul.f32.gmra.mxu0 %v460
        %v609 = vpop.f32.mrf.mxu0
        %v610 = vadd.f32 %v424, %v609
        %611 = vmatmul.f32.gmra.mxu0 %v463
        %v612 = vpop.f32.mrf.mxu0
        %v613 = vadd.f32 %v429, %v612
        %614 = vdwg.mxu0
        %615 = vmatpush.msra.mxu0 0.0
        %616 = vmatpush.msra.mxu0 0.0
        %617 = vmatpush.msra.mxu0 0.0
        %618 = vmatpush.msra.mxu0 0.0
        %619 = vmatpush.msra.mxu0 0.0
        %620 = vmatpush.msra.mxu0 0.0
        %621 = vmatpush.msra.mxu0 0.0
        %622 = vmatpush.msra.mxu0 0.0
        %623 = vmatpush.msra.mxu0 %v353
        %624 = vmatpush.msra.mxu0 %v349
        %625 = vmatpush.msra.mxu0 %v345
        %626 = vmatpush.msra.mxu0 %v341
        %627 = vmatpush.msra.mxu0 %v337
        %628 = vmatpush.msra.mxu0 %v333
        %629 = vmatpush.msra.mxu0 %v329
        %630 = vmatpush.msra.mxu0 %v325
        %631 = vmatmul.f32.gmra.mxu0 %v433
        %v632 = vpop.f32.mrf.mxu0
        %v633 = vadd.f32 %v379, %v632
        %634 = vmatmul.f32.gmra.mxu0 %v436
        %v635 = vpop.f32.mrf.mxu0
        %v636 = vadd.f32 %v384, %v635
        %637 = vmatmul.f32.gmra.mxu0 %v439
        %v638 = vpop.f32.mrf.mxu0
        %v639 = vadd.f32 %v389, %v638
        %640 = vmatmul.f32.gmra.mxu0 %v442
        %v641 = vpop.f32.mrf.mxu0
        %v642 = vadd.f32 %v394, %v641
        %643 = vmatmul.f32.gmra.mxu0 %v445
        %v644 = vpop.f32.mrf.mxu0
        %v645 = vadd.f32 %v399, %v644
        %646 = vmatmul.f32.gmra.mxu0 %v448
        %v647 = vpop.f32.mrf.mxu0
        %v648 = vadd.f32 %v404, %v647
        %649 = vmatmul.f32.gmra.mxu0 %v451
        %v650 = vpop.f32.mrf.mxu0
        %v651 = vadd.f32 %v409, %v650
        %652 = vmatmul.f32.gmra.mxu0 %v454
        %v653 = vpop.f32.mrf.mxu0
        %v654 = vadd.f32 %v414, %v653
        %655 = vmatmul.f32.gmra.mxu0 %v457
        %v656 = vpop.f32.mrf.mxu0
        %v657 = vadd.f32 %v419, %v656
        %658 = vmatmul.f32.gmra.mxu0 %v460
        %v659 = vpop.f32.mrf.mxu0
        %v660 = vadd.f32 %v424, %v659
        %661 = vmatmul.f32.gmra.mxu0 %v463
        %v662 = vpop.f32.mrf.mxu0
        %v663 = vadd.f32 %v429, %v662
        %664 = vdwg.mxu0
        %v665 = vpack.c.bf16 %v483, %v483
        %v666 = vpack.c.bf16 %v533, %v533
        %v667 = vpack.c.bf16 %v583, %v583
        %v668 = vpack.c.bf16 %v633, %v633
        %v669 = vpack.c.bf16 %v486, %v486
        %v670 = vpack.c.bf16 %v536, %v536
        %v671 = vpack.c.bf16 %v586, %v586
        %v672 = vpack.c.bf16 %v636, %v636
        %v673 = vpack.c.bf16 %v492, %v489
        %v674 = vpack.c.bf16 %v542, %v539
        %v675 = vpack.c.bf16 %v592, %v589
        %v676 = vpack.c.bf16 %v642, %v639
        %v677 = vpack.c.bf16 %v498, %v495
        %v678 = vpack.c.bf16 %v548, %v545
        %v679 = vpack.c.bf16 %v598, %v595
        %v680 = vpack.c.bf16 %v648, %v645
        %v681 = vpack.c.bf16 %v504, %v501
        %v682 = vpack.c.bf16 %v554, %v551
        %v683 = vpack.c.bf16 %v604, %v601
        %v684 = vpack.c.bf16 %v654, %v651
        %v685 = vpack.c.bf16 %v510, %v507
        %v686 = vpack.c.bf16 %v560, %v557
        %v687 = vpack.c.bf16 %v610, %v607
        %v688 = vpack.c.bf16 %v660, %v657
        %v689 = vpack.c.bf16 %v513, %v513
        %v690 = vpack.c.bf16 %v563, %v563
        %v691 = vpack.c.bf16 %v613, %v613
        %v692 = vpack.c.bf16 %v663, %v663
        %693 = vxpose.binary.xlu0.c.b16.start [1/16] %v666, %v665, 128
        %694 = vxpose.binary.xlu0.c.b16.cont [2/16] 0, 0, 128
        %695 = vxpose.binary.xlu0.c.b16.cont [3/16] 0, 0, 128
        %696 = vxpose.binary.xlu0.c.b16.cont [4/16] 0, 0, 128
        %697 = vxpose.binary.xlu0.c.b16.cont [5/16] 0, 0, 128
        %698 = vxpose.binary.xlu0.c.b16.cont [6/16] 0, 0, 128
        %699 = vxpose.binary.xlu0.c.b16.cont [7/16] 0, 0, 128
        %700 = vxpose.binary.xlu0.c.b16.end [8/16] 0, 0, 128
        %v701 = vpop.trf.xlu0
        %v702 = vpop.trf.xlu0
        %v703 = vpop.trf.xlu0
        %v704 = vpop.trf.xlu0
        %v705 = vpop.trf.xlu0
        %v706 = vpop.trf.xlu0
        %v707 = vpop.trf.xlu0
        %v708 = vpop.trf.xlu0
        %v709 = vpop.trf.xlu0
        %v710 = vpop.trf.xlu0
        %v711 = vpop.trf.xlu0
        %v712 = vpop.trf.xlu0
        %v713 = vpop.trf.xlu0
        %v714 = vpop.trf.xlu0
        %v715 = vpop.trf.xlu0
        %v716 = vpop.trf.xlu0
        %717 = vxpose.binary.xlu0.c.b16.start [1/16] %v668, %v667, 128
        %718 = vxpose.binary.xlu0.c.b16.cont [2/16] 0, 0, 128
        %719 = vxpose.binary.xlu0.c.b16.cont [3/16] 0, 0, 128
        %720 = vxpose.binary.xlu0.c.b16.cont [4/16] 0, 0, 128
        %721 = vxpose.binary.xlu0.c.b16.cont [5/16] 0, 0, 128
        %722 = vxpose.binary.xlu0.c.b16.cont [6/16] 0, 0, 128
        %723 = vxpose.binary.xlu0.c.b16.cont [7/16] 0, 0, 128
        %724 = vxpose.binary.xlu0.c.b16.end [8/16] 0, 0, 128
        %v725 = vpop.trf.xlu0
        %v726 = vpop.trf.xlu0
        %v727 = vpop.trf.xlu0
        %v728 = vpop.trf.xlu0
        %v729 = vpop.trf.xlu0
        %v730 = vpop.trf.xlu0
        %v731 = vpop.trf.xlu0
        %v732 = vpop.trf.xlu0
        %v733 = vpop.trf.xlu0
        %v734 = vpop.trf.xlu0
        %v735 = vpop.trf.xlu0
        %v736 = vpop.trf.xlu0
        %v737 = vpop.trf.xlu0
        %v738 = vpop.trf.xlu0
        %v739 = vpop.trf.xlu0
        %v740 = vpop.trf.xlu0
        %vm741 = vcmask 64512
        %v743 = vsel %vm741, %v701, 0
        %v746 = vsel %vm741, %v703, 0
        %v749 = vsel %vm741, %v705, 0
        %v752 = vsel %vm741, %v707, 0
        %v755 = vsel %vm741, %v709, 0
        %v758 = vsel %vm741, %v711, 0
        %v761 = vsel %vm741, %v713, 0
        %v764 = vsel %vm741, %v715, 0
        %v767 = vsel %vm741, %v702, 0
        %v770 = vsel %vm741, %v704, 0
        %v773 = vsel %vm741, %v706, 0
        %v776 = vsel %vm741, %v708, 0
        %v779 = vsel %vm741, %v710, 0
        %v782 = vsel %vm741, %v712, 0
        %v785 = vsel %vm741, %v714, 0
        %v788 = vsel %vm741, %v716, 0
        %v791 = vsel %vm741, %v725, 0
        %v794 = vsel %vm741, %v727, 0
        %v797 = vsel %vm741, %v729, 0
        %v800 = vsel %vm741, %v731, 0
        %v803 = vsel %vm741, %v733, 0
        %v806 = vsel %vm741, %v735, 0
        %v809 = vsel %vm741, %v737, 0
        %v812 = vsel %vm741, %v739, 0
        %v815 = vsel %vm741, %v726, 0
        %v818 = vsel %vm741, %v728, 0
        %v821 = vsel %vm741, %v730, 0
        %v824 = vsel %vm741, %v732, 0
        %v827 = vsel %vm741, %v734, 0
        %v830 = vsel %vm741, %v736, 0
        %v833 = vsel %vm741, %v738, 0
        %v836 = vsel %vm741, %v740, 0
        %vm838 = vcmask 1043456
        %v840 = vsel %vm838, %v669, 0
        %v843 = vsel %vm838, %v670, 0
        %v846 = vsel %vm838, %v671, 0
        %v849 = vsel %vm838, %v672, 0
        %851 = vmatpush.bf16.msra.mxu0 0
        %852 = vmatpush.bf16.msra.mxu0 0
        %853 = vmatpush.bf16.msra.mxu0 0
        %854 = vmatpush.bf16.msra.mxu0 0
        %855 = vmatpush.bf16.msra.mxu0 0
        %856 = vmatpush.bf16.msra.mxu0 0
        %857 = vmatpush.bf16.msra.mxu0 0
        %858 = vmatpush.bf16.msra.mxu0 %v840
        %859 = vmatmul.bf16.gmra.mxu0 %v743
        %v860 = vpop.f32.mrf.mxu0
        %v861 = vadd.f32 0.0, %v860
        %v862 = vpop.f32.mrf.mxu0
        %v863 = vadd.f32 0.0, %v862
        %864 = vmatmul.bf16.gmra.mxu0 %v746
        %v865 = vpop.f32.mrf.mxu0
        %v866 = vadd.f32 0.0, %v865
        %v867 = vpop.f32.mrf.mxu0
        %v868 = vadd.f32 0.0, %v867
        %869 = vmatmul.bf16.gmra.mxu0 %v749
        %v870 = vpop.f32.mrf.mxu0
        %v871 = vadd.f32 0.0, %v870
        %v872 = vpop.f32.mrf.mxu0
        %v873 = vadd.f32 0.0, %v872
        %874 = vmatmul.bf16.gmra.mxu0 %v752
        %v875 = vpop.f32.mrf.mxu0
        %v876 = vadd.f32 0.0, %v875
        %v877 = vpop.f32.mrf.mxu0
        %v878 = vadd.f32 0.0, %v877
        %879 = vmatmul.bf16.gmra.mxu0 %v755
        %v880 = vpop.f32.mrf.mxu0
        %v881 = vadd.f32 0.0, %v880
        %v882 = vpop.f32.mrf.mxu0
        %v883 = vadd.f32 0.0, %v882
        %884 = vmatmul.bf16.gmra.mxu0 %v758
        %v885 = vpop.f32.mrf.mxu0
        %v886 = vadd.f32 0.0, %v885
        %v887 = vpop.f32.mrf.mxu0
        %v888 = vadd.f32 0.0, %v887
        %889 = vmatmul.bf16.gmra.mxu0 %v761
        %v890 = vpop.f32.mrf.mxu0
        %v891 = vadd.f32 0.0, %v890
        %v892 = vpop.f32.mrf.mxu0
        %v893 = vadd.f32 0.0, %v892
        %894 = vmatmul.bf16.gmra.mxu0 %v764
        %v895 = vpop.f32.mrf.mxu0
        %v896 = vadd.f32 0.0, %v895
        %v897 = vpop.f32.mrf.mxu0
        %v898 = vadd.f32 0.0, %v897
        %899 = vmatmul.bf16.gmra.mxu0 %v767
        %v900 = vpop.f32.mrf.mxu0
        %v901 = vadd.f32 0.0, %v900
        %v902 = vpop.f32.mrf.mxu0
        %v903 = vadd.f32 0.0, %v902
        %904 = vmatmul.bf16.gmra.mxu0 %v770
        %v905 = vpop.f32.mrf.mxu0
        %v906 = vadd.f32 0.0, %v905
        %v907 = vpop.f32.mrf.mxu0
        %v908 = vadd.f32 0.0, %v907
        %909 = vmatmul.bf16.gmra.mxu0 %v773
        %v910 = vpop.f32.mrf.mxu0
        %v911 = vadd.f32 0.0, %v910
        %v912 = vpop.f32.mrf.mxu0
        %v913 = vadd.f32 0.0, %v912
        %914 = vmatmul.bf16.gmra.mxu0 %v776
        %v915 = vpop.f32.mrf.mxu0
        %v916 = vadd.f32 0.0, %v915
        %v917 = vpop.f32.mrf.mxu0
        %v918 = vadd.f32 0.0, %v917
        %919 = vmatmul.bf16.gmra.mxu0 %v779
        %v920 = vpop.f32.mrf.mxu0
        %v921 = vadd.f32 0.0, %v920
        %v922 = vpop.f32.mrf.mxu0
        %v923 = vadd.f32 0.0, %v922
        %924 = vmatmul.bf16.gmra.mxu0 %v782
        %v925 = vpop.f32.mrf.mxu0
        %v926 = vadd.f32 0.0, %v925
        %v927 = vpop.f32.mrf.mxu0
        %v928 = vadd.f32 0.0, %v927
        %929 = vmatmul.bf16.gmra.mxu0 %v785
        %v930 = vpop.f32.mrf.mxu0
        %v931 = vadd.f32 0.0, %v930
        %v932 = vpop.f32.mrf.mxu0
        %v933 = vadd.f32 0.0, %v932
        %934 = vmatmul.bf16.gmra.mxu0 %v788
        %v935 = vpop.f32.mrf.mxu0
        %v936 = vadd.f32 0.0, %v935
        %v937 = vpop.f32.mrf.mxu0
        %v938 = vadd.f32 0.0, %v937
        %939 = vmatmul.bf16.gmra.mxu0 %v791
        %v940 = vpop.f32.mrf.mxu0
        %v941 = vadd.f32 0.0, %v940
        %v942 = vpop.f32.mrf.mxu0
        %v943 = vadd.f32 0.0, %v942
        %944 = vmatmul.bf16.gmra.mxu0 %v794
        %v945 = vpop.f32.mrf.mxu0
        %v946 = vadd.f32 0.0, %v945
        %v947 = vpop.f32.mrf.mxu0
        %v948 = vadd.f32 0.0, %v947
        %949 = vmatmul.bf16.gmra.mxu0 %v797
        %v950 = vpop.f32.mrf.mxu0
        %v951 = vadd.f32 0.0, %v950
        %v952 = vpop.f32.mrf.mxu0
        %v953 = vadd.f32 0.0, %v952
        %954 = vmatmul.bf16.gmra.mxu0 %v800
        %v955 = vpop.f32.mrf.mxu0
        %v956 = vadd.f32 0.0, %v955
        %v957 = vpop.f32.mrf.mxu0
        %v958 = vadd.f32 0.0, %v957
        %959 = vmatmul.bf16.gmra.mxu0 %v803
        %v960 = vpop.f32.mrf.mxu0
        %v961 = vadd.f32 0.0, %v960
        %v962 = vpop.f32.mrf.mxu0
        %v963 = vadd.f32 0.0, %v962
        %964 = vmatmul.bf16.gmra.mxu0 %v806
        %v965 = vpop.f32.mrf.mxu0
        %v966 = vadd.f32 0.0, %v965
        %v967 = vpop.f32.mrf.mxu0
        %v968 = vadd.f32 0.0, %v967
        %969 = vmatmul.bf16.gmra.mxu0 %v809
        %v970 = vpop.f32.mrf.mxu0
        %v971 = vadd.f32 0.0, %v970
        %v972 = vpop.f32.mrf.mxu0
        %v973 = vadd.f32 0.0, %v972
        %974 = vmatmul.bf16.gmra.mxu0 %v812
        %v975 = vpop.f32.mrf.mxu0
        %v976 = vadd.f32 0.0, %v975
        %v977 = vpop.f32.mrf.mxu0
        %v978 = vadd.f32 0.0, %v977
        %979 = vmatmul.bf16.gmra.mxu0 %v815
        %v980 = vpop.f32.mrf.mxu0
        %v981 = vadd.f32 0.0, %v980
        %v982 = vpop.f32.mrf.mxu0
        %v983 = vadd.f32 0.0, %v982
        %984 = vmatmul.bf16.gmra.mxu0 %v818
        %v985 = vpop.f32.mrf.mxu0
        %v986 = vadd.f32 0.0, %v985
        %v987 = vpop.f32.mrf.mxu0
        %v988 = vadd.f32 0.0, %v987
        %989 = vmatmul.bf16.gmra.mxu0 %v821
        %v990 = vpop.f32.mrf.mxu0
        %v991 = vadd.f32 0.0, %v990
        %v992 = vpop.f32.mrf.mxu0
        %v993 = vadd.f32 0.0, %v992
        %994 = vmatmul.bf16.gmra.mxu0 %v824
        %v995 = vpop.f32.mrf.mxu0
        %v996 = vadd.f32 0.0, %v995
        %v997 = vpop.f32.mrf.mxu0
        %v998 = vadd.f32 0.0, %v997
        %999 = vmatmul.bf16.gmra.mxu0 %v827
        %v1000 = vpop.f32.mrf.mxu0
        %v1001 = vadd.f32 0.0, %v1000
        %v1002 = vpop.f32.mrf.mxu0
        %v1003 = vadd.f32 0.0, %v1002
        %1004 = vmatmul.bf16.gmra.mxu0 %v830
        %v1005 = vpop.f32.mrf.mxu0
        %v1006 = vadd.f32 0.0, %v1005
        %v1007 = vpop.f32.mrf.mxu0
        %v1008 = vadd.f32 0.0, %v1007
        %1009 = vmatmul.bf16.gmra.mxu0 %v833
        %v1010 = vpop.f32.mrf.mxu0
        %v1011 = vadd.f32 0.0, %v1010
        %v1012 = vpop.f32.mrf.mxu0
        %v1013 = vadd.f32 0.0, %v1012
        %1014 = vmatmul.bf16.gmra.mxu0 %v836
        %v1015 = vpop.f32.mrf.mxu0
        %v1016 = vadd.f32 0.0, %v1015
        %v1017 = vpop.f32.mrf.mxu0
        %v1018 = vadd.f32 0.0, %v1017
        %1019 = vdwg.mxu0
        %1020 = vmatpush.bf16.msra.mxu0 0
        %1021 = vmatpush.bf16.msra.mxu0 0
        %1022 = vmatpush.bf16.msra.mxu0 0
        %1023 = vmatpush.bf16.msra.mxu0 0
        %1024 = vmatpush.bf16.msra.mxu0 0
        %1025 = vmatpush.bf16.msra.mxu0 0
        %1026 = vmatpush.bf16.msra.mxu0 0
        %1027 = vmatpush.bf16.msra.mxu0 %v843
        %1028 = vmatmul.bf16.gmra.mxu0 %v743
        %v1029 = vpop.f32.mrf.mxu0
        %v1030 = vadd.f32 0.0, %v1029
        %v1031 = vpop.f32.mrf.mxu0
        %v1032 = vadd.f32 0.0, %v1031
        %1033 = vmatmul.bf16.gmra.mxu0 %v746
        %v1034 = vpop.f32.mrf.mxu0
        %v1035 = vadd.f32 0.0, %v1034
        %v1036 = vpop.f32.mrf.mxu0
        %v1037 = vadd.f32 0.0, %v1036
        %1038 = vmatmul.bf16.gmra.mxu0 %v749
        %v1039 = vpop.f32.mrf.mxu0
        %v1040 = vadd.f32 0.0, %v1039
        %v1041 = vpop.f32.mrf.mxu0
        %v1042 = vadd.f32 0.0, %v1041
        %1043 = vmatmul.bf16.gmra.mxu0 %v752
        %v1044 = vpop.f32.mrf.mxu0
        %v1045 = vadd.f32 0.0, %v1044
        %v1046 = vpop.f32.mrf.mxu0
        %v1047 = vadd.f32 0.0, %v1046
        %1048 = vmatmul.bf16.gmra.mxu0 %v755
        %v1049 = vpop.f32.mrf.mxu0
        %v1050 = vadd.f32 0.0, %v1049
        %v1051 = vpop.f32.mrf.mxu0
        %v1052 = vadd.f32 0.0, %v1051
        %1053 = vmatmul.bf16.gmra.mxu0 %v758
        %v1054 = vpop.f32.mrf.mxu0
        %v1055 = vadd.f32 0.0, %v1054
        %v1056 = vpop.f32.mrf.mxu0
        %v1057 = vadd.f32 0.0, %v1056
        %1058 = vmatmul.bf16.gmra.mxu0 %v761
        %v1059 = vpop.f32.mrf.mxu0
        %v1060 = vadd.f32 0.0, %v1059
        %v1061 = vpop.f32.mrf.mxu0
        %v1062 = vadd.f32 0.0, %v1061
        %1063 = vmatmul.bf16.gmra.mxu0 %v764
        %v1064 = vpop.f32.mrf.mxu0
        %v1065 = vadd.f32 0.0, %v1064
        %v1066 = vpop.f32.mrf.mxu0
        %v1067 = vadd.f32 0.0, %v1066
        %1068 = vmatmul.bf16.gmra.mxu0 %v767
        %v1069 = vpop.f32.mrf.mxu0
        %v1070 = vadd.f32 0.0, %v1069
        %v1071 = vpop.f32.mrf.mxu0
        %v1072 = vadd.f32 0.0, %v1071
        %1073 = vmatmul.bf16.gmra.mxu0 %v770
        %v1074 = vpop.f32.mrf.mxu0
        %v1075 = vadd.f32 0.0, %v1074
        %v1076 = vpop.f32.mrf.mxu0
        %v1077 = vadd.f32 0.0, %v1076
        %1078 = vmatmul.bf16.gmra.mxu0 %v773
        %v1079 = vpop.f32.mrf.mxu0
        %v1080 = vadd.f32 0.0, %v1079
        %v1081 = vpop.f32.mrf.mxu0
        %v1082 = vadd.f32 0.0, %v1081
        %1083 = vmatmul.bf16.gmra.mxu0 %v776
        %v1084 = vpop.f32.mrf.mxu0
        %v1085 = vadd.f32 0.0, %v1084
        %v1086 = vpop.f32.mrf.mxu0
        %v1087 = vadd.f32 0.0, %v1086
        %1088 = vmatmul.bf16.gmra.mxu0 %v779
        %v1089 = vpop.f32.mrf.mxu0
        %v1090 = vadd.f32 0.0, %v1089
        %v1091 = vpop.f32.mrf.mxu0
        %v1092 = vadd.f32 0.0, %v1091
        %1093 = vmatmul.bf16.gmra.mxu0 %v782
        %v1094 = vpop.f32.mrf.mxu0
        %v1095 = vadd.f32 0.0, %v1094
        %v1096 = vpop.f32.mrf.mxu0
        %v1097 = vadd.f32 0.0, %v1096
        %1098 = vmatmul.bf16.gmra.mxu0 %v785
        %v1099 = vpop.f32.mrf.mxu0
        %v1100 = vadd.f32 0.0, %v1099
        %v1101 = vpop.f32.mrf.mxu0
        %v1102 = vadd.f32 0.0, %v1101
        %1103 = vmatmul.bf16.gmra.mxu0 %v788
        %v1104 = vpop.f32.mrf.mxu0
        %v1105 = vadd.f32 0.0, %v1104
        %v1106 = vpop.f32.mrf.mxu0
        %v1107 = vadd.f32 0.0, %v1106
        %1108 = vmatmul.bf16.gmra.mxu0 %v791
        %v1109 = vpop.f32.mrf.mxu0
        %v1110 = vadd.f32 0.0, %v1109
        %v1111 = vpop.f32.mrf.mxu0
        %v1112 = vadd.f32 0.0, %v1111
        %1113 = vmatmul.bf16.gmra.mxu0 %v794
        %v1114 = vpop.f32.mrf.mxu0
        %v1115 = vadd.f32 0.0, %v1114
        %v1116 = vpop.f32.mrf.mxu0
        %v1117 = vadd.f32 0.0, %v1116
        %1118 = vmatmul.bf16.gmra.mxu0 %v797
        %v1119 = vpop.f32.mrf.mxu0
        %v1120 = vadd.f32 0.0, %v1119
        %v1121 = vpop.f32.mrf.mxu0
        %v1122 = vadd.f32 0.0, %v1121
        %1123 = vmatmul.bf16.gmra.mxu0 %v800
        %v1124 = vpop.f32.mrf.mxu0
        %v1125 = vadd.f32 0.0, %v1124
        %v1126 = vpop.f32.mrf.mxu0
        %v1127 = vadd.f32 0.0, %v1126
        %1128 = vmatmul.bf16.gmra.mxu0 %v803
        %v1129 = vpop.f32.mrf.mxu0
        %v1130 = vadd.f32 0.0, %v1129
        %v1131 = vpop.f32.mrf.mxu0
        %v1132 = vadd.f32 0.0, %v1131
        %1133 = vmatmul.bf16.gmra.mxu0 %v806
        %v1134 = vpop.f32.mrf.mxu0
        %v1135 = vadd.f32 0.0, %v1134
        %v1136 = vpop.f32.mrf.mxu0
        %v1137 = vadd.f32 0.0, %v1136
        %1138 = vmatmul.bf16.gmra.mxu0 %v809
        %v1139 = vpop.f32.mrf.mxu0
        %v1140 = vadd.f32 0.0, %v1139
        %v1141 = vpop.f32.mrf.mxu0
        %v1142 = vadd.f32 0.0, %v1141
        %1143 = vmatmul.bf16.gmra.mxu0 %v812
        %v1144 = vpop.f32.mrf.mxu0
        %v1145 = vadd.f32 0.0, %v1144
        %v1146 = vpop.f32.mrf.mxu0
        %v1147 = vadd.f32 0.0, %v1146
        %1148 = vmatmul.bf16.gmra.mxu0 %v815
        %v1149 = vpop.f32.mrf.mxu0
        %v1150 = vadd.f32 0.0, %v1149
        %v1151 = vpop.f32.mrf.mxu0
        %v1152 = vadd.f32 0.0, %v1151
        %1153 = vmatmul.bf16.gmra.mxu0 %v818
        %v1154 = vpop.f32.mrf.mxu0
        %v1155 = vadd.f32 0.0, %v1154
        %v1156 = vpop.f32.mrf.mxu0
        %v1157 = vadd.f32 0.0, %v1156
        %1158 = vmatmul.bf16.gmra.mxu0 %v821
        %v1159 = vpop.f32.mrf.mxu0
        %v1160 = vadd.f32 0.0, %v1159
        %v1161 = vpop.f32.mrf.mxu0
        %v1162 = vadd.f32 0.0, %v1161
        %1163 = vmatmul.bf16.gmra.mxu0 %v824
        %v1164 = vpop.f32.mrf.mxu0
        %v1165 = vadd.f32 0.0, %v1164
        %v1166 = vpop.f32.mrf.mxu0
        %v1167 = vadd.f32 0.0, %v1166
        %1168 = vmatmul.bf16.gmra.mxu0 %v827
        %v1169 = vpop.f32.mrf.mxu0
        %v1170 = vadd.f32 0.0, %v1169
        %v1171 = vpop.f32.mrf.mxu0
        %v1172 = vadd.f32 0.0, %v1171
        %1173 = vmatmul.bf16.gmra.mxu0 %v830
        %v1174 = vpop.f32.mrf.mxu0
        %v1175 = vadd.f32 0.0, %v1174
        %v1176 = vpop.f32.mrf.mxu0
        %v1177 = vadd.f32 0.0, %v1176
        %1178 = vmatmul.bf16.gmra.mxu0 %v833
        %v1179 = vpop.f32.mrf.mxu0
        %v1180 = vadd.f32 0.0, %v1179
        %v1181 = vpop.f32.mrf.mxu0
        %v1182 = vadd.f32 0.0, %v1181
        %1183 = vmatmul.bf16.gmra.mxu0 %v836
        %v1184 = vpop.f32.mrf.mxu0
        %v1185 = vadd.f32 0.0, %v1184
        %v1186 = vpop.f32.mrf.mxu0
        %v1187 = vadd.f32 0.0, %v1186
        %1188 = vdwg.mxu0
        %1189 = vmatpush.bf16.msra.mxu0 0
        %1190 = vmatpush.bf16.msra.mxu0 0
        %1191 = vmatpush.bf16.msra.mxu0 0
        %1192 = vmatpush.bf16.msra.mxu0 0
        %1193 = vmatpush.bf16.msra.mxu0 0
        %1194 = vmatpush.bf16.msra.mxu0 0
        %1195 = vmatpush.bf16.msra.mxu0 0
        %1196 = vmatpush.bf16.msra.mxu0 %v846
        %1197 = vmatmul.bf16.gmra.mxu0 %v743
        %v1198 = vpop.f32.mrf.mxu0
        %v1199 = vadd.f32 0.0, %v1198
        %v1200 = vpop.f32.mrf.mxu0
        %v1201 = vadd.f32 0.0, %v1200
        %1202 = vmatmul.bf16.gmra.mxu0 %v746
        %v1203 = vpop.f32.mrf.mxu0
        %v1204 = vadd.f32 0.0, %v1203
        %v1205 = vpop.f32.mrf.mxu0
        %v1206 = vadd.f32 0.0, %v1205
        %1207 = vmatmul.bf16.gmra.mxu0 %v749
        %v1208 = vpop.f32.mrf.mxu0
        %v1209 = vadd.f32 0.0, %v1208
        %v1210 = vpop.f32.mrf.mxu0
        %v1211 = vadd.f32 0.0, %v1210
        %1212 = vmatmul.bf16.gmra.mxu0 %v752
        %v1213 = vpop.f32.mrf.mxu0
        %v1214 = vadd.f32 0.0, %v1213
        %v1215 = vpop.f32.mrf.mxu0
        %v1216 = vadd.f32 0.0, %v1215
        %1217 = vmatmul.bf16.gmra.mxu0 %v755
        %v1218 = vpop.f32.mrf.mxu0
        %v1219 = vadd.f32 0.0, %v1218
        %v1220 = vpop.f32.mrf.mxu0
        %v1221 = vadd.f32 0.0, %v1220
        %1222 = vmatmul.bf16.gmra.mxu0 %v758
        %v1223 = vpop.f32.mrf.mxu0
        %v1224 = vadd.f32 0.0, %v1223
        %v1225 = vpop.f32.mrf.mxu0
        %v1226 = vadd.f32 0.0, %v1225
        %1227 = vmatmul.bf16.gmra.mxu0 %v761
        %v1228 = vpop.f32.mrf.mxu0
        %v1229 = vadd.f32 0.0, %v1228
        %v1230 = vpop.f32.mrf.mxu0
        %v1231 = vadd.f32 0.0, %v1230
        %1232 = vmatmul.bf16.gmra.mxu0 %v764
        %v1233 = vpop.f32.mrf.mxu0
        %v1234 = vadd.f32 0.0, %v1233
        %v1235 = vpop.f32.mrf.mxu0
        %v1236 = vadd.f32 0.0, %v1235
        %1237 = vmatmul.bf16.gmra.mxu0 %v767
        %v1238 = vpop.f32.mrf.mxu0
        %v1239 = vadd.f32 0.0, %v1238
        %v1240 = vpop.f32.mrf.mxu0
        %v1241 = vadd.f32 0.0, %v1240
        %1242 = vmatmul.bf16.gmra.mxu0 %v770
        %v1243 = vpop.f32.mrf.mxu0
        %v1244 = vadd.f32 0.0, %v1243
        %v1245 = vpop.f32.mrf.mxu0
        %v1246 = vadd.f32 0.0, %v1245
        %1247 = vmatmul.bf16.gmra.mxu0 %v773
        %v1248 = vpop.f32.mrf.mxu0
        %v1249 = vadd.f32 0.0, %v1248
        %v1250 = vpop.f32.mrf.mxu0
        %v1251 = vadd.f32 0.0, %v1250
        %1252 = vmatmul.bf16.gmra.mxu0 %v776
        %v1253 = vpop.f32.mrf.mxu0
        %v1254 = vadd.f32 0.0, %v1253
        %v1255 = vpop.f32.mrf.mxu0
        %v1256 = vadd.f32 0.0, %v1255
        %1257 = vmatmul.bf16.gmra.mxu0 %v779
        %v1258 = vpop.f32.mrf.mxu0
        %v1259 = vadd.f32 0.0, %v1258
        %v1260 = vpop.f32.mrf.mxu0
        %v1261 = vadd.f32 0.0, %v1260
        %1262 = vmatmul.bf16.gmra.mxu0 %v782
        %v1263 = vpop.f32.mrf.mxu0
        %v1264 = vadd.f32 0.0, %v1263
        %v1265 = vpop.f32.mrf.mxu0
        %v1266 = vadd.f32 0.0, %v1265
        %1267 = vmatmul.bf16.gmra.mxu0 %v785
        %v1268 = vpop.f32.mrf.mxu0
        %v1269 = vadd.f32 0.0, %v1268
        %v1270 = vpop.f32.mrf.mxu0
        %v1271 = vadd.f32 0.0, %v1270
        %1272 = vmatmul.bf16.gmra.mxu0 %v788
        %v1273 = vpop.f32.mrf.mxu0
        %v1274 = vadd.f32 0.0, %v1273
        %v1275 = vpop.f32.mrf.mxu0
        %v1276 = vadd.f32 0.0, %v1275
        %1277 = vmatmul.bf16.gmra.mxu0 %v791
        %v1278 = vpop.f32.mrf.mxu0
        %v1279 = vadd.f32 0.0, %v1278
        %v1280 = vpop.f32.mrf.mxu0
        %v1281 = vadd.f32 0.0, %v1280
        %1282 = vmatmul.bf16.gmra.mxu0 %v794
        %v1283 = vpop.f32.mrf.mxu0
        %v1284 = vadd.f32 0.0, %v1283
        %v1285 = vpop.f32.mrf.mxu0
        %v1286 = vadd.f32 0.0, %v1285
        %1287 = vmatmul.bf16.gmra.mxu0 %v797
        %v1288 = vpop.f32.mrf.mxu0
        %v1289 = vadd.f32 0.0, %v1288
        %v1290 = vpop.f32.mrf.mxu0
        %v1291 = vadd.f32 0.0, %v1290
        %1292 = vmatmul.bf16.gmra.mxu0 %v800
        %v1293 = vpop.f32.mrf.mxu0
        %v1294 = vadd.f32 0.0, %v1293
        %v1295 = vpop.f32.mrf.mxu0
        %v1296 = vadd.f32 0.0, %v1295
        %1297 = vmatmul.bf16.gmra.mxu0 %v803
        %v1298 = vpop.f32.mrf.mxu0
        %v1299 = vadd.f32 0.0, %v1298
        %v1300 = vpop.f32.mrf.mxu0
        %v1301 = vadd.f32 0.0, %v1300
        %1302 = vmatmul.bf16.gmra.mxu0 %v806
        %v1303 = vpop.f32.mrf.mxu0
        %v1304 = vadd.f32 0.0, %v1303
        %v1305 = vpop.f32.mrf.mxu0
        %v1306 = vadd.f32 0.0, %v1305
        %1307 = vmatmul.bf16.gmra.mxu0 %v809
        %v1308 = vpop.f32.mrf.mxu0
        %v1309 = vadd.f32 0.0, %v1308
        %v1310 = vpop.f32.mrf.mxu0
        %v1311 = vadd.f32 0.0, %v1310
        %1312 = vmatmul.bf16.gmra.mxu0 %v812
        %v1313 = vpop.f32.mrf.mxu0
        %v1314 = vadd.f32 0.0, %v1313
        %v1315 = vpop.f32.mrf.mxu0
        %v1316 = vadd.f32 0.0, %v1315
        %1317 = vmatmul.bf16.gmra.mxu0 %v815
        %v1318 = vpop.f32.mrf.mxu0
        %v1319 = vadd.f32 0.0, %v1318
        %v1320 = vpop.f32.mrf.mxu0
        %v1321 = vadd.f32 0.0, %v1320
        %1322 = vmatmul.bf16.gmra.mxu0 %v818
        %v1323 = vpop.f32.mrf.mxu0
        %v1324 = vadd.f32 0.0, %v1323
        %v1325 = vpop.f32.mrf.mxu0
        %v1326 = vadd.f32 0.0, %v1325
        %1327 = vmatmul.bf16.gmra.mxu0 %v821
        %v1328 = vpop.f32.mrf.mxu0
        %v1329 = vadd.f32 0.0, %v1328
        %v1330 = vpop.f32.mrf.mxu0
        %v1331 = vadd.f32 0.0, %v1330
        %1332 = vmatmul.bf16.gmra.mxu0 %v824
        %v1333 = vpop.f32.mrf.mxu0
        %v1334 = vadd.f32 0.0, %v1333
        %v1335 = vpop.f32.mrf.mxu0
        %v1336 = vadd.f32 0.0, %v1335
        %1337 = vmatmul.bf16.gmra.mxu0 %v827
        %v1338 = vpop.f32.mrf.mxu0
        %v1339 = vadd.f32 0.0, %v1338
        %v1340 = vpop.f32.mrf.mxu0
        %v1341 = vadd.f32 0.0, %v1340
        %1342 = vmatmul.bf16.gmra.mxu0 %v830
        %v1343 = vpop.f32.mrf.mxu0
        %v1344 = vadd.f32 0.0, %v1343
        %v1345 = vpop.f32.mrf.mxu0
        %v1346 = vadd.f32 0.0, %v1345
        %1347 = vmatmul.bf16.gmra.mxu0 %v833
        %v1348 = vpop.f32.mrf.mxu0
        %v1349 = vadd.f32 0.0, %v1348
        %v1350 = vpop.f32.mrf.mxu0
        %v1351 = vadd.f32 0.0, %v1350
        %1352 = vmatmul.bf16.gmra.mxu0 %v836
        %v1353 = vpop.f32.mrf.mxu0
        %v1354 = vadd.f32 0.0, %v1353
        %v1355 = vpop.f32.mrf.mxu0
        %v1356 = vadd.f32 0.0, %v1355
        %1357 = vdwg.mxu0
        %1358 = vmatpush.bf16.msra.mxu0 0
        %1359 = vmatpush.bf16.msra.mxu0 0
        %1360 = vmatpush.bf16.msra.mxu0 0
        %1361 = vmatpush.bf16.msra.mxu0 0
        %1362 = vmatpush.bf16.msra.mxu0 0
        %1363 = vmatpush.bf16.msra.mxu0 0
        %1364 = vmatpush.bf16.msra.mxu0 0
        %1365 = vmatpush.bf16.msra.mxu0 %v849
        %1366 = vmatmul.bf16.gmra.mxu0 %v743
        %v1367 = vpop.f32.mrf.mxu0
        %v1368 = vadd.f32 0.0, %v1367
        %v1369 = vpop.f32.mrf.mxu0
        %v1370 = vadd.f32 0.0, %v1369
        %1371 = vmatmul.bf16.gmra.mxu0 %v746
        %v1372 = vpop.f32.mrf.mxu0
        %v1373 = vadd.f32 0.0, %v1372
        %v1374 = vpop.f32.mrf.mxu0
        %v1375 = vadd.f32 0.0, %v1374
        %1376 = vmatmul.bf16.gmra.mxu0 %v749
        %v1377 = vpop.f32.mrf.mxu0
        %v1378 = vadd.f32 0.0, %v1377
        %v1379 = vpop.f32.mrf.mxu0
        %v1380 = vadd.f32 0.0, %v1379
        %1381 = vmatmul.bf16.gmra.mxu0 %v752
        %v1382 = vpop.f32.mrf.mxu0
        %v1383 = vadd.f32 0.0, %v1382
        %v1384 = vpop.f32.mrf.mxu0
        %v1385 = vadd.f32 0.0, %v1384
        %1386 = vmatmul.bf16.gmra.mxu0 %v755
        %v1387 = vpop.f32.mrf.mxu0
        %v1388 = vadd.f32 0.0, %v1387
        %v1389 = vpop.f32.mrf.mxu0
        %v1390 = vadd.f32 0.0, %v1389
        %1391 = vmatmul.bf16.gmra.mxu0 %v758
        %v1392 = vpop.f32.mrf.mxu0
        %v1393 = vadd.f32 0.0, %v1392
        %v1394 = vpop.f32.mrf.mxu0
        %v1395 = vadd.f32 0.0, %v1394
        %1396 = vmatmul.bf16.gmra.mxu0 %v761
        %v1397 = vpop.f32.mrf.mxu0
        %v1398 = vadd.f32 0.0, %v1397
        %v1399 = vpop.f32.mrf.mxu0
        %v1400 = vadd.f32 0.0, %v1399
        %1401 = vmatmul.bf16.gmra.mxu0 %v764
        %v1402 = vpop.f32.mrf.mxu0
        %v1403 = vadd.f32 0.0, %v1402
        %v1404 = vpop.f32.mrf.mxu0
        %v1405 = vadd.f32 0.0, %v1404
        %1406 = vmatmul.bf16.gmra.mxu0 %v767
        %v1407 = vpop.f32.mrf.mxu0
        %v1408 = vadd.f32 0.0, %v1407
        %v1409 = vpop.f32.mrf.mxu0
        %v1410 = vadd.f32 0.0, %v1409
        %1411 = vmatmul.bf16.gmra.mxu0 %v770
        %v1412 = vpop.f32.mrf.mxu0
        %v1413 = vadd.f32 0.0, %v1412
        %v1414 = vpop.f32.mrf.mxu0
        %v1415 = vadd.f32 0.0, %v1414
        %1416 = vmatmul.bf16.gmra.mxu0 %v773
        %v1417 = vpop.f32.mrf.mxu0
        %v1418 = vadd.f32 0.0, %v1417
        %v1419 = vpop.f32.mrf.mxu0
        %v1420 = vadd.f32 0.0, %v1419
        %1421 = vmatmul.bf16.gmra.mxu0 %v776
        %v1422 = vpop.f32.mrf.mxu0
        %v1423 = vadd.f32 0.0, %v1422
        %v1424 = vpop.f32.mrf.mxu0
        %v1425 = vadd.f32 0.0, %v1424
        %1426 = vmatmul.bf16.gmra.mxu0 %v779
        %v1427 = vpop.f32.mrf.mxu0
        %v1428 = vadd.f32 0.0, %v1427
        %v1429 = vpop.f32.mrf.mxu0
        %v1430 = vadd.f32 0.0, %v1429
        %1431 = vmatmul.bf16.gmra.mxu0 %v782
        %v1432 = vpop.f32.mrf.mxu0
        %v1433 = vadd.f32 0.0, %v1432
        %v1434 = vpop.f32.mrf.mxu0
        %v1435 = vadd.f32 0.0, %v1434
        %1436 = vmatmul.bf16.gmra.mxu0 %v785
        %v1437 = vpop.f32.mrf.mxu0
        %v1438 = vadd.f32 0.0, %v1437
        %v1439 = vpop.f32.mrf.mxu0
        %v1440 = vadd.f32 0.0, %v1439
        %1441 = vmatmul.bf16.gmra.mxu0 %v788
        %v1442 = vpop.f32.mrf.mxu0
        %v1443 = vadd.f32 0.0, %v1442
        %v1444 = vpop.f32.mrf.mxu0
        %v1445 = vadd.f32 0.0, %v1444
        %1446 = vmatmul.bf16.gmra.mxu0 %v791
        %v1447 = vpop.f32.mrf.mxu0
        %v1448 = vadd.f32 0.0, %v1447
        %v1449 = vpop.f32.mrf.mxu0
        %v1450 = vadd.f32 0.0, %v1449
        %1451 = vmatmul.bf16.gmra.mxu0 %v794
        %v1452 = vpop.f32.mrf.mxu0
        %v1453 = vadd.f32 0.0, %v1452
        %v1454 = vpop.f32.mrf.mxu0
        %v1455 = vadd.f32 0.0, %v1454
        %1456 = vmatmul.bf16.gmra.mxu0 %v797
        %v1457 = vpop.f32.mrf.mxu0
        %v1458 = vadd.f32 0.0, %v1457
        %v1459 = vpop.f32.mrf.mxu0
        %v1460 = vadd.f32 0.0, %v1459
        %1461 = vmatmul.bf16.gmra.mxu0 %v800
        %v1462 = vpop.f32.mrf.mxu0
        %v1463 = vadd.f32 0.0, %v1462
        %v1464 = vpop.f32.mrf.mxu0
        %v1465 = vadd.f32 0.0, %v1464
        %1466 = vmatmul.bf16.gmra.mxu0 %v803
        %v1467 = vpop.f32.mrf.mxu0
        %v1468 = vadd.f32 0.0, %v1467
        %v1469 = vpop.f32.mrf.mxu0
        %v1470 = vadd.f32 0.0, %v1469
        %1471 = vmatmul.bf16.gmra.mxu0 %v806
        %v1472 = vpop.f32.mrf.mxu0
        %v1473 = vadd.f32 0.0, %v1472
        %v1474 = vpop.f32.mrf.mxu0
        %v1475 = vadd.f32 0.0, %v1474
        %1476 = vmatmul.bf16.gmra.mxu0 %v809
        %v1477 = vpop.f32.mrf.mxu0
        %v1478 = vadd.f32 0.0, %v1477
        %v1479 = vpop.f32.mrf.mxu0
        %v1480 = vadd.f32 0.0, %v1479
        %1481 = vmatmul.bf16.gmra.mxu0 %v812
        %v1482 = vpop.f32.mrf.mxu0
        %v1483 = vadd.f32 0.0, %v1482
        %v1484 = vpop.f32.mrf.mxu0
        %v1485 = vadd.f32 0.0, %v1484
        %1486 = vmatmul.bf16.gmra.mxu0 %v815
        %v1487 = vpop.f32.mrf.mxu0
        %v1488 = vadd.f32 0.0, %v1487
        %v1489 = vpop.f32.mrf.mxu0
        %v1490 = vadd.f32 0.0, %v1489
        %1491 = vmatmul.bf16.gmra.mxu0 %v818
        %v1492 = vpop.f32.mrf.mxu0
        %v1493 = vadd.f32 0.0, %v1492
        %v1494 = vpop.f32.mrf.mxu0
        %v1495 = vadd.f32 0.0, %v1494
        %1496 = vmatmul.bf16.gmra.mxu0 %v821
        %v1497 = vpop.f32.mrf.mxu0
        %v1498 = vadd.f32 0.0, %v1497
        %v1499 = vpop.f32.mrf.mxu0
        %v1500 = vadd.f32 0.0, %v1499
        %1501 = vmatmul.bf16.gmra.mxu0 %v824
        %v1502 = vpop.f32.mrf.mxu0
        %v1503 = vadd.f32 0.0, %v1502
        %v1504 = vpop.f32.mrf.mxu0
        %v1505 = vadd.f32 0.0, %v1504
        %1506 = vmatmul.bf16.gmra.mxu0 %v827
        %v1507 = vpop.f32.mrf.mxu0
        %v1508 = vadd.f32 0.0, %v1507
        %v1509 = vpop.f32.mrf.mxu0
        %v1510 = vadd.f32 0.0, %v1509
        %1511 = vmatmul.bf16.gmra.mxu0 %v830
        %v1512 = vpop.f32.mrf.mxu0
        %v1513 = vadd.f32 0.0, %v1512
        %v1514 = vpop.f32.mrf.mxu0
        %v1515 = vadd.f32 0.0, %v1514
        %1516 = vmatmul.bf16.gmra.mxu0 %v833
        %v1517 = vpop.f32.mrf.mxu0
        %v1518 = vadd.f32 0.0, %v1517
        %v1519 = vpop.f32.mrf.mxu0
        %v1520 = vadd.f32 0.0, %v1519
        %1521 = vmatmul.bf16.gmra.mxu0 %v836
        %v1522 = vpop.f32.mrf.mxu0
        %v1523 = vadd.f32 0.0, %v1522
        %v1524 = vpop.f32.mrf.mxu0
        %v1525 = vadd.f32 0.0, %v1524
        %1526 = vdwg.mxu0
        %v1527 = vmax.f32 %v861, %v1030
        %v1528 = vmax.f32 %v1527, %v1199
        %v1529 = vmax.f32 %v1528, %v1368
        %1530 = vmax.xlane.f32.xlu0 %v1529
        %v1531 = vpop.xlane.xlu0 %1530
        %v1532 = vmax.f32 %v863, %v1032
        %v1533 = vmax.f32 %v1532, %v1201
        %v1534 = vmax.f32 %v1533, %v1370
        %1535 = vmax.xlane.f32.xlu0 %v1534
        %v1536 = vpop.xlane.xlu0 %1535
        %v1537 = vmax.f32 %v866, %v1035
        %v1538 = vmax.f32 %v1537, %v1204
        %v1539 = vmax.f32 %v1538, %v1373
        %1540 = vmax.xlane.f32.xlu0 %v1539
        %v1541 = vpop.xlane.xlu0 %1540
        %v1542 = vmax.f32 %v868, %v1037
        %v1543 = vmax.f32 %v1542, %v1206
        %v1544 = vmax.f32 %v1543, %v1375
        %1545 = vmax.xlane.f32.xlu0 %v1544
        %v1546 = vpop.xlane.xlu0 %1545
        %v1547 = vmax.f32 %v871, %v1040
        %v1548 = vmax.f32 %v1547, %v1209
        %v1549 = vmax.f32 %v1548, %v1378
        %1550 = vmax.xlane.f32.xlu0 %v1549
        %v1551 = vpop.xlane.xlu0 %1550
        %v1552 = vmax.f32 %v873, %v1042
        %v1553 = vmax.f32 %v1552, %v1211
        %v1554 = vmax.f32 %v1553, %v1380
        %1555 = vmax.xlane.f32.xlu0 %v1554
        %v1556 = vpop.xlane.xlu0 %1555
        %v1557 = vmax.f32 %v876, %v1045
        %v1558 = vmax.f32 %v1557, %v1214
        %v1559 = vmax.f32 %v1558, %v1383
        %1560 = vmax.xlane.f32.xlu0 %v1559
        %v1561 = vpop.xlane.xlu0 %1560
        %v1562 = vmax.f32 %v878, %v1047
        %v1563 = vmax.f32 %v1562, %v1216
        %v1564 = vmax.f32 %v1563, %v1385
        %1565 = vmax.xlane.f32.xlu0 %v1564
        %v1566 = vpop.xlane.xlu0 %1565
        %v1567 = vmax.f32 %v881, %v1050
        %v1568 = vmax.f32 %v1567, %v1219
        %v1569 = vmax.f32 %v1568, %v1388
        %1570 = vmax.xlane.f32.xlu0 %v1569
        %v1571 = vpop.xlane.xlu0 %1570
        %v1572 = vmax.f32 %v883, %v1052
        %v1573 = vmax.f32 %v1572, %v1221
        %v1574 = vmax.f32 %v1573, %v1390
        %1575 = vmax.xlane.f32.xlu0 %v1574
        %v1576 = vpop.xlane.xlu0 %1575
        %v1577 = vmax.f32 %v886, %v1055
        %v1578 = vmax.f32 %v1577, %v1224
        %v1579 = vmax.f32 %v1578, %v1393
        %1580 = vmax.xlane.f32.xlu0 %v1579
        %v1581 = vpop.xlane.xlu0 %1580
        %v1582 = vmax.f32 %v888, %v1057
        %v1583 = vmax.f32 %v1582, %v1226
        %v1584 = vmax.f32 %v1583, %v1395
        %1585 = vmax.xlane.f32.xlu0 %v1584
        %v1586 = vpop.xlane.xlu0 %1585
        %v1587 = vmax.f32 %v891, %v1060
        %v1588 = vmax.f32 %v1587, %v1229
        %v1589 = vmax.f32 %v1588, %v1398
        %1590 = vmax.xlane.f32.xlu0 %v1589
        %v1591 = vpop.xlane.xlu0 %1590
        %v1592 = vmax.f32 %v893, %v1062
        %v1593 = vmax.f32 %v1592, %v1231
        %v1594 = vmax.f32 %v1593, %v1400
        %1595 = vmax.xlane.f32.xlu0 %v1594
        %v1596 = vpop.xlane.xlu0 %1595
        %v1597 = vmax.f32 %v896, %v1065
        %v1598 = vmax.f32 %v1597, %v1234
        %v1599 = vmax.f32 %v1598, %v1403
        %1600 = vmax.xlane.f32.xlu0 %v1599
        %v1601 = vpop.xlane.xlu0 %1600
        %v1602 = vmax.f32 %v898, %v1067
        %v1603 = vmax.f32 %v1602, %v1236
        %v1604 = vmax.f32 %v1603, %v1405
        %1605 = vmax.xlane.f32.xlu0 %v1604
        %v1606 = vpop.xlane.xlu0 %1605
        %v1607 = vmax.f32 %v901, %v1070
        %v1608 = vmax.f32 %v1607, %v1239
        %v1609 = vmax.f32 %v1608, %v1408
        %1610 = vmax.xlane.f32.xlu0 %v1609
        %v1611 = vpop.xlane.xlu0 %1610
        %v1612 = vmax.f32 %v903, %v1072
        %v1613 = vmax.f32 %v1612, %v1241
        %v1614 = vmax.f32 %v1613, %v1410
        %1615 = vmax.xlane.f32.xlu0 %v1614
        %v1616 = vpop.xlane.xlu0 %1615
        %v1617 = vmax.f32 %v906, %v1075
        %v1618 = vmax.f32 %v1617, %v1244
        %v1619 = vmax.f32 %v1618, %v1413
        %1620 = vmax.xlane.f32.xlu0 %v1619
        %v1621 = vpop.xlane.xlu0 %1620
        %v1622 = vmax.f32 %v908, %v1077
        %v1623 = vmax.f32 %v1622, %v1246
        %v1624 = vmax.f32 %v1623, %v1415
        %1625 = vmax.xlane.f32.xlu0 %v1624
        %v1626 = vpop.xlane.xlu0 %1625
        %v1627 = vmax.f32 %v911, %v1080
        %v1628 = vmax.f32 %v1627, %v1249
        %v1629 = vmax.f32 %v1628, %v1418
        %1630 = vmax.xlane.f32.xlu0 %v1629
        %v1631 = vpop.xlane.xlu0 %1630
        %v1632 = vmax.f32 %v913, %v1082
        %v1633 = vmax.f32 %v1632, %v1251
        %v1634 = vmax.f32 %v1633, %v1420
        %1635 = vmax.xlane.f32.xlu0 %v1634
        %v1636 = vpop.xlane.xlu0 %1635
        %v1637 = vmax.f32 %v916, %v1085
        %v1638 = vmax.f32 %v1637, %v1254
        %v1639 = vmax.f32 %v1638, %v1423
        %1640 = vmax.xlane.f32.xlu0 %v1639
        %v1641 = vpop.xlane.xlu0 %1640
        %v1642 = vmax.f32 %v918, %v1087
        %v1643 = vmax.f32 %v1642, %v1256
        %v1644 = vmax.f32 %v1643, %v1425
        %1645 = vmax.xlane.f32.xlu0 %v1644
        %v1646 = vpop.xlane.xlu0 %1645
        %v1647 = vmax.f32 %v921, %v1090
        %v1648 = vmax.f32 %v1647, %v1259
        %v1649 = vmax.f32 %v1648, %v1428
        %1650 = vmax.xlane.f32.xlu0 %v1649
        %v1651 = vpop.xlane.xlu0 %1650
        %v1652 = vmax.f32 %v923, %v1092
        %v1653 = vmax.f32 %v1652, %v1261
        %v1654 = vmax.f32 %v1653, %v1430
        %1655 = vmax.xlane.f32.xlu0 %v1654
        %v1656 = vpop.xlane.xlu0 %1655
        %v1657 = vmax.f32 %v926, %v1095
        %v1658 = vmax.f32 %v1657, %v1264
        %v1659 = vmax.f32 %v1658, %v1433
        %1660 = vmax.xlane.f32.xlu0 %v1659
        %v1661 = vpop.xlane.xlu0 %1660
        %v1662 = vmax.f32 %v928, %v1097
        %v1663 = vmax.f32 %v1662, %v1266
        %v1664 = vmax.f32 %v1663, %v1435
        %1665 = vmax.xlane.f32.xlu0 %v1664
        %v1666 = vpop.xlane.xlu0 %1665
        %v1667 = vmax.f32 %v931, %v1100
        %v1668 = vmax.f32 %v1667, %v1269
        %v1669 = vmax.f32 %v1668, %v1438
        %1670 = vmax.xlane.f32.xlu0 %v1669
        %v1671 = vpop.xlane.xlu0 %1670
        %v1672 = vmax.f32 %v933, %v1102
        %v1673 = vmax.f32 %v1672, %v1271
        %v1674 = vmax.f32 %v1673, %v1440
        %1675 = vmax.xlane.f32.xlu0 %v1674
        %v1676 = vpop.xlane.xlu0 %1675
        %v1677 = vmax.f32 %v936, %v1105
        %v1678 = vmax.f32 %v1677, %v1274
        %v1679 = vmax.f32 %v1678, %v1443
        %1680 = vmax.xlane.f32.xlu0 %v1679
        %v1681 = vpop.xlane.xlu0 %1680
        %v1682 = vmax.f32 %v938, %v1107
        %v1683 = vmax.f32 %v1682, %v1276
        %v1684 = vmax.f32 %v1683, %v1445
        %1685 = vmax.xlane.f32.xlu0 %v1684
        %v1686 = vpop.xlane.xlu0 %1685
        %v1687 = vmax.f32 %v941, %v1110
        %v1688 = vmax.f32 %v1687, %v1279
        %v1689 = vmax.f32 %v1688, %v1448
        %1690 = vmax.xlane.f32.xlu0 %v1689
        %v1691 = vpop.xlane.xlu0 %1690
        %v1692 = vmax.f32 %v943, %v1112
        %v1693 = vmax.f32 %v1692, %v1281
        %v1694 = vmax.f32 %v1693, %v1450
        %1695 = vmax.xlane.f32.xlu0 %v1694
        %v1696 = vpop.xlane.xlu0 %1695
        %v1697 = vmax.f32 %v946, %v1115
        %v1698 = vmax.f32 %v1697, %v1284
        %v1699 = vmax.f32 %v1698, %v1453
        %1700 = vmax.xlane.f32.xlu0 %v1699
        %v1701 = vpop.xlane.xlu0 %1700
        %v1702 = vmax.f32 %v948, %v1117
        %v1703 = vmax.f32 %v1702, %v1286
        %v1704 = vmax.f32 %v1703, %v1455
        %1705 = vmax.xlane.f32.xlu0 %v1704
        %v1706 = vpop.xlane.xlu0 %1705
        %v1707 = vmax.f32 %v951, %v1120
        %v1708 = vmax.f32 %v1707, %v1289
        %v1709 = vmax.f32 %v1708, %v1458
        %1710 = vmax.xlane.f32.xlu0 %v1709
        %v1711 = vpop.xlane.xlu0 %1710
        %v1712 = vmax.f32 %v953, %v1122
        %v1713 = vmax.f32 %v1712, %v1291
        %v1714 = vmax.f32 %v1713, %v1460
        %1715 = vmax.xlane.f32.xlu0 %v1714
        %v1716 = vpop.xlane.xlu0 %1715
        %v1717 = vmax.f32 %v956, %v1125
        %v1718 = vmax.f32 %v1717, %v1294
        %v1719 = vmax.f32 %v1718, %v1463
        %1720 = vmax.xlane.f32.xlu0 %v1719
        %v1721 = vpop.xlane.xlu0 %1720
        %v1722 = vmax.f32 %v958, %v1127
        %v1723 = vmax.f32 %v1722, %v1296
        %v1724 = vmax.f32 %v1723, %v1465
        %1725 = vmax.xlane.f32.xlu0 %v1724
        %v1726 = vpop.xlane.xlu0 %1725
        %v1727 = vmax.f32 %v961, %v1130
        %v1728 = vmax.f32 %v1727, %v1299
        %v1729 = vmax.f32 %v1728, %v1468
        %1730 = vmax.xlane.f32.xlu0 %v1729
        %v1731 = vpop.xlane.xlu0 %1730
        %v1732 = vmax.f32 %v963, %v1132
        %v1733 = vmax.f32 %v1732, %v1301
        %v1734 = vmax.f32 %v1733, %v1470
        %1735 = vmax.xlane.f32.xlu0 %v1734
        %v1736 = vpop.xlane.xlu0 %1735
        %v1737 = vmax.f32 %v966, %v1135
        %v1738 = vmax.f32 %v1737, %v1304
        %v1739 = vmax.f32 %v1738, %v1473
        %1740 = vmax.xlane.f32.xlu0 %v1739
        %v1741 = vpop.xlane.xlu0 %1740
        %v1742 = vmax.f32 %v968, %v1137
        %v1743 = vmax.f32 %v1742, %v1306
        %v1744 = vmax.f32 %v1743, %v1475
        %1745 = vmax.xlane.f32.xlu0 %v1744
        %v1746 = vpop.xlane.xlu0 %1745
        %v1747 = vmax.f32 %v971, %v1140
        %v1748 = vmax.f32 %v1747, %v1309
        %v1749 = vmax.f32 %v1748, %v1478
        %1750 = vmax.xlane.f32.xlu0 %v1749
        %v1751 = vpop.xlane.xlu0 %1750
        %v1752 = vmax.f32 %v973, %v1142
        %v1753 = vmax.f32 %v1752, %v1311
        %v1754 = vmax.f32 %v1753, %v1480
        %1755 = vmax.xlane.f32.xlu0 %v1754
        %v1756 = vpop.xlane.xlu0 %1755
        %v1757 = vmax.f32 %v976, %v1145
        %v1758 = vmax.f32 %v1757, %v1314
        %v1759 = vmax.f32 %v1758, %v1483
        %1760 = vmax.xlane.f32.xlu0 %v1759
        %v1761 = vpop.xlane.xlu0 %1760
        %v1762 = vmax.f32 %v978, %v1147
        %v1763 = vmax.f32 %v1762, %v1316
        %v1764 = vmax.f32 %v1763, %v1485
        %1765 = vmax.xlane.f32.xlu0 %v1764
        %v1766 = vpop.xlane.xlu0 %1765
        %v1767 = vmax.f32 %v981, %v1150
        %v1768 = vmax.f32 %v1767, %v1319
        %v1769 = vmax.f32 %v1768, %v1488
        %1770 = vmax.xlane.f32.xlu0 %v1769
        %v1771 = vpop.xlane.xlu0 %1770
        %v1772 = vmax.f32 %v983, %v1152
        %v1773 = vmax.f32 %v1772, %v1321
        %v1774 = vmax.f32 %v1773, %v1490
        %1775 = vmax.xlane.f32.xlu0 %v1774
        %v1776 = vpop.xlane.xlu0 %1775
        %v1777 = vmax.f32 %v986, %v1155
        %v1778 = vmax.f32 %v1777, %v1324
        %v1779 = vmax.f32 %v1778, %v1493
        %1780 = vmax.xlane.f32.xlu0 %v1779
        %v1781 = vpop.xlane.xlu0 %1780
        %v1782 = vmax.f32 %v988, %v1157
        %v1783 = vmax.f32 %v1782, %v1326
        %v1784 = vmax.f32 %v1783, %v1495
        %1785 = vmax.xlane.f32.xlu0 %v1784
        %v1786 = vpop.xlane.xlu0 %1785
        %v1787 = vmax.f32 %v991, %v1160
        %v1788 = vmax.f32 %v1787, %v1329
        %v1789 = vmax.f32 %v1788, %v1498
        %1790 = vmax.xlane.f32.xlu0 %v1789
        %v1791 = vpop.xlane.xlu0 %1790
        %v1792 = vmax.f32 %v993, %v1162
        %v1793 = vmax.f32 %v1792, %v1331
        %v1794 = vmax.f32 %v1793, %v1500
        %1795 = vmax.xlane.f32.xlu0 %v1794
        %v1796 = vpop.xlane.xlu0 %1795
        %v1797 = vmax.f32 %v996, %v1165
        %v1798 = vmax.f32 %v1797, %v1334
        %v1799 = vmax.f32 %v1798, %v1503
        %1800 = vmax.xlane.f32.xlu0 %v1799
        %v1801 = vpop.xlane.xlu0 %1800
        %v1802 = vmax.f32 %v998, %v1167
        %v1803 = vmax.f32 %v1802, %v1336
        %v1804 = vmax.f32 %v1803, %v1505
        %1805 = vmax.xlane.f32.xlu0 %v1804
        %v1806 = vpop.xlane.xlu0 %1805
        %v1807 = vmax.f32 %v1001, %v1170
        %v1808 = vmax.f32 %v1807, %v1339
        %v1809 = vmax.f32 %v1808, %v1508
        %1810 = vmax.xlane.f32.xlu0 %v1809
        %v1811 = vpop.xlane.xlu0 %1810
        %v1812 = vmax.f32 %v1003, %v1172
        %v1813 = vmax.f32 %v1812, %v1341
        %v1814 = vmax.f32 %v1813, %v1510
        %1815 = vmax.xlane.f32.xlu0 %v1814
        %v1816 = vpop.xlane.xlu0 %1815
        %v1817 = vmax.f32 %v1006, %v1175
        %v1818 = vmax.f32 %v1817, %v1344
        %v1819 = vmax.f32 %v1818, %v1513
        %1820 = vmax.xlane.f32.xlu0 %v1819
        %v1821 = vpop.xlane.xlu0 %1820
        %v1822 = vmax.f32 %v1008, %v1177
        %v1823 = vmax.f32 %v1822, %v1346
        %v1824 = vmax.f32 %v1823, %v1515
        %1825 = vmax.xlane.f32.xlu0 %v1824
        %v1826 = vpop.xlane.xlu0 %1825
        %v1827 = vmax.f32 %v1011, %v1180
        %v1828 = vmax.f32 %v1827, %v1349
        %v1829 = vmax.f32 %v1828, %v1518
        %1830 = vmax.xlane.f32.xlu0 %v1829
        %v1831 = vpop.xlane.xlu0 %1830
        %v1832 = vmax.f32 %v1013, %v1182
        %v1833 = vmax.f32 %v1832, %v1351
        %v1834 = vmax.f32 %v1833, %v1520
        %1835 = vmax.xlane.f32.xlu0 %v1834
        %v1836 = vpop.xlane.xlu0 %1835
        %v1837 = vmax.f32 %v1016, %v1185
        %v1838 = vmax.f32 %v1837, %v1354
        %v1839 = vmax.f32 %v1838, %v1523
        %1840 = vmax.xlane.f32.xlu0 %v1839
        %v1841 = vpop.xlane.xlu0 %1840
        %v1842 = vmax.f32 %v1018, %v1187
        %v1843 = vmax.f32 %v1842, %v1356
        %v1844 = vmax.f32 %v1843, %v1525
        %1845 = vmax.xlane.f32.xlu0 %v1844
        %v1846 = vpop.xlane.xlu0 %1845
        %v1847 = vsub.f32 %v861, %v1531
        %v1848 = vsub.f32 %v1030, %v1531
        %v1849 = vsub.f32 %v1199, %v1531
        %v1850 = vsub.f32 %v1368, %v1531
        %v1851 = vsub.f32 %v863, %v1536
        %v1852 = vsub.f32 %v1032, %v1536
        %v1853 = vsub.f32 %v1201, %v1536
        %v1854 = vsub.f32 %v1370, %v1536
        %v1855 = vsub.f32 %v866, %v1541
        %v1856 = vsub.f32 %v1035, %v1541
        %v1857 = vsub.f32 %v1204, %v1541
        %v1858 = vsub.f32 %v1373, %v1541
        %v1859 = vsub.f32 %v868, %v1546
        %v1860 = vsub.f32 %v1037, %v1546
        %v1861 = vsub.f32 %v1206, %v1546
        %v1862 = vsub.f32 %v1375, %v1546
        %v1863 = vsub.f32 %v871, %v1551
        %v1864 = vsub.f32 %v1040, %v1551
        %v1865 = vsub.f32 %v1209, %v1551
        %v1866 = vsub.f32 %v1378, %v1551
        %v1867 = vsub.f32 %v873, %v1556
        %v1868 = vsub.f32 %v1042, %v1556
        %v1869 = vsub.f32 %v1211, %v1556
        %v1870 = vsub.f32 %v1380, %v1556
        %v1871 = vsub.f32 %v876, %v1561
        %v1872 = vsub.f32 %v1045, %v1561
        %v1873 = vsub.f32 %v1214, %v1561
        %v1874 = vsub.f32 %v1383, %v1561
        %v1875 = vsub.f32 %v878, %v1566
        %v1876 = vsub.f32 %v1047, %v1566
        %v1877 = vsub.f32 %v1216, %v1566
        %v1878 = vsub.f32 %v1385, %v1566
        %v1879 = vsub.f32 %v881, %v1571
        %v1880 = vsub.f32 %v1050, %v1571
        %v1881 = vsub.f32 %v1219, %v1571
        %v1882 = vsub.f32 %v1388, %v1571
        %v1883 = vsub.f32 %v883, %v1576
        %v1884 = vsub.f32 %v1052, %v1576
        %v1885 = vsub.f32 %v1221, %v1576
        %v1886 = vsub.f32 %v1390, %v1576
        %v1887 = vsub.f32 %v886, %v1581
        %v1888 = vsub.f32 %v1055, %v1581
        %v1889 = vsub.f32 %v1224, %v1581
        %v1890 = vsub.f32 %v1393, %v1581
        %v1891 = vsub.f32 %v888, %v1586
        %v1892 = vsub.f32 %v1057, %v1586
        %v1893 = vsub.f32 %v1226, %v1586
        %v1894 = vsub.f32 %v1395, %v1586
        %v1895 = vsub.f32 %v891, %v1591
        %v1896 = vsub.f32 %v1060, %v1591
        %v1897 = vsub.f32 %v1229, %v1591
        %v1898 = vsub.f32 %v1398, %v1591
        %v1899 = vsub.f32 %v893, %v1596
        %v1900 = vsub.f32 %v1062, %v1596
        %v1901 = vsub.f32 %v1231, %v1596
        %v1902 = vsub.f32 %v1400, %v1596
        %v1903 = vsub.f32 %v896, %v1601
        %v1904 = vsub.f32 %v1065, %v1601
        %v1905 = vsub.f32 %v1234, %v1601
        %v1906 = vsub.f32 %v1403, %v1601
        %v1907 = vsub.f32 %v898, %v1606
        %v1908 = vsub.f32 %v1067, %v1606
        %v1909 = vsub.f32 %v1236, %v1606
        %v1910 = vsub.f32 %v1405, %v1606
        %v1911 = vsub.f32 %v901, %v1611
        %v1912 = vsub.f32 %v1070, %v1611
        %v1913 = vsub.f32 %v1239, %v1611
        %v1914 = vsub.f32 %v1408, %v1611
        %v1915 = vsub.f32 %v903, %v1616
        %v1916 = vsub.f32 %v1072, %v1616
        %v1917 = vsub.f32 %v1241, %v1616
        %v1918 = vsub.f32 %v1410, %v1616
        %v1919 = vsub.f32 %v906, %v1621
        %v1920 = vsub.f32 %v1075, %v1621
        %v1921 = vsub.f32 %v1244, %v1621
        %v1922 = vsub.f32 %v1413, %v1621
        %v1923 = vsub.f32 %v908, %v1626
        %v1924 = vsub.f32 %v1077, %v1626
        %v1925 = vsub.f32 %v1246, %v1626
        %v1926 = vsub.f32 %v1415, %v1626
        %v1927 = vsub.f32 %v911, %v1631
        %v1928 = vsub.f32 %v1080, %v1631
        %v1929 = vsub.f32 %v1249, %v1631
        %v1930 = vsub.f32 %v1418, %v1631
        %v1931 = vsub.f32 %v913, %v1636
        %v1932 = vsub.f32 %v1082, %v1636
        %v1933 = vsub.f32 %v1251, %v1636
        %v1934 = vsub.f32 %v1420, %v1636
        %v1935 = vsub.f32 %v916, %v1641
        %v1936 = vsub.f32 %v1085, %v1641
        %v1937 = vsub.f32 %v1254, %v1641
        %v1938 = vsub.f32 %v1423, %v1641
        %v1939 = vsub.f32 %v918, %v1646
        %v1940 = vsub.f32 %v1087, %v1646
        %v1941 = vsub.f32 %v1256, %v1646
        %v1942 = vsub.f32 %v1425, %v1646
        %v1943 = vsub.f32 %v921, %v1651
        %v1944 = vsub.f32 %v1090, %v1651
        %v1945 = vsub.f32 %v1259, %v1651
        %v1946 = vsub.f32 %v1428, %v1651
        %v1947 = vsub.f32 %v923, %v1656
        %v1948 = vsub.f32 %v1092, %v1656
        %v1949 = vsub.f32 %v1261, %v1656
        %v1950 = vsub.f32 %v1430, %v1656
        %v1951 = vsub.f32 %v926, %v1661
        %v1952 = vsub.f32 %v1095, %v1661
        %v1953 = vsub.f32 %v1264, %v1661
        %v1954 = vsub.f32 %v1433, %v1661
        %v1955 = vsub.f32 %v928, %v1666
        %v1956 = vsub.f32 %v1097, %v1666
        %v1957 = vsub.f32 %v1266, %v1666
        %v1958 = vsub.f32 %v1435, %v1666
        %v1959 = vsub.f32 %v931, %v1671
        %v1960 = vsub.f32 %v1100, %v1671
        %v1961 = vsub.f32 %v1269, %v1671
        %v1962 = vsub.f32 %v1438, %v1671
        %v1963 = vsub.f32 %v933, %v1676
        %v1964 = vsub.f32 %v1102, %v1676
        %v1965 = vsub.f32 %v1271, %v1676
        %v1966 = vsub.f32 %v1440, %v1676
        %v1967 = vsub.f32 %v936, %v1681
        %v1968 = vsub.f32 %v1105, %v1681
        %v1969 = vsub.f32 %v1274, %v1681
        %v1970 = vsub.f32 %v1443, %v1681
        %v1971 = vsub.f32 %v938, %v1686
        %v1972 = vsub.f32 %v1107, %v1686
        %v1973 = vsub.f32 %v1276, %v1686
        %v1974 = vsub.f32 %v1445, %v1686
        %v1975 = vsub.f32 %v941, %v1691
        %v1976 = vsub.f32 %v1110, %v1691
        %v1977 = vsub.f32 %v1279, %v1691
        %v1978 = vsub.f32 %v1448, %v1691
        %v1979 = vsub.f32 %v943, %v1696
        %v1980 = vsub.f32 %v1112, %v1696
        %v1981 = vsub.f32 %v1281, %v1696
        %v1982 = vsub.f32 %v1450, %v1696
        %v1983 = vsub.f32 %v946, %v1701
        %v1984 = vsub.f32 %v1115, %v1701
        %v1985 = vsub.f32 %v1284, %v1701
        %v1986 = vsub.f32 %v1453, %v1701
        %v1987 = vsub.f32 %v948, %v1706
        %v1988 = vsub.f32 %v1117, %v1706
        %v1989 = vsub.f32 %v1286, %v1706
        %v1990 = vsub.f32 %v1455, %v1706
        %v1991 = vsub.f32 %v951, %v1711
        %v1992 = vsub.f32 %v1120, %v1711
        %v1993 = vsub.f32 %v1289, %v1711
        %v1994 = vsub.f32 %v1458, %v1711
        %v1995 = vsub.f32 %v953, %v1716
        %v1996 = vsub.f32 %v1122, %v1716
        %v1997 = vsub.f32 %v1291, %v1716
        %v1998 = vsub.f32 %v1460, %v1716
        %v1999 = vsub.f32 %v956, %v1721
        %v2000 = vsub.f32 %v1125, %v1721
        %v2001 = vsub.f32 %v1294, %v1721
        %v2002 = vsub.f32 %v1463, %v1721
        %v2003 = vsub.f32 %v958, %v1726
        %v2004 = vsub.f32 %v1127, %v1726
        %v2005 = vsub.f32 %v1296, %v1726
        %v2006 = vsub.f32 %v1465, %v1726
        %v2007 = vsub.f32 %v961, %v1731
        %v2008 = vsub.f32 %v1130, %v1731
        %v2009 = vsub.f32 %v1299, %v1731
        %v2010 = vsub.f32 %v1468, %v1731
        %v2011 = vsub.f32 %v963, %v1736
        %v2012 = vsub.f32 %v1132, %v1736
        %v2013 = vsub.f32 %v1301, %v1736
        %v2014 = vsub.f32 %v1470, %v1736
        %v2015 = vsub.f32 %v966, %v1741
        %v2016 = vsub.f32 %v1135, %v1741
        %v2017 = vsub.f32 %v1304, %v1741
        %v2018 = vsub.f32 %v1473, %v1741
        %v2019 = vsub.f32 %v968, %v1746
        %v2020 = vsub.f32 %v1137, %v1746
        %v2021 = vsub.f32 %v1306, %v1746
        %v2022 = vsub.f32 %v1475, %v1746
        %v2023 = vsub.f32 %v971, %v1751
        %v2024 = vsub.f32 %v1140, %v1751
        %v2025 = vsub.f32 %v1309, %v1751
        %v2026 = vsub.f32 %v1478, %v1751
        %v2027 = vsub.f32 %v973, %v1756
        %v2028 = vsub.f32 %v1142, %v1756
        %v2029 = vsub.f32 %v1311, %v1756
        %v2030 = vsub.f32 %v1480, %v1756
        %v2031 = vsub.f32 %v976, %v1761
        %v2032 = vsub.f32 %v1145, %v1761
        %v2033 = vsub.f32 %v1314, %v1761
        %v2034 = vsub.f32 %v1483, %v1761
        %v2035 = vsub.f32 %v978, %v1766
        %v2036 = vsub.f32 %v1147, %v1766
        %v2037 = vsub.f32 %v1316, %v1766
        %v2038 = vsub.f32 %v1485, %v1766
        %v2039 = vsub.f32 %v981, %v1771
        %v2040 = vsub.f32 %v1150, %v1771
        %v2041 = vsub.f32 %v1319, %v1771
        %v2042 = vsub.f32 %v1488, %v1771
        %v2043 = vsub.f32 %v983, %v1776
        %v2044 = vsub.f32 %v1152, %v1776
        %v2045 = vsub.f32 %v1321, %v1776
        %v2046 = vsub.f32 %v1490, %v1776
        %v2047 = vsub.f32 %v986, %v1781
        %v2048 = vsub.f32 %v1155, %v1781
        %v2049 = vsub.f32 %v1324, %v1781
        %v2050 = vsub.f32 %v1493, %v1781
        %v2051 = vsub.f32 %v988, %v1786
        %v2052 = vsub.f32 %v1157, %v1786
        %v2053 = vsub.f32 %v1326, %v1786
        %v2054 = vsub.f32 %v1495, %v1786
        %v2055 = vsub.f32 %v991, %v1791
        %v2056 = vsub.f32 %v1160, %v1791
        %v2057 = vsub.f32 %v1329, %v1791
        %v2058 = vsub.f32 %v1498, %v1791
        %v2059 = vsub.f32 %v993, %v1796
        %v2060 = vsub.f32 %v1162, %v1796
        %v2061 = vsub.f32 %v1331, %v1796
        %v2062 = vsub.f32 %v1500, %v1796
        %v2063 = vsub.f32 %v996, %v1801
        %v2064 = vsub.f32 %v1165, %v1801
        %v2065 = vsub.f32 %v1334, %v1801
        %v2066 = vsub.f32 %v1503, %v1801
        %v2067 = vsub.f32 %v998, %v1806
        %v2068 = vsub.f32 %v1167, %v1806
        %v2069 = vsub.f32 %v1336, %v1806
        %v2070 = vsub.f32 %v1505, %v1806
        %v2071 = vsub.f32 %v1001, %v1811
        %v2072 = vsub.f32 %v1170, %v1811
        %v2073 = vsub.f32 %v1339, %v1811
        %v2074 = vsub.f32 %v1508, %v1811
        %v2075 = vsub.f32 %v1003, %v1816
        %v2076 = vsub.f32 %v1172, %v1816
        %v2077 = vsub.f32 %v1341, %v1816
        %v2078 = vsub.f32 %v1510, %v1816
        %v2079 = vsub.f32 %v1006, %v1821
        %v2080 = vsub.f32 %v1175, %v1821
        %v2081 = vsub.f32 %v1344, %v1821
        %v2082 = vsub.f32 %v1513, %v1821
        %v2083 = vsub.f32 %v1008, %v1826
        %v2084 = vsub.f32 %v1177, %v1826
        %v2085 = vsub.f32 %v1346, %v1826
        %v2086 = vsub.f32 %v1515, %v1826
        %v2087 = vsub.f32 %v1011, %v1831
        %v2088 = vsub.f32 %v1180, %v1831
        %v2089 = vsub.f32 %v1349, %v1831
        %v2090 = vsub.f32 %v1518, %v1831
        %v2091 = vsub.f32 %v1013, %v1836
        %v2092 = vsub.f32 %v1182, %v1836
        %v2093 = vsub.f32 %v1351, %v1836
        %v2094 = vsub.f32 %v1520, %v1836
        %v2095 = vsub.f32 %v1016, %v1841
        %v2096 = vsub.f32 %v1185, %v1841
        %v2097 = vsub.f32 %v1354, %v1841
        %v2098 = vsub.f32 %v1523, %v1841
        %v2099 = vsub.f32 %v1018, %v1846
        %v2100 = vsub.f32 %v1187, %v1846
        %v2101 = vsub.f32 %v1356, %v1846
        %v2102 = vsub.f32 %v1525, %v1846
        %v2103 = vmul.f32 %v1847, 1.442695
        %v2104 = vpow.pop %v2103
        %v2105 = vmul.f32 %v1848, 1.442695
        %v2106 = vpow.pop %v2105
        %v2107 = vmul.f32 %v1849, 1.442695
        %v2108 = vpow.pop %v2107
        %v2109 = vmul.f32 %v1850, 1.442695
        %v2110 = vpow.pop %v2109
        %v2111 = vmul.f32 %v1851, 1.442695
        %v2112 = vpow.pop %v2111
        %v2113 = vmul.f32 %v1852, 1.442695
        %v2114 = vpow.pop %v2113
        %v2115 = vmul.f32 %v1853, 1.442695
        %v2116 = vpow.pop %v2115
        %v2117 = vmul.f32 %v1854, 1.442695
        %v2118 = vpow.pop %v2117
        %v2119 = vmul.f32 %v1855, 1.442695
        %v2120 = vpow.pop %v2119
        %v2121 = vmul.f32 %v1856, 1.442695
        %v2122 = vpow.pop %v2121
        %v2123 = vmul.f32 %v1857, 1.442695
        %v2124 = vpow.pop %v2123
        %v2125 = vmul.f32 %v1858, 1.442695
        %v2126 = vpow.pop %v2125
        %v2127 = vmul.f32 %v1859, 1.442695
        %v2128 = vpow.pop %v2127
        %v2129 = vmul.f32 %v1860, 1.442695
        %v2130 = vpow.pop %v2129
        %v2131 = vmul.f32 %v1861, 1.442695
        %v2132 = vpow.pop %v2131
        %v2133 = vmul.f32 %v1862, 1.442695
        %v2134 = vpow.pop %v2133
        %v2135 = vmul.f32 %v1863, 1.442695
        %v2136 = vpow.pop %v2135
        %v2137 = vmul.f32 %v1864, 1.442695
        %v2138 = vpow.pop %v2137
        %v2139 = vmul.f32 %v1865, 1.442695
        %v2140 = vpow.pop %v2139
        %v2141 = vmul.f32 %v1866, 1.442695
        %v2142 = vpow.pop %v2141
        %v2143 = vmul.f32 %v1867, 1.442695
        %v2144 = vpow.pop %v2143
        %v2145 = vmul.f32 %v1868, 1.442695
        %v2146 = vpow.pop %v2145
        %v2147 = vmul.f32 %v1869, 1.442695
        %v2148 = vpow.pop %v2147
        %v2149 = vmul.f32 %v1870, 1.442695
        %v2150 = vpow.pop %v2149
        %v2151 = vmul.f32 %v1871, 1.442695
        %v2152 = vpow.pop %v2151
        %v2153 = vmul.f32 %v1872, 1.442695
        %v2154 = vpow.pop %v2153
        %v2155 = vmul.f32 %v1873, 1.442695
        %v2156 = vpow.pop %v2155
        %v2157 = vmul.f32 %v1874, 1.442695
        %v2158 = vpow.pop %v2157
        %v2159 = vmul.f32 %v1875, 1.442695
        %v2160 = vpow.pop %v2159
        %v2161 = vmul.f32 %v1876, 1.442695
        %v2162 = vpow.pop %v2161
        %v2163 = vmul.f32 %v1877, 1.442695
        %v2164 = vpow.pop %v2163
        %v2165 = vmul.f32 %v1878, 1.442695
        %v2166 = vpow.pop %v2165
        %v2167 = vmul.f32 %v1879, 1.442695
        %v2168 = vpow.pop %v2167
        %v2169 = vmul.f32 %v1880, 1.442695
        %v2170 = vpow.pop %v2169
        %v2171 = vmul.f32 %v1881, 1.442695
        %v2172 = vpow.pop %v2171
        %v2173 = vmul.f32 %v1882, 1.442695
        %v2174 = vpow.pop %v2173
        %v2175 = vmul.f32 %v1883, 1.442695
        %v2176 = vpow.pop %v2175
        %v2177 = vmul.f32 %v1884, 1.442695
        %v2178 = vpow.pop %v2177
        %v2179 = vmul.f32 %v1885, 1.442695
        %v2180 = vpow.pop %v2179
        %v2181 = vmul.f32 %v1886, 1.442695
        %v2182 = vpow.pop %v2181
        %v2183 = vmul.f32 %v1887, 1.442695
        %v2184 = vpow.pop %v2183
        %v2185 = vmul.f32 %v1888, 1.442695
        %v2186 = vpow.pop %v2185
        %v2187 = vmul.f32 %v1889, 1.442695
        %v2188 = vpow.pop %v2187
        %v2189 = vmul.f32 %v1890, 1.442695
        %v2190 = vpow.pop %v2189
        %v2191 = vmul.f32 %v1891, 1.442695
        %v2192 = vpow.pop %v2191
        %v2193 = vmul.f32 %v1892, 1.442695
        %v2194 = vpow.pop %v2193
        %v2195 = vmul.f32 %v1893, 1.442695
        %v2196 = vpow.pop %v2195
        %v2197 = vmul.f32 %v1894, 1.442695
        %v2198 = vpow.pop %v2197
        %v2199 = vmul.f32 %v1895, 1.442695
        %v2200 = vpow.pop %v2199
        %v2201 = vmul.f32 %v1896, 1.442695
        %v2202 = vpow.pop %v2201
        %v2203 = vmul.f32 %v1897, 1.442695
        %v2204 = vpow.pop %v2203
        %v2205 = vmul.f32 %v1898, 1.442695
        %v2206 = vpow.pop %v2205
        %v2207 = vmul.f32 %v1899, 1.442695
        %v2208 = vpow.pop %v2207
        %v2209 = vmul.f32 %v1900, 1.442695
        %v2210 = vpow.pop %v2209
        %v2211 = vmul.f32 %v1901, 1.442695
        %v2212 = vpow.pop %v2211
        %v2213 = vmul.f32 %v1902, 1.442695
        %v2214 = vpow.pop %v2213
        %v2215 = vmul.f32 %v1903, 1.442695
        %v2216 = vpow.pop %v2215
        %v2217 = vmul.f32 %v1904, 1.442695
        %v2218 = vpow.pop %v2217
        %v2219 = vmul.f32 %v1905, 1.442695
        %v2220 = vpow.pop %v2219
        %v2221 = vmul.f32 %v1906, 1.442695
        %v2222 = vpow.pop %v2221
        %v2223 = vmul.f32 %v1907, 1.442695
        %v2224 = vpow.pop %v2223
        %v2225 = vmul.f32 %v1908, 1.442695
        %v2226 = vpow.pop %v2225
        %v2227 = vmul.f32 %v1909, 1.442695
        %v2228 = vpow.pop %v2227
        %v2229 = vmul.f32 %v1910, 1.442695
        %v2230 = vpow.pop %v2229
        %v2231 = vmul.f32 %v1911, 1.442695
        %v2232 = vpow.pop %v2231
        %v2233 = vmul.f32 %v1912, 1.442695
        %v2234 = vpow.pop %v2233
        %v2235 = vmul.f32 %v1913, 1.442695
        %v2236 = vpow.pop %v2235
        %v2237 = vmul.f32 %v1914, 1.442695
        %v2238 = vpow.pop %v2237
        %v2239 = vmul.f32 %v1915, 1.442695
        %v2240 = vpow.pop %v2239
        %v2241 = vmul.f32 %v1916, 1.442695
        %v2242 = vpow.pop %v2241
        %v2243 = vmul.f32 %v1917, 1.442695
        %v2244 = vpow.pop %v2243
        %v2245 = vmul.f32 %v1918, 1.442695
        %v2246 = vpow.pop %v2245
        %v2247 = vmul.f32 %v1919, 1.442695
        %v2248 = vpow.pop %v2247
        %v2249 = vmul.f32 %v1920, 1.442695
        %v2250 = vpow.pop %v2249
        %v2251 = vmul.f32 %v1921, 1.442695
        %v2252 = vpow.pop %v2251
        %v2253 = vmul.f32 %v1922, 1.442695
        %v2254 = vpow.pop %v2253
        %v2255 = vmul.f32 %v1923, 1.442695
        %v2256 = vpow.pop %v2255
        %v2257 = vmul.f32 %v1924, 1.442695
        %v2258 = vpow.pop %v2257
        %v2259 = vmul.f32 %v1925, 1.442695
        %v2260 = vpow.pop %v2259
        %v2261 = vmul.f32 %v1926, 1.442695
        %v2262 = vpow.pop %v2261
        %v2263 = vmul.f32 %v1927, 1.442695
        %v2264 = vpow.pop %v2263
        %v2265 = vmul.f32 %v1928, 1.442695
        %v2266 = vpow.pop %v2265
        %v2267 = vmul.f32 %v1929, 1.442695
        %v2268 = vpow.pop %v2267
        %v2269 = vmul.f32 %v1930, 1.442695
        %v2270 = vpow.pop %v2269
        %v2271 = vmul.f32 %v1931, 1.442695
        %v2272 = vpow.pop %v2271
        %v2273 = vmul.f32 %v1932, 1.442695
        %v2274 = vpow.pop %v2273
        %v2275 = vmul.f32 %v1933, 1.442695
        %v2276 = vpow.pop %v2275
        %v2277 = vmul.f32 %v1934, 1.442695
        %v2278 = vpow.pop %v2277
        %v2279 = vmul.f32 %v1935, 1.442695
        %v2280 = vpow.pop %v2279
        %v2281 = vmul.f32 %v1936, 1.442695
        %v2282 = vpow.pop %v2281
        %v2283 = vmul.f32 %v1937, 1.442695
        %v2284 = vpow.pop %v2283
        %v2285 = vmul.f32 %v1938, 1.442695
        %v2286 = vpow.pop %v2285
        %v2287 = vmul.f32 %v1939, 1.442695
        %v2288 = vpow.pop %v2287
        %v2289 = vmul.f32 %v1940, 1.442695
        %v2290 = vpow.pop %v2289
        %v2291 = vmul.f32 %v1941, 1.442695
        %v2292 = vpow.pop %v2291
        %v2293 = vmul.f32 %v1942, 1.442695
        %v2294 = vpow.pop %v2293
        %v2295 = vmul.f32 %v1943, 1.442695
        %v2296 = vpow.pop %v2295
        %v2297 = vmul.f32 %v1944, 1.442695
        %v2298 = vpow.pop %v2297
        %v2299 = vmul.f32 %v1945, 1.442695
        %v2300 = vpow.pop %v2299
        %v2301 = vmul.f32 %v1946, 1.442695
        %v2302 = vpow.pop %v2301
        %v2303 = vmul.f32 %v1947, 1.442695
        %v2304 = vpow.pop %v2303
        %v2305 = vmul.f32 %v1948, 1.442695
        %v2306 = vpow.pop %v2305
        %v2307 = vmul.f32 %v1949, 1.442695
        %v2308 = vpow.pop %v2307
        %v2309 = vmul.f32 %v1950, 1.442695
        %v2310 = vpow.pop %v2309
        %v2311 = vmul.f32 %v1951, 1.442695
        %v2312 = vpow.pop %v2311
        %v2313 = vmul.f32 %v1952, 1.442695
        %v2314 = vpow.pop %v2313
        %v2315 = vmul.f32 %v1953, 1.442695
        %v2316 = vpow.pop %v2315
        %v2317 = vmul.f32 %v1954, 1.442695
        %v2318 = vpow.pop %v2317
        %v2319 = vmul.f32 %v1955, 1.442695
        %v2320 = vpow.pop %v2319
        %v2321 = vmul.f32 %v1956, 1.442695
        %v2322 = vpow.pop %v2321
        %v2323 = vmul.f32 %v1957, 1.442695
        %v2324 = vpow.pop %v2323
        %v2325 = vmul.f32 %v1958, 1.442695
        %v2326 = vpow.pop %v2325
        %v2327 = vmul.f32 %v1959, 1.442695
        %v2328 = vpow.pop %v2327
        %v2329 = vmul.f32 %v1960, 1.442695
        %v2330 = vpow.pop %v2329
        %v2331 = vmul.f32 %v1961, 1.442695
        %v2332 = vpow.pop %v2331
        %v2333 = vmul.f32 %v1962, 1.442695
        %v2334 = vpow.pop %v2333
        %v2335 = vmul.f32 %v1963, 1.442695
        %v2336 = vpow.pop %v2335
        %v2337 = vmul.f32 %v1964, 1.442695
        %v2338 = vpow.pop %v2337
        %v2339 = vmul.f32 %v1965, 1.442695
        %v2340 = vpow.pop %v2339
        %v2341 = vmul.f32 %v1966, 1.442695
        %v2342 = vpow.pop %v2341
        %v2343 = vmul.f32 %v1967, 1.442695
        %v2344 = vpow.pop %v2343
        %v2345 = vmul.f32 %v1968, 1.442695
        %v2346 = vpow.pop %v2345
        %v2347 = vmul.f32 %v1969, 1.442695
        %v2348 = vpow.pop %v2347
        %v2349 = vmul.f32 %v1970, 1.442695
        %v2350 = vpow.pop %v2349
        %v2351 = vmul.f32 %v1971, 1.442695
        %v2352 = vpow.pop %v2351
        %v2353 = vmul.f32 %v1972, 1.442695
        %v2354 = vpow.pop %v2353
        %v2355 = vmul.f32 %v1973, 1.442695
        %v2356 = vpow.pop %v2355
        %v2357 = vmul.f32 %v1974, 1.442695
        %v2358 = vpow.pop %v2357
        %v2359 = vmul.f32 %v1975, 1.442695
        %v2360 = vpow.pop %v2359
        %v2361 = vmul.f32 %v1976, 1.442695
        %v2362 = vpow.pop %v2361
        %v2363 = vmul.f32 %v1977, 1.442695
        %v2364 = vpow.pop %v2363
        %v2365 = vmul.f32 %v1978, 1.442695
        %v2366 = vpow.pop %v2365
        %v2367 = vmul.f32 %v1979, 1.442695
        %v2368 = vpow.pop %v2367
        %v2369 = vmul.f32 %v1980, 1.442695
        %v2370 = vpow.pop %v2369
        %v2371 = vmul.f32 %v1981, 1.442695
        %v2372 = vpow.pop %v2371
        %v2373 = vmul.f32 %v1982, 1.442695
        %v2374 = vpow.pop %v2373
        %v2375 = vmul.f32 %v1983, 1.442695
        %v2376 = vpow.pop %v2375
        %v2377 = vmul.f32 %v1984, 1.442695
        %v2378 = vpow.pop %v2377
        %v2379 = vmul.f32 %v1985, 1.442695
        %v2380 = vpow.pop %v2379
        %v2381 = vmul.f32 %v1986, 1.442695
        %v2382 = vpow.pop %v2381
        %v2383 = vmul.f32 %v1987, 1.442695
        %v2384 = vpow.pop %v2383
        %v2385 = vmul.f32 %v1988, 1.442695
        %v2386 = vpow.pop %v2385
        %v2387 = vmul.f32 %v1989, 1.442695
        %v2388 = vpow.pop %v2387
        %v2389 = vmul.f32 %v1990, 1.442695
        %v2390 = vpow.pop %v2389
        %v2391 = vmul.f32 %v1991, 1.442695
        %v2392 = vpow.pop %v2391
        %v2393 = vmul.f32 %v1992, 1.442695
        %v2394 = vpow.pop %v2393
        %v2395 = vmul.f32 %v1993, 1.442695
        %v2396 = vpow.pop %v2395
        %v2397 = vmul.f32 %v1994, 1.442695
        %v2398 = vpow.pop %v2397
        %v2399 = vmul.f32 %v1995, 1.442695
        %v2400 = vpow.pop %v2399
        %v2401 = vmul.f32 %v1996, 1.442695
        %v2402 = vpow.pop %v2401
        %v2403 = vmul.f32 %v1997, 1.442695
        %v2404 = vpow.pop %v2403
        %v2405 = vmul.f32 %v1998, 1.442695
        %v2406 = vpow.pop %v2405
        %v2407 = vmul.f32 %v1999, 1.442695
        %v2408 = vpow.pop %v2407
        %v2409 = vmul.f32 %v2000, 1.442695
        %v2410 = vpow.pop %v2409
        %v2411 = vmul.f32 %v2001, 1.442695
        %v2412 = vpow.pop %v2411
        %v2413 = vmul.f32 %v2002, 1.442695
        %v2414 = vpow.pop %v2413
        %v2415 = vmul.f32 %v2003, 1.442695
        %v2416 = vpow.pop %v2415
        %v2417 = vmul.f32 %v2004, 1.442695
        %v2418 = vpow.pop %v2417
        %v2419 = vmul.f32 %v2005, 1.442695
        %v2420 = vpow.pop %v2419
        %v2421 = vmul.f32 %v2006, 1.442695
        %v2422 = vpow.pop %v2421
        %v2423 = vmul.f32 %v2007, 1.442695
        %v2424 = vpow.pop %v2423
        %v2425 = vmul.f32 %v2008, 1.442695
        %v2426 = vpow.pop %v2425
        %v2427 = vmul.f32 %v2009, 1.442695
        %v2428 = vpow.pop %v2427
        %v2429 = vmul.f32 %v2010, 1.442695
        %v2430 = vpow.pop %v2429
        %v2431 = vmul.f32 %v2011, 1.442695
        %v2432 = vpow.pop %v2431
        %v2433 = vmul.f32 %v2012, 1.442695
        %v2434 = vpow.pop %v2433
        %v2435 = vmul.f32 %v2013, 1.442695
        %v2436 = vpow.pop %v2435
        %v2437 = vmul.f32 %v2014, 1.442695
        %v2438 = vpow.pop %v2437
        %v2439 = vmul.f32 %v2015, 1.442695
        %v2440 = vpow.pop %v2439
        %v2441 = vmul.f32 %v2016, 1.442695
        %v2442 = vpow.pop %v2441
        %v2443 = vmul.f32 %v2017, 1.442695
        %v2444 = vpow.pop %v2443
        %v2445 = vmul.f32 %v2018, 1.442695
        %v2446 = vpow.pop %v2445
        %v2447 = vmul.f32 %v2019, 1.442695
        %v2448 = vpow.pop %v2447
        %v2449 = vmul.f32 %v2020, 1.442695
        %v2450 = vpow.pop %v2449
        %v2451 = vmul.f32 %v2021, 1.442695
        %v2452 = vpow.pop %v2451
        %v2453 = vmul.f32 %v2022, 1.442695
        %v2454 = vpow.pop %v2453
        %v2455 = vmul.f32 %v2023, 1.442695
        %v2456 = vpow.pop %v2455
        %v2457 = vmul.f32 %v2024, 1.442695
        %v2458 = vpow.pop %v2457
        %v2459 = vmul.f32 %v2025, 1.442695
        %v2460 = vpow.pop %v2459
        %v2461 = vmul.f32 %v2026, 1.442695
        %v2462 = vpow.pop %v2461
        %v2463 = vmul.f32 %v2027, 1.442695
        %v2464 = vpow.pop %v2463
        %v2465 = vmul.f32 %v2028, 1.442695
        %v2466 = vpow.pop %v2465
        %v2467 = vmul.f32 %v2029, 1.442695
        %v2468 = vpow.pop %v2467
        %v2469 = vmul.f32 %v2030, 1.442695
        %v2470 = vpow.pop %v2469
        %v2471 = vmul.f32 %v2031, 1.442695
        %v2472 = vpow.pop %v2471
        %v2473 = vmul.f32 %v2032, 1.442695
        %v2474 = vpow.pop %v2473
        %v2475 = vmul.f32 %v2033, 1.442695
        %v2476 = vpow.pop %v2475
        %v2477 = vmul.f32 %v2034, 1.442695
        %v2478 = vpow.pop %v2477
        %v2479 = vmul.f32 %v2035, 1.442695
        %v2480 = vpow.pop %v2479
        %v2481 = vmul.f32 %v2036, 1.442695
        %v2482 = vpow.pop %v2481
        %v2483 = vmul.f32 %v2037, 1.442695
        %v2484 = vpow.pop %v2483
        %v2485 = vmul.f32 %v2038, 1.442695
        %v2486 = vpow.pop %v2485
        %v2487 = vmul.f32 %v2039, 1.442695
        %v2488 = vpow.pop %v2487
        %v2489 = vmul.f32 %v2040, 1.442695
        %v2490 = vpow.pop %v2489
        %v2491 = vmul.f32 %v2041, 1.442695
        %v2492 = vpow.pop %v2491
        %v2493 = vmul.f32 %v2042, 1.442695
        %v2494 = vpow.pop %v2493
        %v2495 = vmul.f32 %v2043, 1.442695
        %v2496 = vpow.pop %v2495
        %v2497 = vmul.f32 %v2044, 1.442695
        %v2498 = vpow.pop %v2497
        %v2499 = vmul.f32 %v2045, 1.442695
        %v2500 = vpow.pop %v2499
        %v2501 = vmul.f32 %v2046, 1.442695
        %v2502 = vpow.pop %v2501
        %v2503 = vmul.f32 %v2047, 1.442695
        %v2504 = vpow.pop %v2503
        %v2505 = vmul.f32 %v2048, 1.442695
        %v2506 = vpow.pop %v2505
        %v2507 = vmul.f32 %v2049, 1.442695
        %v2508 = vpow.pop %v2507
        %v2509 = vmul.f32 %v2050, 1.442695
        %v2510 = vpow.pop %v2509
        %v2511 = vmul.f32 %v2051, 1.442695
        %v2512 = vpow.pop %v2511
        %v2513 = vmul.f32 %v2052, 1.442695
        %v2514 = vpow.pop %v2513
        %v2515 = vmul.f32 %v2053, 1.442695
        %v2516 = vpow.pop %v2515
        %v2517 = vmul.f32 %v2054, 1.442695
        %v2518 = vpow.pop %v2517
        %v2519 = vmul.f32 %v2055, 1.442695
        %v2520 = vpow.pop %v2519
        %v2521 = vmul.f32 %v2056, 1.442695
        %v2522 = vpow.pop %v2521
        %v2523 = vmul.f32 %v2057, 1.442695
        %v2524 = vpow.pop %v2523
        %v2525 = vmul.f32 %v2058, 1.442695
        %v2526 = vpow.pop %v2525
        %v2527 = vmul.f32 %v2059, 1.442695
        %v2528 = vpow.pop %v2527
        %v2529 = vmul.f32 %v2060, 1.442695
        %v2530 = vpow.pop %v2529
        %v2531 = vmul.f32 %v2061, 1.442695
        %v2532 = vpow.pop %v2531
        %v2533 = vmul.f32 %v2062, 1.442695
        %v2534 = vpow.pop %v2533
        %v2535 = vmul.f32 %v2063, 1.442695
        %v2536 = vpow.pop %v2535
        %v2537 = vmul.f32 %v2064, 1.442695
        %v2538 = vpow.pop %v2537
        %v2539 = vmul.f32 %v2065, 1.442695
        %v2540 = vpow.pop %v2539
        %v2541 = vmul.f32 %v2066, 1.442695
        %v2542 = vpow.pop %v2541
        %v2543 = vmul.f32 %v2067, 1.442695
        %v2544 = vpow.pop %v2543
        %v2545 = vmul.f32 %v2068, 1.442695
        %v2546 = vpow.pop %v2545
        %v2547 = vmul.f32 %v2069, 1.442695
        %v2548 = vpow.pop %v2547
        %v2549 = vmul.f32 %v2070, 1.442695
        %v2550 = vpow.pop %v2549
        %v2551 = vmul.f32 %v2071, 1.442695
        %v2552 = vpow.pop %v2551
        %v2553 = vmul.f32 %v2072, 1.442695
        %v2554 = vpow.pop %v2553
        %v2555 = vmul.f32 %v2073, 1.442695
        %v2556 = vpow.pop %v2555
        %v2557 = vmul.f32 %v2074, 1.442695
        %v2558 = vpow.pop %v2557
        %v2559 = vmul.f32 %v2075, 1.442695
        %v2560 = vpow.pop %v2559
        %v2561 = vmul.f32 %v2076, 1.442695
        %v2562 = vpow.pop %v2561
        %v2563 = vmul.f32 %v2077, 1.442695
        %v2564 = vpow.pop %v2563
        %v2565 = vmul.f32 %v2078, 1.442695
        %v2566 = vpow.pop %v2565
        %v2567 = vmul.f32 %v2079, 1.442695
        %v2568 = vpow.pop %v2567
        %v2569 = vmul.f32 %v2080, 1.442695
        %v2570 = vpow.pop %v2569
        %v2571 = vmul.f32 %v2081, 1.442695
        %v2572 = vpow.pop %v2571
        %v2573 = vmul.f32 %v2082, 1.442695
        %v2574 = vpow.pop %v2573
        %v2575 = vmul.f32 %v2083, 1.442695
        %v2576 = vpow.pop %v2575
        %v2577 = vmul.f32 %v2084, 1.442695
        %v2578 = vpow.pop %v2577
        %v2579 = vmul.f32 %v2085, 1.442695
        %v2580 = vpow.pop %v2579
        %v2581 = vmul.f32 %v2086, 1.442695
        %v2582 = vpow.pop %v2581
        %v2583 = vmul.f32 %v2087, 1.442695
        %v2584 = vpow.pop %v2583
        %v2585 = vmul.f32 %v2088, 1.442695
        %v2586 = vpow.pop %v2585
        %v2587 = vmul.f32 %v2089, 1.442695
        %v2588 = vpow.pop %v2587
        %v2589 = vmul.f32 %v2090, 1.442695
        %v2590 = vpow.pop %v2589
        %v2591 = vmul.f32 %v2091, 1.442695
        %v2592 = vpow.pop %v2591
        %v2593 = vmul.f32 %v2092, 1.442695
        %v2594 = vpow.pop %v2593
        %v2595 = vmul.f32 %v2093, 1.442695
        %v2596 = vpow.pop %v2595
        %v2597 = vmul.f32 %v2094, 1.442695
        %v2598 = vpow.pop %v2597
        %v2599 = vmul.f32 %v2095, 1.442695
        %v2600 = vpow.pop %v2599
        %v2601 = vmul.f32 %v2096, 1.442695
        %v2602 = vpow.pop %v2601
        %v2603 = vmul.f32 %v2097, 1.442695
        %v2604 = vpow.pop %v2603
        %v2605 = vmul.f32 %v2098, 1.442695
        %v2606 = vpow.pop %v2605
        %v2607 = vmul.f32 %v2099, 1.442695
        %v2608 = vpow.pop %v2607
        %v2609 = vmul.f32 %v2100, 1.442695
        %v2610 = vpow.pop %v2609
        %v2611 = vmul.f32 %v2101, 1.442695
        %v2612 = vpow.pop %v2611
        %v2613 = vmul.f32 %v2102, 1.442695
        %v2614 = vpow.pop %v2613
        %v2615 = vpack.c.bf16 %v2112, %v2104
        %v2616 = vpack.c.bf16 %v2114, %v2106
        %v2617 = vpack.c.bf16 %v2116, %v2108
        %v2618 = vpack.c.bf16 %v2118, %v2110
        %v2619 = vpack.c.bf16 %v2128, %v2120
        %v2620 = vpack.c.bf16 %v2130, %v2122
        %v2621 = vpack.c.bf16 %v2132, %v2124
        %v2622 = vpack.c.bf16 %v2134, %v2126
        %v2623 = vpack.c.bf16 %v2144, %v2136
        %v2624 = vpack.c.bf16 %v2146, %v2138
        %v2625 = vpack.c.bf16 %v2148, %v2140
        %v2626 = vpack.c.bf16 %v2150, %v2142
        %v2627 = vpack.c.bf16 %v2160, %v2152
        %v2628 = vpack.c.bf16 %v2162, %v2154
        %v2629 = vpack.c.bf16 %v2164, %v2156
        %v2630 = vpack.c.bf16 %v2166, %v2158
        %v2631 = vpack.c.bf16 %v2176, %v2168
        %v2632 = vpack.c.bf16 %v2178, %v2170
        %v2633 = vpack.c.bf16 %v2180, %v2172
        %v2634 = vpack.c.bf16 %v2182, %v2174
        %v2635 = vpack.c.bf16 %v2192, %v2184
        %v2636 = vpack.c.bf16 %v2194, %v2186
        %v2637 = vpack.c.bf16 %v2196, %v2188
        %v2638 = vpack.c.bf16 %v2198, %v2190
        %v2639 = vpack.c.bf16 %v2208, %v2200
        %v2640 = vpack.c.bf16 %v2210, %v2202
        %v2641 = vpack.c.bf16 %v2212, %v2204
        %v2642 = vpack.c.bf16 %v2214, %v2206
        %v2643 = vpack.c.bf16 %v2224, %v2216
        %v2644 = vpack.c.bf16 %v2226, %v2218
        %v2645 = vpack.c.bf16 %v2228, %v2220
        %v2646 = vpack.c.bf16 %v2230, %v2222
        %v2647 = vpack.c.bf16 %v2240, %v2232
        %v2648 = vpack.c.bf16 %v2242, %v2234
        %v2649 = vpack.c.bf16 %v2244, %v2236
        %v2650 = vpack.c.bf16 %v2246, %v2238
        %v2651 = vpack.c.bf16 %v2256, %v2248
        %v2652 = vpack.c.bf16 %v2258, %v2250
        %v2653 = vpack.c.bf16 %v2260, %v2252
        %v2654 = vpack.c.bf16 %v2262, %v2254
        %v2655 = vpack.c.bf16 %v2272, %v2264
        %v2656 = vpack.c.bf16 %v2274, %v2266
        %v2657 = vpack.c.bf16 %v2276, %v2268
        %v2658 = vpack.c.bf16 %v2278, %v2270
        %v2659 = vpack.c.bf16 %v2288, %v2280
        %v2660 = vpack.c.bf16 %v2290, %v2282
        %v2661 = vpack.c.bf16 %v2292, %v2284
        %v2662 = vpack.c.bf16 %v2294, %v2286
        %v2663 = vpack.c.bf16 %v2304, %v2296
        %v2664 = vpack.c.bf16 %v2306, %v2298
        %v2665 = vpack.c.bf16 %v2308, %v2300
        %v2666 = vpack.c.bf16 %v2310, %v2302
        %v2667 = vpack.c.bf16 %v2320, %v2312
        %v2668 = vpack.c.bf16 %v2322, %v2314
        %v2669 = vpack.c.bf16 %v2324, %v2316
        %v2670 = vpack.c.bf16 %v2326, %v2318
        %v2671 = vpack.c.bf16 %v2336, %v2328
        %v2672 = vpack.c.bf16 %v2338, %v2330
        %v2673 = vpack.c.bf16 %v2340, %v2332
        %v2674 = vpack.c.bf16 %v2342, %v2334
        %v2675 = vpack.c.bf16 %v2352, %v2344
        %v2676 = vpack.c.bf16 %v2354, %v2346
        %v2677 = vpack.c.bf16 %v2356, %v2348
        %v2678 = vpack.c.bf16 %v2358, %v2350
        %v2679 = vpack.c.bf16 %v2368, %v2360
        %v2680 = vpack.c.bf16 %v2370, %v2362
        %v2681 = vpack.c.bf16 %v2372, %v2364
        %v2682 = vpack.c.bf16 %v2374, %v2366
        %v2683 = vpack.c.bf16 %v2384, %v2376
        %v2684 = vpack.c.bf16 %v2386, %v2378
        %v2685 = vpack.c.bf16 %v2388, %v2380
        %v2686 = vpack.c.bf16 %v2390, %v2382
        %v2687 = vpack.c.bf16 %v2400, %v2392
        %v2688 = vpack.c.bf16 %v2402, %v2394
        %v2689 = vpack.c.bf16 %v2404, %v2396
        %v2690 = vpack.c.bf16 %v2406, %v2398
        %v2691 = vpack.c.bf16 %v2416, %v2408
        %v2692 = vpack.c.bf16 %v2418, %v2410
        %v2693 = vpack.c.bf16 %v2420, %v2412
        %v2694 = vpack.c.bf16 %v2422, %v2414
        %v2695 = vpack.c.bf16 %v2432, %v2424
        %v2696 = vpack.c.bf16 %v2434, %v2426
        %v2697 = vpack.c.bf16 %v2436, %v2428
        %v2698 = vpack.c.bf16 %v2438, %v2430
        %v2699 = vpack.c.bf16 %v2448, %v2440
        %v2700 = vpack.c.bf16 %v2450, %v2442
        %v2701 = vpack.c.bf16 %v2452, %v2444
        %v2702 = vpack.c.bf16 %v2454, %v2446
        %v2703 = vpack.c.bf16 %v2464, %v2456
        %v2704 = vpack.c.bf16 %v2466, %v2458
        %v2705 = vpack.c.bf16 %v2468, %v2460
        %v2706 = vpack.c.bf16 %v2470, %v2462
        %v2707 = vpack.c.bf16 %v2480, %v2472
        %v2708 = vpack.c.bf16 %v2482, %v2474
        %v2709 = vpack.c.bf16 %v2484, %v2476
        %v2710 = vpack.c.bf16 %v2486, %v2478
        %v2711 = vpack.c.bf16 %v2496, %v2488
        %v2712 = vpack.c.bf16 %v2498, %v2490
        %v2713 = vpack.c.bf16 %v2500, %v2492
        %v2714 = vpack.c.bf16 %v2502, %v2494
        %v2715 = vpack.c.bf16 %v2512, %v2504
        %v2716 = vpack.c.bf16 %v2514, %v2506
        %v2717 = vpack.c.bf16 %v2516, %v2508
        %v2718 = vpack.c.bf16 %v2518, %v2510
        %v2719 = vpack.c.bf16 %v2528, %v2520
        %v2720 = vpack.c.bf16 %v2530, %v2522
        %v2721 = vpack.c.bf16 %v2532, %v2524
        %v2722 = vpack.c.bf16 %v2534, %v2526
        %v2723 = vpack.c.bf16 %v2544, %v2536
        %v2724 = vpack.c.bf16 %v2546, %v2538
        %v2725 = vpack.c.bf16 %v2548, %v2540
        %v2726 = vpack.c.bf16 %v2550, %v2542
        %v2727 = vpack.c.bf16 %v2560, %v2552
        %v2728 = vpack.c.bf16 %v2562, %v2554
        %v2729 = vpack.c.bf16 %v2564, %v2556
        %v2730 = vpack.c.bf16 %v2566, %v2558
        %v2731 = vpack.c.bf16 %v2576, %v2568
        %v2732 = vpack.c.bf16 %v2578, %v2570
        %v2733 = vpack.c.bf16 %v2580, %v2572
        %v2734 = vpack.c.bf16 %v2582, %v2574
        %v2735 = vpack.c.bf16 %v2592, %v2584
        %v2736 = vpack.c.bf16 %v2594, %v2586
        %v2737 = vpack.c.bf16 %v2596, %v2588
        %v2738 = vpack.c.bf16 %v2598, %v2590
        %v2739 = vpack.c.bf16 %v2608, %v2600
        %v2740 = vpack.c.bf16 %v2610, %v2602
        %v2741 = vpack.c.bf16 %v2612, %v2604
        %v2742 = vpack.c.bf16 %v2614, %v2606
        %2743 = vmatpush.bf16.xpose.msra.mxu0 %v2643
        %2744 = vmatpush.bf16.xpose.msra.mxu0 %v2639
        %2745 = vmatpush.bf16.xpose.msra.mxu0 %v2635
        %2746 = vmatpush.bf16.xpose.msra.mxu0 %v2631
        %2747 = vmatpush.bf16.xpose.msra.mxu0 %v2627
        %2748 = vmatpush.bf16.xpose.msra.mxu0 %v2623
        %2749 = vmatpush.bf16.xpose.msra.mxu0 %v2619
        %2750 = vmatpush.bf16.xpose.msra.mxu0 %v2615
        %2751 = vmatmul.bf16.gmra.mxu0 %v673
        %v2752 = vpop.f32.mrf.mxu0
        %v2753 = vadd.f32 0.0, %v2752
        %v2754 = vpop.f32.mrf.mxu0
        %v2755 = vadd.f32 0.0, %v2754
        %2756 = vmatmul.bf16.gmra.mxu0 %v677
        %v2757 = vpop.f32.mrf.mxu0
        %v2758 = vadd.f32 0.0, %v2757
        %v2759 = vpop.f32.mrf.mxu0
        %v2760 = vadd.f32 0.0, %v2759
        %2761 = vmatmul.bf16.gmra.mxu0 %v681
        %v2762 = vpop.f32.mrf.mxu0
        %v2763 = vadd.f32 0.0, %v2762
        %v2764 = vpop.f32.mrf.mxu0
        %v2765 = vadd.f32 0.0, %v2764
        %2766 = vmatmul.bf16.gmra.mxu0 %v685
        %v2767 = vpop.f32.mrf.mxu0
        %v2768 = vadd.f32 0.0, %v2767
        %v2769 = vpop.f32.mrf.mxu0
        %v2770 = vadd.f32 0.0, %v2769
        %2771 = vmatmul.bf16.gmra.mxu0 %v689
        %v2772 = vpop.f32.mrf.mxu0
        %v2773 = vadd.f32 0.0, %v2772
        %v2774 = vpop.f32.mrf.mxu0
        %2775 = vdwg.mxu0
        %2776 = vmatpush.bf16.xpose.msra.mxu0 %v2644
        %2777 = vmatpush.bf16.xpose.msra.mxu0 %v2640
        %2778 = vmatpush.bf16.xpose.msra.mxu0 %v2636
        %2779 = vmatpush.bf16.xpose.msra.mxu0 %v2632
        %2780 = vmatpush.bf16.xpose.msra.mxu0 %v2628
        %2781 = vmatpush.bf16.xpose.msra.mxu0 %v2624
        %2782 = vmatpush.bf16.xpose.msra.mxu0 %v2620
        %2783 = vmatpush.bf16.xpose.msra.mxu0 %v2616
        %2784 = vmatmul.bf16.gmra.mxu0 %v674
        %v2785 = vpop.f32.mrf.mxu0
        %v2786 = vadd.f32 %v2753, %v2785
        %v2787 = vpop.f32.mrf.mxu0
        %v2788 = vadd.f32 %v2755, %v2787
        %2789 = vmatmul.bf16.gmra.mxu0 %v678
        %v2790 = vpop.f32.mrf.mxu0
        %v2791 = vadd.f32 %v2758, %v2790
        %v2792 = vpop.f32.mrf.mxu0
        %v2793 = vadd.f32 %v2760, %v2792
        %2794 = vmatmul.bf16.gmra.mxu0 %v682
        %v2795 = vpop.f32.mrf.mxu0
        %v2796 = vadd.f32 %v2763, %v2795
        %v2797 = vpop.f32.mrf.mxu0
        %v2798 = vadd.f32 %v2765, %v2797
        %2799 = vmatmul.bf16.gmra.mxu0 %v686
        %v2800 = vpop.f32.mrf.mxu0
        %v2801 = vadd.f32 %v2768, %v2800
        %v2802 = vpop.f32.mrf.mxu0
        %v2803 = vadd.f32 %v2770, %v2802
        %2804 = vmatmul.bf16.gmra.mxu0 %v690
        %v2805 = vpop.f32.mrf.mxu0
        %v2806 = vadd.f32 %v2773, %v2805
        %v2807 = vpop.f32.mrf.mxu0
        %2808 = vdwg.mxu0
        %2809 = vmatpush.bf16.xpose.msra.mxu0 %v2645
        %2810 = vmatpush.bf16.xpose.msra.mxu0 %v2641
        %2811 = vmatpush.bf16.xpose.msra.mxu0 %v2637
        %2812 = vmatpush.bf16.xpose.msra.mxu0 %v2633
        %2813 = vmatpush.bf16.xpose.msra.mxu0 %v2629
        %2814 = vmatpush.bf16.xpose.msra.mxu0 %v2625
        %2815 = vmatpush.bf16.xpose.msra.mxu0 %v2621
        %2816 = vmatpush.bf16.xpose.msra.mxu0 %v2617
        %2817 = vmatmul.bf16.gmra.mxu0 %v675
        %v2818 = vpop.f32.mrf.mxu0
        %v2819 = vadd.f32 %v2786, %v2818
        %v2820 = vpop.f32.mrf.mxu0
        %v2821 = vadd.f32 %v2788, %v2820
        %2822 = vmatmul.bf16.gmra.mxu0 %v679
        %v2823 = vpop.f32.mrf.mxu0
        %v2824 = vadd.f32 %v2791, %v2823
        %v2825 = vpop.f32.mrf.mxu0
        %v2826 = vadd.f32 %v2793, %v2825
        %2827 = vmatmul.bf16.gmra.mxu0 %v683
        %v2828 = vpop.f32.mrf.mxu0
        %v2829 = vadd.f32 %v2796, %v2828
        %v2830 = vpop.f32.mrf.mxu0
        %v2831 = vadd.f32 %v2798, %v2830
        %2832 = vmatmul.bf16.gmra.mxu0 %v687
        %v2833 = vpop.f32.mrf.mxu0
        %v2834 = vadd.f32 %v2801, %v2833
        %v2835 = vpop.f32.mrf.mxu0
        %v2836 = vadd.f32 %v2803, %v2835
        %2837 = vmatmul.bf16.gmra.mxu0 %v691
        %v2838 = vpop.f32.mrf.mxu0
        %v2839 = vadd.f32 %v2806, %v2838
        %v2840 = vpop.f32.mrf.mxu0
        %2841 = vdwg.mxu0
        %2842 = vmatpush.bf16.xpose.msra.mxu0 %v2646
        %2843 = vmatpush.bf16.xpose.msra.mxu0 %v2642
        %2844 = vmatpush.bf16.xpose.msra.mxu0 %v2638
        %2845 = vmatpush.bf16.xpose.msra.mxu0 %v2634
        %2846 = vmatpush.bf16.xpose.msra.mxu0 %v2630
        %2847 = vmatpush.bf16.xpose.msra.mxu0 %v2626
        %2848 = vmatpush.bf16.xpose.msra.mxu0 %v2622
        %2849 = vmatpush.bf16.xpose.msra.mxu0 %v2618
        %2850 = vmatmul.bf16.gmra.mxu0 %v676
        %v2851 = vpop.f32.mrf.mxu0
        %v2852 = vadd.f32 %v2819, %v2851
        %v2853 = vpop.f32.mrf.mxu0
        %v2854 = vadd.f32 %v2821, %v2853
        %2855 = vmatmul.bf16.gmra.mxu0 %v680
        %v2856 = vpop.f32.mrf.mxu0
        %v2857 = vadd.f32 %v2824, %v2856
        %v2858 = vpop.f32.mrf.mxu0
        %v2859 = vadd.f32 %v2826, %v2858
        %2860 = vmatmul.bf16.gmra.mxu0 %v684
        %v2861 = vpop.f32.mrf.mxu0
        %v2862 = vadd.f32 %v2829, %v2861
        %v2863 = vpop.f32.mrf.mxu0
        %v2864 = vadd.f32 %v2831, %v2863
        %2865 = vmatmul.bf16.gmra.mxu0 %v688
        %v2866 = vpop.f32.mrf.mxu0
        %v2867 = vadd.f32 %v2834, %v2866
        %v2868 = vpop.f32.mrf.mxu0
        %v2869 = vadd.f32 %v2836, %v2868
        %2870 = vmatmul.bf16.gmra.mxu0 %v692
        %v2871 = vpop.f32.mrf.mxu0
        %v2872 = vadd.f32 %v2839, %v2871
        %v2873 = vpop.f32.mrf.mxu0
        %2874 = vdwg.mxu0
        %2875 = vmatpush.bf16.xpose.msra.mxu0 %v2675
        %2876 = vmatpush.bf16.xpose.msra.mxu0 %v2671
        %2877 = vmatpush.bf16.xpose.msra.mxu0 %v2667
        %2878 = vmatpush.bf16.xpose.msra.mxu0 %v2663
        %2879 = vmatpush.bf16.xpose.msra.mxu0 %v2659
        %2880 = vmatpush.bf16.xpose.msra.mxu0 %v2655
        %2881 = vmatpush.bf16.xpose.msra.mxu0 %v2651
        %2882 = vmatpush.bf16.xpose.msra.mxu0 %v2647
        %2883 = vmatmul.bf16.gmra.mxu0 %v673
        %v2884 = vpop.f32.mrf.mxu0
        %v2885 = vadd.f32 0.0, %v2884
        %v2886 = vpop.f32.mrf.mxu0
        %v2887 = vadd.f32 0.0, %v2886
        %2888 = vmatmul.bf16.gmra.mxu0 %v677
        %v2889 = vpop.f32.mrf.mxu0
        %v2890 = vadd.f32 0.0, %v2889
        %v2891 = vpop.f32.mrf.mxu0
        %v2892 = vadd.f32 0.0, %v2891
        %2893 = vmatmul.bf16.gmra.mxu0 %v681
        %v2894 = vpop.f32.mrf.mxu0
        %v2895 = vadd.f32 0.0, %v2894
        %v2896 = vpop.f32.mrf.mxu0
        %v2897 = vadd.f32 0.0, %v2896
        %2898 = vmatmul.bf16.gmra.mxu0 %v685
        %v2899 = vpop.f32.mrf.mxu0
        %v2900 = vadd.f32 0.0, %v2899
        %v2901 = vpop.f32.mrf.mxu0
        %v2902 = vadd.f32 0.0, %v2901
        %2903 = vmatmul.bf16.gmra.mxu0 %v689
        %v2904 = vpop.f32.mrf.mxu0
        %v2905 = vadd.f32 0.0, %v2904
        %v2906 = vpop.f32.mrf.mxu0
        %2907 = vdwg.mxu0
        %2908 = vmatpush.bf16.xpose.msra.mxu0 %v2676
        %2909 = vmatpush.bf16.xpose.msra.mxu0 %v2672
        %2910 = vmatpush.bf16.xpose.msra.mxu0 %v2668
        %2911 = vmatpush.bf16.xpose.msra.mxu0 %v2664
        %2912 = vmatpush.bf16.xpose.msra.mxu0 %v2660
        %2913 = vmatpush.bf16.xpose.msra.mxu0 %v2656
        %2914 = vmatpush.bf16.xpose.msra.mxu0 %v2652
        %2915 = vmatpush.bf16.xpose.msra.mxu0 %v2648
        %2916 = vmatmul.bf16.gmra.mxu0 %v674
        %v2917 = vpop.f32.mrf.mxu0
        %v2918 = vadd.f32 %v2885, %v2917
        %v2919 = vpop.f32.mrf.mxu0
        %v2920 = vadd.f32 %v2887, %v2919
        %2921 = vmatmul.bf16.gmra.mxu0 %v678
        %v2922 = vpop.f32.mrf.mxu0
        %v2923 = vadd.f32 %v2890, %v2922
        %v2924 = vpop.f32.mrf.mxu0
        %v2925 = vadd.f32 %v2892, %v2924
        %2926 = vmatmul.bf16.gmra.mxu0 %v682
        %v2927 = vpop.f32.mrf.mxu0
        %v2928 = vadd.f32 %v2895, %v2927
        %v2929 = vpop.f32.mrf.mxu0
        %v2930 = vadd.f32 %v2897, %v2929
        %2931 = vmatmul.bf16.gmra.mxu0 %v686
        %v2932 = vpop.f32.mrf.mxu0
        %v2933 = vadd.f32 %v2900, %v2932
        %v2934 = vpop.f32.mrf.mxu0
        %v2935 = vadd.f32 %v2902, %v2934
        %2936 = vmatmul.bf16.gmra.mxu0 %v690
        %v2937 = vpop.f32.mrf.mxu0
        %v2938 = vadd.f32 %v2905, %v2937
        %v2939 = vpop.f32.mrf.mxu0
        %2940 = vdwg.mxu0
        %2941 = vmatpush.bf16.xpose.msra.mxu0 %v2677
        %2942 = vmatpush.bf16.xpose.msra.mxu0 %v2673
        %2943 = vmatpush.bf16.xpose.msra.mxu0 %v2669
        %2944 = vmatpush.bf16.xpose.msra.mxu0 %v2665
        %2945 = vmatpush.bf16.xpose.msra.mxu0 %v2661
        %2946 = vmatpush.bf16.xpose.msra.mxu0 %v2657
        %2947 = vmatpush.bf16.xpose.msra.mxu0 %v2653
        %2948 = vmatpush.bf16.xpose.msra.mxu0 %v2649
        %2949 = vmatmul.bf16.gmra.mxu0 %v675
        %v2950 = vpop.f32.mrf.mxu0
        %v2951 = vadd.f32 %v2918, %v2950
        %v2952 = vpop.f32.mrf.mxu0
        %v2953 = vadd.f32 %v2920, %v2952
        %2954 = vmatmul.bf16.gmra.mxu0 %v679
        %v2955 = vpop.f32.mrf.mxu0
        %v2956 = vadd.f32 %v2923, %v2955
        %v2957 = vpop.f32.mrf.mxu0
        %v2958 = vadd.f32 %v2925, %v2957
        %2959 = vmatmul.bf16.gmra.mxu0 %v683
        %v2960 = vpop.f32.mrf.mxu0
        %v2961 = vadd.f32 %v2928, %v2960
        %v2962 = vpop.f32.mrf.mxu0
        %v2963 = vadd.f32 %v2930, %v2962
        %2964 = vmatmul.bf16.gmra.mxu0 %v687
        %v2965 = vpop.f32.mrf.mxu0
        %v2966 = vadd.f32 %v2933, %v2965
        %v2967 = vpop.f32.mrf.mxu0
        %v2968 = vadd.f32 %v2935, %v2967
        %2969 = vmatmul.bf16.gmra.mxu0 %v691
        %v2970 = vpop.f32.mrf.mxu0
        %v2971 = vadd.f32 %v2938, %v2970
        %v2972 = vpop.f32.mrf.mxu0
        %2973 = vdwg.mxu0
        %2974 = vmatpush.bf16.xpose.msra.mxu0 %v2678
        %2975 = vmatpush.bf16.xpose.msra.mxu0 %v2674
        %2976 = vmatpush.bf16.xpose.msra.mxu0 %v2670
        %2977 = vmatpush.bf16.xpose.msra.mxu0 %v2666
        %2978 = vmatpush.bf16.xpose.msra.mxu0 %v2662
        %2979 = vmatpush.bf16.xpose.msra.mxu0 %v2658
        %2980 = vmatpush.bf16.xpose.msra.mxu0 %v2654
        %2981 = vmatpush.bf16.xpose.msra.mxu0 %v2650
        %2982 = vmatmul.bf16.gmra.mxu0 %v676
        %v2983 = vpop.f32.mrf.mxu0
        %v2984 = vadd.f32 %v2951, %v2983
        %v2985 = vpop.f32.mrf.mxu0
        %v2986 = vadd.f32 %v2953, %v2985
        %2987 = vmatmul.bf16.gmra.mxu0 %v680
        %v2988 = vpop.f32.mrf.mxu0
        %v2989 = vadd.f32 %v2956, %v2988
        %v2990 = vpop.f32.mrf.mxu0
        %v2991 = vadd.f32 %v2958, %v2990
        %2992 = vmatmul.bf16.gmra.mxu0 %v684
        %v2993 = vpop.f32.mrf.mxu0
        %v2994 = vadd.f32 %v2961, %v2993
        %v2995 = vpop.f32.mrf.mxu0
        %v2996 = vadd.f32 %v2963, %v2995
        %2997 = vmatmul.bf16.gmra.mxu0 %v688
        %v2998 = vpop.f32.mrf.mxu0
        %v2999 = vadd.f32 %v2966, %v2998
        %v3000 = vpop.f32.mrf.mxu0
        %v3001 = vadd.f32 %v2968, %v3000
        %3002 = vmatmul.bf16.gmra.mxu0 %v692
        %v3003 = vpop.f32.mrf.mxu0
        %v3004 = vadd.f32 %v2971, %v3003
        %v3005 = vpop.f32.mrf.mxu0
        %3006 = vdwg.mxu0
        %3007 = vmatpush.bf16.xpose.msra.mxu0 %v2707
        %3008 = vmatpush.bf16.xpose.msra.mxu0 %v2703
        %3009 = vmatpush.bf16.xpose.msra.mxu0 %v2699
        %3010 = vmatpush.bf16.xpose.msra.mxu0 %v2695
        %3011 = vmatpush.bf16.xpose.msra.mxu0 %v2691
        %3012 = vmatpush.bf16.xpose.msra.mxu0 %v2687
        %3013 = vmatpush.bf16.xpose.msra.mxu0 %v2683
        %3014 = vmatpush.bf16.xpose.msra.mxu0 %v2679
        %3015 = vmatmul.bf16.gmra.mxu0 %v673
        %v3016 = vpop.f32.mrf.mxu0
        %v3017 = vadd.f32 0.0, %v3016
        %v3018 = vpop.f32.mrf.mxu0
        %v3019 = vadd.f32 0.0, %v3018
        %3020 = vmatmul.bf16.gmra.mxu0 %v677
        %v3021 = vpop.f32.mrf.mxu0
        %v3022 = vadd.f32 0.0, %v3021
        %v3023 = vpop.f32.mrf.mxu0
        %v3024 = vadd.f32 0.0, %v3023
        %3025 = vmatmul.bf16.gmra.mxu0 %v681
        %v3026 = vpop.f32.mrf.mxu0
        %v3027 = vadd.f32 0.0, %v3026
        %v3028 = vpop.f32.mrf.mxu0
        %v3029 = vadd.f32 0.0, %v3028
        %3030 = vmatmul.bf16.gmra.mxu0 %v685
        %v3031 = vpop.f32.mrf.mxu0
        %v3032 = vadd.f32 0.0, %v3031
        %v3033 = vpop.f32.mrf.mxu0
        %v3034 = vadd.f32 0.0, %v3033
        %3035 = vmatmul.bf16.gmra.mxu0 %v689
        %v3036 = vpop.f32.mrf.mxu0
        %v3037 = vadd.f32 0.0, %v3036
        %v3038 = vpop.f32.mrf.mxu0
        %3039 = vdwg.mxu0
        %3040 = vmatpush.bf16.xpose.msra.mxu0 %v2708
        %3041 = vmatpush.bf16.xpose.msra.mxu0 %v2704
        %3042 = vmatpush.bf16.xpose.msra.mxu0 %v2700
        %3043 = vmatpush.bf16.xpose.msra.mxu0 %v2696
        %3044 = vmatpush.bf16.xpose.msra.mxu0 %v2692
        %3045 = vmatpush.bf16.xpose.msra.mxu0 %v2688
        %3046 = vmatpush.bf16.xpose.msra.mxu0 %v2684
        %3047 = vmatpush.bf16.xpose.msra.mxu0 %v2680
        %3048 = vmatmul.bf16.gmra.mxu0 %v674
        %v3049 = vpop.f32.mrf.mxu0
        %v3050 = vadd.f32 %v3017, %v3049
        %v3051 = vpop.f32.mrf.mxu0
        %v3052 = vadd.f32 %v3019, %v3051
        %3053 = vmatmul.bf16.gmra.mxu0 %v678
        %v3054 = vpop.f32.mrf.mxu0
        %v3055 = vadd.f32 %v3022, %v3054
        %v3056 = vpop.f32.mrf.mxu0
        %v3057 = vadd.f32 %v3024, %v3056
        %3058 = vmatmul.bf16.gmra.mxu0 %v682
        %v3059 = vpop.f32.mrf.mxu0
        %v3060 = vadd.f32 %v3027, %v3059
        %v3061 = vpop.f32.mrf.mxu0
        %v3062 = vadd.f32 %v3029, %v3061
        %3063 = vmatmul.bf16.gmra.mxu0 %v686
        %v3064 = vpop.f32.mrf.mxu0
        %v3065 = vadd.f32 %v3032, %v3064
        %v3066 = vpop.f32.mrf.mxu0
        %v3067 = vadd.f32 %v3034, %v3066
        %3068 = vmatmul.bf16.gmra.mxu0 %v690
        %v3069 = vpop.f32.mrf.mxu0
        %v3070 = vadd.f32 %v3037, %v3069
        %v3071 = vpop.f32.mrf.mxu0
        %3072 = vdwg.mxu0
        %3073 = vmatpush.bf16.xpose.msra.mxu0 %v2709
        %3074 = vmatpush.bf16.xpose.msra.mxu0 %v2705
        %3075 = vmatpush.bf16.xpose.msra.mxu0 %v2701
        %3076 = vmatpush.bf16.xpose.msra.mxu0 %v2697
        %3077 = vmatpush.bf16.xpose.msra.mxu0 %v2693
        %3078 = vmatpush.bf16.xpose.msra.mxu0 %v2689
        %3079 = vmatpush.bf16.xpose.msra.mxu0 %v2685
        %3080 = vmatpush.bf16.xpose.msra.mxu0 %v2681
        %3081 = vmatmul.bf16.gmra.mxu0 %v675
        %v3082 = vpop.f32.mrf.mxu0
        %v3083 = vadd.f32 %v3050, %v3082
        %v3084 = vpop.f32.mrf.mxu0
        %v3085 = vadd.f32 %v3052, %v3084
        %3086 = vmatmul.bf16.gmra.mxu0 %v679
        %v3087 = vpop.f32.mrf.mxu0
        %v3088 = vadd.f32 %v3055, %v3087
        %v3089 = vpop.f32.mrf.mxu0
        %v3090 = vadd.f32 %v3057, %v3089
        %3091 = vmatmul.bf16.gmra.mxu0 %v683
        %v3092 = vpop.f32.mrf.mxu0
        %v3093 = vadd.f32 %v3060, %v3092
        %v3094 = vpop.f32.mrf.mxu0
        %v3095 = vadd.f32 %v3062, %v3094
        %3096 = vmatmul.bf16.gmra.mxu0 %v687
        %v3097 = vpop.f32.mrf.mxu0
        %v3098 = vadd.f32 %v3065, %v3097
        %v3099 = vpop.f32.mrf.mxu0
        %v3100 = vadd.f32 %v3067, %v3099
        %3101 = vmatmul.bf16.gmra.mxu0 %v691
        %v3102 = vpop.f32.mrf.mxu0
        %v3103 = vadd.f32 %v3070, %v3102
        %v3104 = vpop.f32.mrf.mxu0
        %3105 = vdwg.mxu0
        %3106 = vmatpush.bf16.xpose.msra.mxu0 %v2710
        %3107 = vmatpush.bf16.xpose.msra.mxu0 %v2706
        %3108 = vmatpush.bf16.xpose.msra.mxu0 %v2702
        %3109 = vmatpush.bf16.xpose.msra.mxu0 %v2698
        %3110 = vmatpush.bf16.xpose.msra.mxu0 %v2694
        %3111 = vmatpush.bf16.xpose.msra.mxu0 %v2690
        %3112 = vmatpush.bf16.xpose.msra.mxu0 %v2686
        %3113 = vmatpush.bf16.xpose.msra.mxu0 %v2682
        %3114 = vmatmul.bf16.gmra.mxu0 %v676
        %v3115 = vpop.f32.mrf.mxu0
        %v3116 = vadd.f32 %v3083, %v3115
        %v3117 = vpop.f32.mrf.mxu0
        %v3118 = vadd.f32 %v3085, %v3117
        %3119 = vmatmul.bf16.gmra.mxu0 %v680
        %v3120 = vpop.f32.mrf.mxu0
        %v3121 = vadd.f32 %v3088, %v3120
        %v3122 = vpop.f32.mrf.mxu0
        %v3123 = vadd.f32 %v3090, %v3122
        %3124 = vmatmul.bf16.gmra.mxu0 %v684
        %v3125 = vpop.f32.mrf.mxu0
        %v3126 = vadd.f32 %v3093, %v3125
        %v3127 = vpop.f32.mrf.mxu0
        %v3128 = vadd.f32 %v3095, %v3127
        %3129 = vmatmul.bf16.gmra.mxu0 %v688
        %v3130 = vpop.f32.mrf.mxu0
        %v3131 = vadd.f32 %v3098, %v3130
        %v3132 = vpop.f32.mrf.mxu0
        %v3133 = vadd.f32 %v3100, %v3132
        %3134 = vmatmul.bf16.gmra.mxu0 %v692
        %v3135 = vpop.f32.mrf.mxu0
        %v3136 = vadd.f32 %v3103, %v3135
        %v3137 = vpop.f32.mrf.mxu0
        %3138 = vdwg.mxu0
        %3139 = vmatpush.bf16.xpose.msra.mxu0 %v2739
        %3140 = vmatpush.bf16.xpose.msra.mxu0 %v2735
        %3141 = vmatpush.bf16.xpose.msra.mxu0 %v2731
        %3142 = vmatpush.bf16.xpose.msra.mxu0 %v2727
        %3143 = vmatpush.bf16.xpose.msra.mxu0 %v2723
        %3144 = vmatpush.bf16.xpose.msra.mxu0 %v2719
        %3145 = vmatpush.bf16.xpose.msra.mxu0 %v2715
        %3146 = vmatpush.bf16.xpose.msra.mxu0 %v2711
        %3147 = vmatmul.bf16.gmra.mxu0 %v673
        %v3148 = vpop.f32.mrf.mxu0
        %v3149 = vadd.f32 0.0, %v3148
        %v3150 = vpop.f32.mrf.mxu0
        %v3151 = vadd.f32 0.0, %v3150
        %3152 = vmatmul.bf16.gmra.mxu0 %v677
        %v3153 = vpop.f32.mrf.mxu0
        %v3154 = vadd.f32 0.0, %v3153
        %v3155 = vpop.f32.mrf.mxu0
        %v3156 = vadd.f32 0.0, %v3155
        %3157 = vmatmul.bf16.gmra.mxu0 %v681
        %v3158 = vpop.f32.mrf.mxu0
        %v3159 = vadd.f32 0.0, %v3158
        %v3160 = vpop.f32.mrf.mxu0
        %v3161 = vadd.f32 0.0, %v3160
        %3162 = vmatmul.bf16.gmra.mxu0 %v685
        %v3163 = vpop.f32.mrf.mxu0
        %v3164 = vadd.f32 0.0, %v3163
        %v3165 = vpop.f32.mrf.mxu0
        %v3166 = vadd.f32 0.0, %v3165
        %3167 = vmatmul.bf16.gmra.mxu0 %v689
        %v3168 = vpop.f32.mrf.mxu0
        %v3169 = vadd.f32 0.0, %v3168
        %v3170 = vpop.f32.mrf.mxu0
        %3171 = vdwg.mxu0
        %3172 = vmatpush.bf16.xpose.msra.mxu0 %v2740
        %3173 = vmatpush.bf16.xpose.msra.mxu0 %v2736
        %3174 = vmatpush.bf16.xpose.msra.mxu0 %v2732
        %3175 = vmatpush.bf16.xpose.msra.mxu0 %v2728
        %3176 = vmatpush.bf16.xpose.msra.mxu0 %v2724
        %3177 = vmatpush.bf16.xpose.msra.mxu0 %v2720
        %3178 = vmatpush.bf16.xpose.msra.mxu0 %v2716
        %3179 = vmatpush.bf16.xpose.msra.mxu0 %v2712
        %3180 = vmatmul.bf16.gmra.mxu0 %v674
        %v3181 = vpop.f32.mrf.mxu0
        %v3182 = vadd.f32 %v3149, %v3181
        %v3183 = vpop.f32.mrf.mxu0
        %v3184 = vadd.f32 %v3151, %v3183
        %3185 = vmatmul.bf16.gmra.mxu0 %v678
        %v3186 = vpop.f32.mrf.mxu0
        %v3187 = vadd.f32 %v3154, %v3186
        %v3188 = vpop.f32.mrf.mxu0
        %v3189 = vadd.f32 %v3156, %v3188
        %3190 = vmatmul.bf16.gmra.mxu0 %v682
        %v3191 = vpop.f32.mrf.mxu0
        %v3192 = vadd.f32 %v3159, %v3191
        %v3193 = vpop.f32.mrf.mxu0
        %v3194 = vadd.f32 %v3161, %v3193
        %3195 = vmatmul.bf16.gmra.mxu0 %v686
        %v3196 = vpop.f32.mrf.mxu0
        %v3197 = vadd.f32 %v3164, %v3196
        %v3198 = vpop.f32.mrf.mxu0
        %v3199 = vadd.f32 %v3166, %v3198
        %3200 = vmatmul.bf16.gmra.mxu0 %v690
        %v3201 = vpop.f32.mrf.mxu0
        %v3202 = vadd.f32 %v3169, %v3201
        %v3203 = vpop.f32.mrf.mxu0
        %3204 = vdwg.mxu0
        %3205 = vmatpush.bf16.xpose.msra.mxu0 %v2741
        %3206 = vmatpush.bf16.xpose.msra.mxu0 %v2737
        %3207 = vmatpush.bf16.xpose.msra.mxu0 %v2733
        %3208 = vmatpush.bf16.xpose.msra.mxu0 %v2729
        %3209 = vmatpush.bf16.xpose.msra.mxu0 %v2725
        %3210 = vmatpush.bf16.xpose.msra.mxu0 %v2721
        %3211 = vmatpush.bf16.xpose.msra.mxu0 %v2717
        %3212 = vmatpush.bf16.xpose.msra.mxu0 %v2713
        %3213 = vmatmul.bf16.gmra.mxu0 %v675
        %v3214 = vpop.f32.mrf.mxu0
        %v3215 = vadd.f32 %v3182, %v3214
        %v3216 = vpop.f32.mrf.mxu0
        %v3217 = vadd.f32 %v3184, %v3216
        %3218 = vmatmul.bf16.gmra.mxu0 %v679
        %v3219 = vpop.f32.mrf.mxu0
        %v3220 = vadd.f32 %v3187, %v3219
        %v3221 = vpop.f32.mrf.mxu0
        %v3222 = vadd.f32 %v3189, %v3221
        %3223 = vmatmul.bf16.gmra.mxu0 %v683
        %v3224 = vpop.f32.mrf.mxu0
        %v3225 = vadd.f32 %v3192, %v3224
        %v3226 = vpop.f32.mrf.mxu0
        %v3227 = vadd.f32 %v3194, %v3226
        %3228 = vmatmul.bf16.gmra.mxu0 %v687
        %v3229 = vpop.f32.mrf.mxu0
        %v3230 = vadd.f32 %v3197, %v3229
        %v3231 = vpop.f32.mrf.mxu0
        %v3232 = vadd.f32 %v3199, %v3231
        %3233 = vmatmul.bf16.gmra.mxu0 %v691
        %v3234 = vpop.f32.mrf.mxu0
        %v3235 = vadd.f32 %v3202, %v3234
        %v3236 = vpop.f32.mrf.mxu0
        %3237 = vdwg.mxu0
        %3238 = vmatpush.bf16.xpose.msra.mxu0 %v2742
        %3239 = vmatpush.bf16.xpose.msra.mxu0 %v2738
        %3240 = vmatpush.bf16.xpose.msra.mxu0 %v2734
        %3241 = vmatpush.bf16.xpose.msra.mxu0 %v2730
        %3242 = vmatpush.bf16.xpose.msra.mxu0 %v2726
        %3243 = vmatpush.bf16.xpose.msra.mxu0 %v2722
        %3244 = vmatpush.bf16.xpose.msra.mxu0 %v2718
        %3245 = vmatpush.bf16.xpose.msra.mxu0 %v2714
        %3246 = vmatmul.bf16.gmra.mxu0 %v676
        %v3247 = vpop.f32.mrf.mxu0
        %v3248 = vadd.f32 %v3215, %v3247
        %v3249 = vpop.f32.mrf.mxu0
        %v3250 = vadd.f32 %v3217, %v3249
        %3251 = vmatmul.bf16.gmra.mxu0 %v680
        %v3252 = vpop.f32.mrf.mxu0
        %v3253 = vadd.f32 %v3220, %v3252
        %v3254 = vpop.f32.mrf.mxu0
        %v3255 = vadd.f32 %v3222, %v3254
        %3256 = vmatmul.bf16.gmra.mxu0 %v684
        %v3257 = vpop.f32.mrf.mxu0
        %v3258 = vadd.f32 %v3225, %v3257
        %v3259 = vpop.f32.mrf.mxu0
        %v3260 = vadd.f32 %v3227, %v3259
        %3261 = vmatmul.bf16.gmra.mxu0 %v688
        %v3262 = vpop.f32.mrf.mxu0
        %v3263 = vadd.f32 %v3230, %v3262
        %v3264 = vpop.f32.mrf.mxu0
        %v3265 = vadd.f32 %v3232, %v3264
        %3266 = vmatmul.bf16.gmra.mxu0 %v692
        %v3267 = vpop.f32.mrf.mxu0
        %v3268 = vadd.f32 %v3235, %v3267
        %v3269 = vpop.f32.mrf.mxu0
        %3270 = vdwg.mxu0
        %v3271 = vrcp.pop %v2872
        %v3272 = vrcp.pop %v3004
        %v3273 = vrcp.pop %v3136
        %v3274 = vrcp.pop %v3268
        %s3275 = sld [smem:[#allocation2]]
        %v3276 = vstv %s3275
        %v3277 = vmul.f32 %v3276, %v2852
        %v3278 = vmul.f32 %v3276, %v2984
        %v3279 = vmul.f32 %v3276, %v3116
        %v3280 = vmul.f32 %v3276, %v3248
        %v3281 = vmul.f32 %v3276, %v2854
        %v3282 = vmul.f32 %v3276, %v2986
        %v3283 = vmul.f32 %v3276, %v3118
        %v3284 = vmul.f32 %v3276, %v3250
        %v3285 = vmul.f32 %v3276, %v2857
        %v3286 = vmul.f32 %v3276, %v2989
        %v3287 = vmul.f32 %v3276, %v3121
        %v3288 = vmul.f32 %v3276, %v3253
        %v3289 = vmul.f32 %v3276, %v2859
        %v3290 = vmul.f32 %v3276, %v2991
        %v3291 = vmul.f32 %v3276, %v3123
        %v3292 = vmul.f32 %v3276, %v3255
        %v3293 = vmul.f32 %v3276, %v2862
        %v3294 = vmul.f32 %v3276, %v2994
        %v3295 = vmul.f32 %v3276, %v3126
        %v3296 = vmul.f32 %v3276, %v3258
        %v3297 = vmul.f32 %v3276, %v2864
        %v3298 = vmul.f32 %v3276, %v2996
        %v3299 = vmul.f32 %v3276, %v3128
        %v3300 = vmul.f32 %v3276, %v3260
        %v3301 = vmul.f32 %v3276, %v2867
        %v3302 = vmul.f32 %v3276, %v2999
        %v3303 = vmul.f32 %v3276, %v3131
        %v3304 = vmul.f32 %v3276, %v3263
        %v3305 = vmul.f32 %v3276, %v2869
        %v3306 = vmul.f32 %v3276, %v3001
        %v3307 = vmul.f32 %v3276, %v3133
        %v3308 = vmul.f32 %v3276, %v3265
        %v3309 = vperm.slane %v3271, 0
        %v3310 = vperm.slane %v3272, 0
        %v3311 = vperm.slane %v3273, 0
        %v3312 = vperm.slane %v3274, 0
        %v3313 = vmul.f32 %v3277, %v3309
        %v3314 = vmul.f32 %v3278, %v3310
        %v3315 = vmul.f32 %v3279, %v3311
        %v3316 = vmul.f32 %v3280, %v3312
        %v3317 = vmul.f32 %v3281, %v3309
        %v3318 = vmul.f32 %v3282, %v3310
        %v3319 = vmul.f32 %v3283, %v3311
        %v3320 = vmul.f32 %v3284, %v3312
        %v3321 = vmul.f32 %v3285, %v3309
        %v3322 = vmul.f32 %v3286, %v3310
        %v3323 = vmul.f32 %v3287, %v3311
        %v3324 = vmul.f32 %v3288, %v3312
        %v3325 = vmul.f32 %v3289, %v3309
        %v3326 = vmul.f32 %v3290, %v3310
        %v3327 = vmul.f32 %v3291, %v3311
        %v3328 = vmul.f32 %v3292, %v3312
        %v3329 = vmul.f32 %v3293, %v3309
        %v3330 = vmul.f32 %v3294, %v3310
        %v3331 = vmul.f32 %v3295, %v3311
        %v3332 = vmul.f32 %v3296, %v3312
        %v3333 = vmul.f32 %v3297, %v3309
        %v3334 = vmul.f32 %v3298, %v3310
        %v3335 = vmul.f32 %v3299, %v3311
        %v3336 = vmul.f32 %v3300, %v3312
        %v3337 = vmul.f32 %v3301, %v3309
        %v3338 = vmul.f32 %v3302, %v3310
        %v3339 = vmul.f32 %v3303, %v3311
        %v3340 = vmul.f32 %v3304, %v3312
        %v3341 = vmul.f32 %v3305, %v3309
        %v3342 = vmul.f32 %v3306, %v3310
        %v3343 = vmul.f32 %v3307, %v3311
        %v3344 = vmul.f32 %v3308, %v3312
        %v3345 = vadd.f32 %v3313, %v322
        %v3346 = vadd.f32 %v3314, %v323
        %v3347 = vadd.f32 %v3315, %v324
        %v3348 = vadd.f32 %v3316, %v325
        %v3349 = vadd.f32 %v3317, %v326
        %v3350 = vadd.f32 %v3318, %v327
        %v3351 = vadd.f32 %v3319, %v328
        %v3352 = vadd.f32 %v3320, %v329
        %v3353 = vadd.f32 %v3321, %v330
        %v3354 = vadd.f32 %v3322, %v331
        %v3355 = vadd.f32 %v3323, %v332
        %v3356 = vadd.f32 %v3324, %v333
        %v3357 = vadd.f32 %v3325, %v334
        %v3358 = vadd.f32 %v3326, %v335
        %v3359 = vadd.f32 %v3327, %v336
        %v3360 = vadd.f32 %v3328, %v337
        %v3361 = vadd.f32 %v3329, %v338
        %v3362 = vadd.f32 %v3330, %v339
        %v3363 = vadd.f32 %v3331, %v340
        %v3364 = vadd.f32 %v3332, %v341
        %v3365 = vadd.f32 %v3333, %v342
        %v3366 = vadd.f32 %v3334, %v343
        %v3367 = vadd.f32 %v3335, %v344
        %v3368 = vadd.f32 %v3336, %v345
        %v3369 = vadd.f32 %v3337, %v346
        %v3370 = vadd.f32 %v3338, %v347
        %v3371 = vadd.f32 %v3339, %v348
        %v3372 = vadd.f32 %v3340, %v349
        %v3373 = vadd.f32 %v3341, %v350
        %v3374 = vadd.f32 %v3342, %v351
        %v3375 = vadd.f32 %v3343, %v352
        %v3376 = vadd.f32 %v3344, %v353
        %v3377 = vld [vmem:[%s5] sm:$0xff]
        %v3378 = vld [vmem:[%s5 + $0x8] sm:$0xff]
        %v3379 = vld [vmem:[%s5 + $0x10] sm:$0xff]
        %v3380 = vld [vmem:[%s5 + $0x18] sm:$0xff]
        %3381 = vmatpush.xpose.msra.mxu0 0.0
        %3382 = vmatpush.xpose.msra.mxu0 0.0
        %3383 = vmatpush.xpose.msra.mxu0 0.0
        %3384 = vmatpush.xpose.msra.mxu0 0.0
        %3385 = vmatpush.xpose.msra.mxu0 0.0
        %3386 = vmatpush.xpose.msra.mxu0 0.0
        %3387 = vmatpush.xpose.msra.mxu0 0.0
        %3388 = vmatpush.xpose.msra.mxu0 0.0
        %3389 = vmatpush.xpose.msra.mxu0 %v3373
        %3390 = vmatpush.xpose.msra.mxu0 %v3369
        %3391 = vmatpush.xpose.msra.mxu0 %v3365
        %3392 = vmatpush.xpose.msra.mxu0 %v3361
        %3393 = vmatpush.xpose.msra.mxu0 %v3357
        %3394 = vmatpush.xpose.msra.mxu0 %v3353
        %3395 = vmatpush.xpose.msra.mxu0 %v3349
        %3396 = vmatpush.xpose.msra.mxu0 %v3345
        %3397 = vmatmul.f32.gmra.mxu0 %v3377
        %v3398 = vpop.f32.mrf.mxu0
        %v3399 = vadd.f32 0.0, %v3398
        %3400 = vdwg.mxu0
        %3401 = vmatpush.xpose.msra.mxu0 0.0
        %3402 = vmatpush.xpose.msra.mxu0 0.0
        %3403 = vmatpush.xpose.msra.mxu0 0.0
        %3404 = vmatpush.xpose.msra.mxu0 0.0
        %3405 = vmatpush.xpose.msra.mxu0 0.0
        %3406 = vmatpush.xpose.msra.mxu0 0.0
        %3407 = vmatpush.xpose.msra.mxu0 0.0
        %3408 = vmatpush.xpose.msra.mxu0 0.0
        %3409 = vmatpush.xpose.msra.mxu0 %v3374
        %3410 = vmatpush.xpose.msra.mxu0 %v3370
        %3411 = vmatpush.xpose.msra.mxu0 %v3366
        %3412 = vmatpush.xpose.msra.mxu0 %v3362
        %3413 = vmatpush.xpose.msra.mxu0 %v3358
        %3414 = vmatpush.xpose.msra.mxu0 %v3354
        %3415 = vmatpush.xpose.msra.mxu0 %v3350
        %3416 = vmatpush.xpose.msra.mxu0 %v3346
        %3417 = vmatmul.f32.gmra.mxu0 %v3378
        %v3418 = vpop.f32.mrf.mxu0
        %v3419 = vadd.f32 %v3399, %v3418
        %3420 = vdwg.mxu0
        %3421 = vmatpush.xpose.msra.mxu0 0.0
        %3422 = vmatpush.xpose.msra.mxu0 0.0
        %3423 = vmatpush.xpose.msra.mxu0 0.0
        %3424 = vmatpush.xpose.msra.mxu0 0.0
        %3425 = vmatpush.xpose.msra.mxu0 0.0
        %3426 = vmatpush.xpose.msra.mxu0 0.0
        %3427 = vmatpush.xpose.msra.mxu0 0.0
        %3428 = vmatpush.xpose.msra.mxu0 0.0
        %3429 = vmatpush.xpose.msra.mxu0 %v3375
        %3430 = vmatpush.xpose.msra.mxu0 %v3371
        %3431 = vmatpush.xpose.msra.mxu0 %v3367
        %3432 = vmatpush.xpose.msra.mxu0 %v3363
        %3433 = vmatpush.xpose.msra.mxu0 %v3359
        %3434 = vmatpush.xpose.msra.mxu0 %v3355
        %3435 = vmatpush.xpose.msra.mxu0 %v3351
        %3436 = vmatpush.xpose.msra.mxu0 %v3347
        %3437 = vmatmul.f32.gmra.mxu0 %v3379
        %v3438 = vpop.f32.mrf.mxu0
        %v3439 = vadd.f32 %v3419, %v3438
        %3440 = vdwg.mxu0
        %3441 = vmatpush.xpose.msra.mxu0 0.0
        %3442 = vmatpush.xpose.msra.mxu0 0.0
        %3443 = vmatpush.xpose.msra.mxu0 0.0
        %3444 = vmatpush.xpose.msra.mxu0 0.0
        %3445 = vmatpush.xpose.msra.mxu0 0.0
        %3446 = vmatpush.xpose.msra.mxu0 0.0
        %3447 = vmatpush.xpose.msra.mxu0 0.0
        %3448 = vmatpush.xpose.msra.mxu0 0.0
        %3449 = vmatpush.xpose.msra.mxu0 %v3376
        %3450 = vmatpush.xpose.msra.mxu0 %v3372
        %3451 = vmatpush.xpose.msra.mxu0 %v3368
        %3452 = vmatpush.xpose.msra.mxu0 %v3364
        %3453 = vmatpush.xpose.msra.mxu0 %v3360
        %3454 = vmatpush.xpose.msra.mxu0 %v3356
        %3455 = vmatpush.xpose.msra.mxu0 %v3352
        %3456 = vmatpush.xpose.msra.mxu0 %v3348
        %3457 = vmatmul.f32.gmra.mxu0 %v3380
        %v3458 = vpop.f32.mrf.mxu0
        %v3459 = vadd.f32 %v3439, %v3458
        %3460 = vdwg.mxu0
        %v3461 = vld [vmem:[%s6] sm:$0xff]
        %v3462 = vld [vmem:[%s6 + $0x8] sm:$0xff]
        %v3463 = vld [vmem:[%s6 + $0x10] sm:$0xff]
        %v3464 = vld [vmem:[%s6 + $0x18] sm:$0xff]
        %v3465 = vld [vmem:[%s6 + $0x20] sm:$0xff]
        %v3466 = vld [vmem:[%s6 + $0x28] sm:$0xff]
        %v3467 = vld [vmem:[%s6 + $0x30] sm:$0xff]
        %v3468 = vld [vmem:[%s6 + $0x38] sm:$0xff]
        %v3469 = vld [vmem:[%s7] sm:$0x1]
        %v3471 = vperm.slane %v3469, 0
        %v3474 = vsel %vm431, %v3459, 0
        %3476 = vmatpush.msra.mxu0 0.0
        %3477 = vmatpush.msra.mxu0 0.0
        %3478 = vmatpush.msra.mxu0 0.0
        %3479 = vmatpush.msra.mxu0 0.0
        %3480 = vmatpush.msra.mxu0 0.0
        %3481 = vmatpush.msra.mxu0 0.0
        %3482 = vmatpush.msra.mxu0 0.0
        %3483 = vmatpush.msra.mxu0 0.0
        %3484 = vmatpush.msra.mxu0 %v3468
        %3485 = vmatpush.msra.mxu0 %v3467
        %3486 = vmatpush.msra.mxu0 %v3466
        %3487 = vmatpush.msra.mxu0 %v3465
        %3488 = vmatpush.msra.mxu0 %v3464
        %3489 = vmatpush.msra.mxu0 %v3463
        %3490 = vmatpush.msra.mxu0 %v3462
        %3491 = vmatpush.msra.mxu0 %v3461
        %3492 = vmatmul.f32.gmra.mxu0 %v3474
        %v3493 = vpop.f32.mrf.mxu0
        %v3494 = vadd.f32 %v3471, %v3493
        %3495 = vdwg.mxu0
        %v3496 = vmax.f32 %v3494, 0.0
        %v3497 = vld [vmem:[%s320] sm:$0xff]
        %v3498 = vadd.f32 %v3497, %v3496
        %vm3499 = vcmask 261120
        %v3500 = vsel %vm3499, %v3498, 0.0
        %v3501 = vrot.slane %v3500, 4
        %v3502 = vadd.f32 %v3500, %v3501
        %v3503 = vrot.slane %v3502, 2
        %v3504 = vadd.f32 %v3502, %v3503
        %v3505 = vrot.slane %v3504, 1
        %v3506 = vadd.f32 %v3504, %v3505
        %vm3507 = vcmask 253952
        %3508 = vst.msk [vmem:[%s311] sm:$0x1] %vm3507, %v3506
        %s3509 = sand.u32 %s209, 1
        %s3510 = scalar_lea.sflag [#allocation4], %s3509
        %s3511 = sand.u32 %s209, 1
        %s3512 = scalar_lea.vmem [#allocation3], %s3511
        // Predicated region
        $region53: #{cmsa_model_forward.1} parent=51 // pred_check
          %p3513 = pneg %p219
        $region54: #{cmsa_model_forward.1} parent=51 // pred_check_branch
          %3515 = sbr.rel (%p3513) target = $region56
        $region55: #{cmsa_model_forward.1} parent=51 // pred_region
          %3517 = vsyncadd %s3510, 0
          %s3518 = scalar_lea.hbm %s8, %s23
          %s3520 = sshll.u32 %s3512, 4
          %s3521 = int_to_ptr.vmem [resolvable:$true] %s3520
          %s3522 = sshll.u32 %s3518, 4
          %s3523 = int_to_ptr.hbm [resolvable:$true] %s3522
          %3525 = dma.vmem_to_hbm [thread:$0]  %s3521, 16, %s3523, %s3510
        $region56: #{cmsa_model_forward.1} parent=51 // pred_fallthru
          _
      $region52: #{cmsa_model_forward.1} parent=5 // pred_fallthru
        _
      %p3526 = scmp.le.s32.totalorder 2, %s18
      // Predicated region
      $region57: #{cmsa_model_forward.1} parent=5 // pred_check
        %p3527 = pneg %p3526
      $region58: #{cmsa_model_forward.1} parent=5 // pred_check_branch
        %3529 = sbr.rel (%p3527) target = $region60
      $region59: #{cmsa_model_forward.1} parent=5 // pred_region
        %s3530 = ssub.s32 %s18, 2
        // Predicated region
        $region61: #{cmsa_model_forward.1} parent=59 // pred_check
          %p3531 = pneg %p225
        $region62: #{cmsa_model_forward.1} parent=59 // pred_check_branch
          %3533 = sbr.rel (%p3531) target = $region64
        $region63: #{cmsa_model_forward.1} parent=59 // pred_region
          %s3534 = sand.u32 %s210, 1
          %s3535 = scalar_lea.sflag [#allocation4], %s3534
          %s3536 = sand.u32 %s210, 1
          %s3537 = scalar_lea.vmem [#allocation3], %s3536
          %3539 = dma.done %s3535, 16
        $region64: #{cmsa_model_forward.1} parent=59 // pred_fallthru
          _
      $region60: #{cmsa_model_forward.1} parent=5 // pred_fallthru
        _
    $region6: #{cmsa_model_forward.1} parent=1 // loop_footer
      %s22 = sadd.s32 1, %s18
    $region7: #{cmsa_model_forward.1} parent=1 // loop_footer_branch
      %17 = sbr.rel target = $region3
    $region8: #{cmsa_model_forward.1} parent=1 // loop_exit
      _
    %3540 = vsyncpa [#allocation4], 1
    %s3541 = scalar_lea.sflag [#allocation4], 1
    %3542 = vsyncpa %s3541, 1

</llo_original>
